<compile_context>
chip_gen: v7x
topology: tpu7x:2x2x1
jax: 0.10.0
libtpu: 0.0.40
codegen_flags: <defaults>
</compile_context>

<pallas_src>
import functools

import jax
import jax.numpy as jnp
from jax.experimental import pallas as pl
from jax.experimental.pallas import tpu as pltpu

EPS = 1e-5
LANE = 128
LEFT_GUARD = 8  # left spatial guard width; 8 keeps the interior store sublane-aligned


def _round_up(x, m):
    return ((x + m - 1) // m) * m


def _silu(x):
    return x * jax.nn.sigmoid(x)


def _pick_row_tile(p, target=512):
    """Largest multiple-of-8 row tile <= target dividing P, preferring >= 2 tiles."""
    divisors = [t for t in range(8, min(p, target) + 1, 8) if p % t == 0]
    if not divisors:
        return p
    multi = [t for t in divisors if p // t >= 2]
    return max(multi) if multi else max(divisors)


# --------------------------- Kernel A: BN1 + SiLU + 1x1 conv ----------------

def _bn_silu_conv1x1_kernel(x_ref, scale_ref, shift_ref, w_ref, h_ref):
    # BN applied as a precomputed fused scale/shift (2 VPU ops/elem), SiLU in
    # f32, then bf16 MXU matmul with f32 accumulation.
    a = _silu(x_ref[...] * scale_ref[...] + shift_ref[...])
    h_ref[...] = jnp.dot(a.astype(jnp.bfloat16), w_ref[...],
                         preferred_element_type=jnp.float32)


def _bn_silu_conv1x1(x_flat, scale, shift, w_bf16):
    p, cin = x_flat.shape
    c4p = w_bf16.shape[-1]
    tp = _pick_row_tile(p)
    return pl.pallas_call(
        _bn_silu_conv1x1_kernel,
        out_shape=jax.ShapeDtypeStruct((p, c4p), jnp.float32),
        grid_spec=pltpu.PrefetchScalarGridSpec(
            num_scalar_prefetch=0,
            grid=(p // tp,),
            in_specs=[
                pl.BlockSpec((tp, cin), lambda i: (i, 0)),
                pl.BlockSpec((1, cin), lambda i: (0, 0)),
                pl.BlockSpec((1, cin), lambda i: (0, 0)),
                pl.BlockSpec((cin, c4p), lambda i: (0, 0)),
            ],
            out_specs=pl.BlockSpec((tp, c4p), lambda i: (i, 0)),
        ),
        compiler_params=pltpu.CompilerParams(
            dimension_semantics=("parallel",),
            vmem_limit_bytes=32 * 1024 * 1024,
        ),
    )(x_flat, scale, shift, w_bf16)


# --------------------------- Kernel B: BN2 + SiLU + 3x3 conv ----------------

def _bn_silu_conv3x3_kernel(h_ref, scale_ref, shift_ref, w_ref, bias_ref,
                            z_ref, ap_ref, *, H, W):
    c4p = h_ref.shape[-1]
    hw = H * W
    # BN2 (precomputed scale/shift) -> SiLU, f32.
    a = _silu(h_ref[...] * scale_ref[...] + shift_ref[...])
    # Stage into a spatially zero-padded VMEM image so the 9 taps need no
    # boundary masks.  Only the 1-wide guard ring strictly needs zeroing; the
    # full memset is kept because it lowers trivially and is tiny next to the
    # 9 matmuls.  LEFT_GUARD=8 keeps the interior store sublane-aligned.
    ap_ref[...] = jnp.zeros(ap_ref.shape, ap_ref.dtype)
    ap_ref[pl.ds(1, H), pl.ds(LEFT_GUARD, W), :] = a.reshape(H, W, c4p)
    # 3x3 conv = 9 shifted slices, each a bf16 matmul (f32 acc) accumulated
    # directly into the lane-dense output block (avoids a long-lived vreg acc).
    for k in range(9):
        ky, kx = k // 3, k % 3
        tap = ap_ref[pl.ds(ky, H), pl.ds(LEFT_GUARD - 1 + kx, W), :]
        tap = tap.reshape(hw, c4p).astype(jnp.bfloat16)
        part = jnp.dot(tap, w_ref[k], preferred_element_type=jnp.float32)
        if k == 0:
            z_ref[...] = part + bias_ref[...]
        else:
            z_ref[...] += part


def _bn_silu_conv3x3(h, scale, shift, w_bf16, bias, n, height, width):
    p, c4p = h.shape
    gp = w_bf16.shape[-1]
    hw = height * width
    kern = functools.partial(_bn_silu_conv3x3_kernel, H=height, W=width)
    # TODO(synk): for large H*W, add a second grid dim over image row-blocks
    # with a halo DMA instead of one whole image per grid step.
    return pl.pallas_call(
        kern,
        out_shape=jax.ShapeDtypeStruct((p, gp), jnp.float32),
        grid_spec=pltpu.PrefetchScalarGridSpec(
            num_scalar_prefetch=0,
            grid=(n,),
            in_specs=[
                pl.BlockSpec((hw, c4p), lambda i: (i, 0)),
                pl.BlockSpec((1, c4p), lambda i: (0, 0)),
                pl.BlockSpec((1, c4p), lambda i: (0, 0)),
                pl.BlockSpec((9, c4p, gp), lambda i: (0, 0, 0)),
                pl.BlockSpec((1, gp), lambda i: (0, 0)),
            ],
            out_specs=pl.BlockSpec((hw, gp), lambda i: (i, 0)),
            scratch_shapes=[
                pltpu.VMEM((height + 2, width + LEFT_GUARD + 1, c4p),
                           jnp.float32),
            ],
        ),
        compiler_params=pltpu.CompilerParams(
            dimension_semantics=("parallel",),
            vmem_limit_bytes=32 * 1024 * 1024,
        ),
    )(h, scale, shift, w_bf16, bias)


# --------------------------- layer / block wrappers --------------------------

def _bn_scale_shift(x, gamma, beta):
    # Train-mode BatchNorm: per-channel batch mean / biased variance over all
    # N*H*W positions (global over P -- must NOT be computed per tile), folded
    # into a single fused multiply-add.  Cheap plain-JAX pre-pass in f32.
    mu = jnp.mean(x, axis=0, keepdims=True)
    var = jnp.mean(jnp.square(x - mu), axis=0, keepdims=True)
    scale = gamma * jax.lax.rsqrt(var + EPS)
    shift = beta - mu * scale
    return scale, shift


def _dense_layer_forward(x_flat, lp, n, height, width, growth_rate):
    scale1, shift1 = _bn_scale_shift(x_flat, lp["g1"], lp["b1"])
    # NOTE: the 1x1 conv bias is dropped: a per-channel constant added right
    # before train-mode BN2 is cancelled exactly by the mean subtraction.
    h = _bn_silu_conv1x1(x_flat, scale1, shift1, lp["w1"])
    scale2, shift2 = _bn_scale_shift(h, lp["g2"], lp["b2"])
    z = _bn_silu_conv3x3(h, scale2, shift2, lp["w2"], lp["bias2"],
                         n, height, width)
    return z[:, :growth_rate]


def dense_block_forward(x_nchw, params_list, growth_rate):
    n, c, height, width = x_nchw.shape
    p = n * height * width
    assert p % 8 == 0 and (height * width) % 8 == 0
    x = jnp.transpose(x_nchw, (0, 2, 3, 1)).reshape(p, c)
    for lp in params_list:
        z = _dense_layer_forward(x, lp, n, height, width, growth_rate)
        # TODO(synk): replace the growing concat with a preallocated (P, C_final)
        # buffer written in place by the kernels; per-layer channel offsets are
        # not 128-aligned, so plain concat is kept here.
        x = jnp.concatenate([x, z], axis=-1)
    c_out = x.shape[-1]
    return jnp.transpose(x.reshape(n, height, width, c_out), (0, 3, 1, 2))


# --------------------------- parameters --------------------------------------

def init_dense_block_params(key, input_dim, num_of_layers, growth_rate):
    """Random parameters mirroring the PyTorch module (f32, unpadded)."""
    params = []
    cin = input_dim
    c4 = 4 * growth_rate
    for _ in range(num_of_layers):
        key, *ks = jax.random.split(key, 10)
        params.append(dict(
            g1=1.0 + 0.1 * jax.random.normal(ks[0], (1, cin), jnp.float32),
            b1=0.1 * jax.random.normal(ks[1], (1, cin), jnp.float32),
            # w1[c_in, c_out] == torch conv1 weight[c_out, c_in, 0, 0]
            w1=jax.random.normal(ks[2], (cin, c4), jnp.float32) / jnp.sqrt(cin),
            # conv1 bias exists in the torch module but is cancelled by BN2's
            # mean subtraction in training mode -> not used by the kernels.
            bias1=0.1 * jax.random.normal(ks[3], (1, c4), jnp.float32),
            g2=1.0 + 0.1 * jax.random.normal(ks[4], (1, c4), jnp.float32),
            b2=0.1 * jax.random.normal(ks[5], (1, c4), jnp.float32),
            # w2[ky*3+kx, c_in, c_out] == torch conv2 weight[c_out, c_in, ky, kx]
            w2=jax.random.normal(ks[6], (9, c4, growth_rate), jnp.float32)
            / jnp.sqrt(9 * c4),
            bias2=0.1 * jax.random.normal(ks[7], (1, growth_rate), jnp.float32),
        ))
        cin += growth_rate
    return params


def prepare_params(raw_params, growth_rate):
    """Kernel-ready parameters: channel dims lane-padded to 128, weights bf16."""
    gp = _round_up(growth_rate, LANE)
    prepared = []
    for rp in raw_params:
        cin, c4 = rp["w1"].shape
        c4p = _round_up(c4, LANE)
        w1 = jnp.zeros((cin, c4p), jnp.float32).at[:, :c4].set(rp["w1"])
        w2 = (jnp.zeros((9, c4p, gp), jnp.float32)
              .at[:, :c4, :growth_rate].set(rp["w2"]))
        prepared.append(dict(
            g1=rp["g1"],
            b1=rp["b1"],
            w1=w1.astype(jnp.bfloat16),
            g2=jnp.zeros((1, c4p), jnp.float32).at[:, :c4].set(rp["g2"]),
            b2=jnp.zeros((1, c4p), jnp.float32).at[:, :c4].set(rp["b2"]),
            w2=w2.astype(jnp.bfloat16),
            bias2=(jnp.zeros((1, gp), jnp.float32)
                   .at[:, :growth_rate].set(rp["bias2"])),
        ))
    return prepared


if __name__ == "__main__":
    N, C, H, W = 2, 8, 16, 16
    num_of_layers, growth_rate = 2, 8

    key = jax.random.PRNGKey(0)
    kx, kp = jax.random.split(key)
    x = jax.random.normal(kx, (N, C, H, W), jnp.float32)
    raw = init_dense_block_params(kp, C, num_of_layers, growth_rate)
    params = prepare_params(raw, growth_rate)

    fwd = jax.jit(lambda a: dense_block_forward(a, params, growth_rate))
    out = jax.block_until_ready(fwd(x))

    expected_shape = (N, C + num_of_layers * growth_rate, H, W)
    assert out.shape == expected_shape, (out.shape, expected_shape)
    assert bool(jnp.all(jnp.isfinite(out)))
    print("KERNEL_OK")
</pallas_src>

<mosaic_0001>
module attributes {stable_mosaic.version = 11 : i64} {
  func.func @_bn_silu_conv1x1_kernel(%arg0: i32, %arg1: memref<256x8xf32, #tpu.memory_space<vmem>>, %arg2: memref<1x8xf32, #tpu.memory_space<vmem>>, %arg3: memref<1x8xf32, #tpu.memory_space<vmem>>, %arg4: memref<8x128xbf16, #tpu.memory_space<vmem>>, %arg5: memref<256x128xf32, #tpu.memory_space<vmem>>) attributes {dimension_semantics = [#tpu.dimension_semantics<parallel>], iteration_bounds = array<i64: 2>, scalar_prefetch = 0 : i64, scratch_operands = 0 : i64, tpu.core_type = #tpu.core_type<tc>, window_params = [{transform_indices = @transform_0, window_bounds = array<i64: 256, 8>}, {pipeline_mode = #tpu.pipeline_mode<synchronous>, transform_indices = @transform_1, window_bounds = array<i64: 1, 8>}, {pipeline_mode = #tpu.pipeline_mode<synchronous>, transform_indices = @transform_2, window_bounds = array<i64: 1, 8>}, {pipeline_mode = #tpu.pipeline_mode<synchronous>, transform_indices = @transform_3, window_bounds = array<i64: 8, 128>}, {transform_indices = @transform_4, window_bounds = array<i64: 256, 128>}]} {
    %c0 = arith.constant 0 : index
    %c0_0 = arith.constant 0 : index
    %0 = vector.load %arg1[%c0, %c0_0] : memref<256x8xf32, #tpu.memory_space<vmem>>, vector<256x8xf32>
    %c0_1 = arith.constant 0 : index
    %c0_2 = arith.constant 0 : index
    %1 = vector.load %arg2[%c0_1, %c0_2] : memref<1x8xf32, #tpu.memory_space<vmem>>, vector<1x8xf32>
    %2 = vector.broadcast %1 : vector<1x8xf32> to vector<256x8xf32>
    %3 = arith.mulf %0, %2 : vector<256x8xf32>
    %c0_3 = arith.constant 0 : index
    %c0_4 = arith.constant 0 : index
    %4 = vector.load %arg3[%c0_3, %c0_4] : memref<1x8xf32, #tpu.memory_space<vmem>>, vector<1x8xf32>
    %5 = vector.broadcast %4 : vector<1x8xf32> to vector<256x8xf32>
    %6 = arith.addf %3, %5 : vector<256x8xf32>
    %7 = arith.negf %6 : vector<256x8xf32>
    %8 = math.exp %7 : vector<256x8xf32>
    %cst = arith.constant 1.000000e+00 : f32
    %9 = vector.broadcast %cst : f32 to vector<256x8xf32>
    %10 = arith.addf %9, %8 : vector<256x8xf32>
    %11 = arith.divf %9, %10 : vector<256x8xf32>
    %12 = arith.mulf %6, %11 : vector<256x8xf32>
    %13 = arith.truncf %12 : vector<256x8xf32> to vector<256x8xbf16>
    %c0_5 = arith.constant 0 : index
    %c0_6 = arith.constant 0 : index
    %14 = vector.load %arg4[%c0_5, %c0_6] : memref<8x128xbf16, #tpu.memory_space<vmem>>, vector<8x128xbf16>
    %cst_7 = arith.constant dense<0.000000e+00> : vector<256x128xf32>
    %15 = tpu.matmul %13, %14, %cst_7 {dimension_numbers = #tpu.dot_dimension_numbers<[1], [0], [0], [1], [0, 0, 1, 1], [], []>} : vector<256x8xbf16>, vector<8x128xbf16>, vector<256x128xf32> -> vector<256x128xf32>
    %c0_8 = arith.constant 0 : index
    %c0_9 = arith.constant 0 : index
    %16 = vector.load %arg5[%c0_8, %c0_9] : memref<256x128xf32, #tpu.memory_space<vmem>>, vector<256x128xf32>
    tpu.vector_store %arg5[%c0_8, %c0_9], %15 {strides = array<i32>} : memref<256x128xf32, #tpu.memory_space<vmem>>, vector<256x128xf32>,
    return
  }
  func.func @transform_0(%arg0: i32) -> (i32, i32) {
    %c0_i32 = arith.constant 0 : i32
    %c0_i32_0 = arith.constant 0 : i32
    return %arg0, %c0_i32 : i32, i32
  }
  func.func @transform_1(%arg0: i32) -> (i32, i32) {
    %c0_i32 = arith.constant 0 : i32
    %c0_i32_0 = arith.constant 0 : i32
    %c0_i32_1 = arith.constant 0 : i32
    return %c0_i32, %c0_i32_0 : i32, i32
  }
  func.func @transform_2(%arg0: i32) -> (i32, i32) {
    %c0_i32 = arith.constant 0 : i32
    %c0_i32_0 = arith.constant 0 : i32
    %c0_i32_1 = arith.constant 0 : i32
    return %c0_i32, %c0_i32_0 : i32, i32
  }
  func.func @transform_3(%arg0: i32) -> (i32, i32) {
    %c0_i32 = arith.constant 0 : i32
    %c0_i32_0 = arith.constant 0 : i32
    %c0_i32_1 = arith.constant 0 : i32
    return %c0_i32, %c0_i32_0 : i32, i32
  }
  func.func @transform_4(%arg0: i32) -> (i32, i32) {
    %c0_i32 = arith.constant 0 : i32
    %c0_i32_0 = arith.constant 0 : i32
    return %arg0, %c0_i32 : i32, i32
  }
}

module attributes {stable_mosaic.version = 11 : i64} {
  func.func @_bn_silu_conv3x3_kernel(%arg0: i32, %arg1: memref<256x128xf32, #tpu.memory_space<vmem>>, %arg2: memref<1x128xf32, #tpu.memory_space<vmem>>, %arg3: memref<1x128xf32, #tpu.memory_space<vmem>>, %arg4: memref<9x128x128xbf16, #tpu.memory_space<vmem>>, %arg5: memref<1x128xf32, #tpu.memory_space<vmem>>, %arg6: memref<256x128xf32, #tpu.memory_space<vmem>>, %arg7: memref<18x25x128xf32, #tpu.memory_space<vmem>>) attributes {dimension_semantics = [#tpu.dimension_semantics<parallel>], iteration_bounds = array<i64: 2>, scalar_prefetch = 0 : i64, scratch_operands = 1 : i64, tpu.core_type = #tpu.core_type<tc>, window_params = [{transform_indices = @transform_0, window_bounds = array<i64: 256, 128>}, {pipeline_mode = #tpu.pipeline_mode<synchronous>, transform_indices = @transform_1, window_bounds = array<i64: 1, 128>}, {pipeline_mode = #tpu.pipeline_mode<synchronous>, transform_indices = @transform_2, window_bounds = array<i64: 1, 128>}, {pipeline_mode = #tpu.pipeline_mode<synchronous>, transform_indices = @transform_3, window_bounds = array<i64: 9, 128, 128>}, {pipeline_mode = #tpu.pipeline_mode<synchronous>, transform_indices = @transform_4, window_bounds = array<i64: 1, 128>}, {transform_indices = @transform_5, window_bounds = array<i64: 256, 128>}]} {
    %c0 = arith.constant 0 : index
    %c0_0 = arith.constant 0 : index
    %0 = vector.load %arg1[%c0, %c0_0] : memref<256x128xf32, #tpu.memory_space<vmem>>, vector<256x128xf32>
    %c0_1 = arith.constant 0 : index
    %c0_2 = arith.constant 0 : index
    %1 = vector.load %arg2[%c0_1, %c0_2] : memref<1x128xf32, #tpu.memory_space<vmem>>, vector<1x128xf32>
    %2 = vector.broadcast %1 : vector<1x128xf32> to vector<256x128xf32>
    %3 = arith.mulf %0, %2 : vector<256x128xf32>
    %c0_3 = arith.constant 0 : index
    %c0_4 = arith.constant 0 : index
    %4 = vector.load %arg3[%c0_3, %c0_4] : memref<1x128xf32, #tpu.memory_space<vmem>>, vector<1x128xf32>
    %5 = vector.broadcast %4 : vector<1x128xf32> to vector<256x128xf32>
    %6 = arith.addf %3, %5 : vector<256x128xf32>
    %7 = arith.negf %6 : vector<256x128xf32>
    %8 = math.exp %7 : vector<256x128xf32>
    %cst = arith.constant 1.000000e+00 : f32
    %9 = vector.broadcast %cst : f32 to vector<256x128xf32>
    %10 = arith.addf %9, %8 : vector<256x128xf32>
    %11 = arith.divf %9, %10 : vector<256x128xf32>
    %12 = arith.mulf %6, %11 : vector<256x128xf32>
    %cst_5 = arith.constant 0.000000e+00 : f32
    %13 = vector.broadcast %cst_5 : f32 to vector<18x25x128xf32>
    %c0_6 = arith.constant 0 : index
    %c0_7 = arith.constant 0 : index
    %c0_8 = arith.constant 0 : index
    %14 = vector.load %arg7[%c0_6, %c0_7, %c0_8] : memref<18x25x128xf32, #tpu.memory_space<vmem>>, vector<18x25x128xf32>
    tpu.vector_store %arg7[%c0_6, %c0_7, %c0_8], %13 {strides = array<i32>} : memref<18x25x128xf32, #tpu.memory_space<vmem>>, vector<18x25x128xf32>,
    %15 = vector.shape_cast %12 : vector<256x128xf32> to vector<16x16x128xf32>
    %c1 = arith.constant 1 : index
    %c8 = arith.constant 8 : index
    %c0_9 = arith.constant 0 : index
    %16 = vector.load %arg7[%c1, %c8, %c0_9] : memref<18x25x128xf32, #tpu.memory_space<vmem>>, vector<16x16x128xf32>
    tpu.vector_store %arg7[%c1, %c8, %c0_9], %15 {strides = array<i32>} : memref<18x25x128xf32, #tpu.memory_space<vmem>>, vector<16x16x128xf32>,
    %c0_10 = arith.constant 0 : index
    %c7 = arith.constant 7 : index
    %c0_11 = arith.constant 0 : index
    %17 = vector.load %arg7[%c0_10, %c7, %c0_11] : memref<18x25x128xf32, #tpu.memory_space<vmem>>, vector<16x16x128xf32>
    %18 = vector.shape_cast %17 : vector<16x16x128xf32> to vector<256x128xf32>
    %19 = arith.truncf %18 : vector<256x128xf32> to vector<256x128xbf16>
    %c0_12 = arith.constant 0 : index
    %c0_13 = arith.constant 0 : index
    %c0_14 = arith.constant 0 : index
    %20 = vector.load %arg4[%c0_12, %c0_13, %c0_14] : memref<9x128x128xbf16, #tpu.memory_space<vmem>>, vector<1x128x128xbf16>
    %21 = vector.shape_cast %20 : vector<1x128x128xbf16> to vector<128x128xbf16>
    %cst_15 = arith.constant dense<0.000000e+00> : vector<256x128xf32>
    %22 = tpu.matmul %19, %21, %cst_15 {dimension_numbers = #tpu.dot_dimension_numbers<[1], [0], [0], [1], [0, 0, 1, 1], [], []>} : vector<256x128xbf16>, vector<128x128xbf16>, vector<256x128xf32> -> vector<256x128xf32>
    %c0_16 = arith.constant 0 : index
    %c0_17 = arith.constant 0 : index
    %23 = vector.load %arg5[%c0_16, %c0_17] : memref<1x128xf32, #tpu.memory_space<vmem>>, vector<1x128xf32>
    %24 = vector.broadcast %23 : vector<1x128xf32> to vector<256x128xf32>
    %25 = arith.addf %22, %24 : vector<256x128xf32>
    %c0_18 = arith.constant 0 : index
    %c0_19 = arith.constant 0 : index
    %26 = vector.load %arg6[%c0_18, %c0_19] : memref<256x128xf32, #tpu.memory_space<vmem>>, vector<256x128xf32>
    tpu.vector_store %arg6[%c0_18, %c0_19], %25 {strides = array<i32>} : memref<256x128xf32, #tpu.memory_space<vmem>>, vector<256x128xf32>,
    %c0_20 = arith.constant 0 : index
    %c8_21 = arith.constant 8 : index
    %c0_22 = arith.constant 0 : index
    %27 = vector.load %arg7[%c0_20, %c8_21, %c0_22] : memref<18x25x128xf32, #tpu.memory_space<vmem>>, vector<16x16x128xf32>
    %28 = vector.shape_cast %27 : vector<16x16x128xf32> to vector<256x128xf32>
    %29 = arith.truncf %28 : vector<256x128xf32> to vector<256x128xbf16>
    %c1_23 = arith.constant 1 : index
    %c0_24 = arith.constant 0 : index
    %c0_25 = arith.constant 0 : index
    %30 = vector.load %arg4[%c1_23, %c0_24, %c0_25] : memref<9x128x128xbf16, #tpu.memory_space<vmem>>, vector<1x128x128xbf16>
    %31 = vector.shape_cast %30 : vector<1x128x128xbf16> to vector<128x128xbf16>
    %cst_26 = arith.constant dense<0.000000e+00> : vector<256x128xf32>
    %32 = tpu.matmul %29, %31, %cst_26 {dimension_numbers = #tpu.dot_dimension_numbers<[1], [0], [0], [1], [0, 0, 1, 1], [], []>} : vector<256x128xbf16>, vector<128x128xbf16>, vector<256x128xf32> -> vector<256x128xf32>
    %c0_27 = arith.constant 0 : index
    %c0_28 = arith.constant 0 : index
    %33 = vector.load %arg6[%c0_27, %c0_28] : memref<256x128xf32, #tpu.memory_space<vmem>>, vector<256x128xf32>
    %34 = arith.addf %33, %32 : vector<256x128xf32>
    %c0_29 = arith.constant 0 : index
    %c0_30 = arith.constant 0 : index
    %35 = vector.load %arg6[%c0_29, %c0_30] : memref<256x128xf32, #tpu.memory_space<vmem>>, vector<256x128xf32>
    tpu.vector_store %arg6[%c0_29, %c0_30], %34 {strides = array<i32>} : memref<256x128xf32, #tpu.memory_space<vmem>>, vector<256x128xf32>,
    %c0_31 = arith.constant 0 : index
    %c9 = arith.constant 9 : index
    %c0_32 = arith.constant 0 : index
    %36 = vector.load %arg7[%c0_31, %c9, %c0_32] : memref<18x25x128xf32, #tpu.memory_space<vmem>>, vector<16x16x128xf32>
    %37 = vector.shape_cast %36 : vector<16x16x128xf32> to vector<256x128xf32>
    %38 = arith.truncf %37 : vector<256x128xf32> to vector<256x128xbf16>
    %c2 = arith.constant 2 : index
    %c0_33 = arith.constant 0 : index
    %c0_34 = arith.constant 0 : index
    %39 = vector.load %arg4[%c2, %c0_33, %c0_34] : memref<9x128x128xbf16, #tpu.memory_space<vmem>>, vector<1x128x128xbf16>
    %40 = vector.shape_cast %39 : vector<1x128x128xbf16> to vector<128x128xbf16>
    %cst_35 = arith.constant dense<0.000000e+00> : vector<256x128xf32>
    %41 = tpu.matmul %38, %40, %cst_35 {dimension_numbers = #tpu.dot_dimension_numbers<[1], [0], [0], [1], [0, 0, 1, 1], [], []>} : vector<256x128xbf16>, vector<128x128xbf16>, vector<256x128xf32> -> vector<256x128xf32>
    %c0_36 = arith.constant 0 : index
    %c0_37 = arith.constant 0 : index
    %42 = vector.load %arg6[%c0_36, %c0_37] : memref<256x128xf32, #tpu.memory_space<vmem>>, vector<256x128xf32>
    %43 = arith.addf %42, %41 : vector<256x128xf32>
    %c0_38 = arith.constant 0 : index
    %c0_39 = arith.constant 0 : index
    %44 = vector.load %arg6[%c0_38, %c0_39] : memref<256x128xf32, #tpu.memory_space<vmem>>, vector<256x128xf32>
    tpu.vector_store %arg6[%c0_38, %c0_39], %43 {strides = array<i32>} : memref<256x128xf32, #tpu.memory_space<vmem>>, vector<256x128xf32>,
    %c1_40 = arith.constant 1 : index
    %c7_41 = arith.constant 7 : index
    %c0_42 = arith.constant 0 : index
    %45 = vector.load %arg7[%c1_40, %c7_41, %c0_42] : memref<18x25x128xf32, #tpu.memory_space<vmem>>, vector<16x16x128xf32>
    %46 = vector.shape_cast %45 : vector<16x16x128xf32> to vector<256x128xf32>
    %47 = arith.truncf %46 : vector<256x128xf32> to vector<256x128xbf16>
    %c3 = arith.constant 3 : index
    %c0_43 = arith.constant 0 : index
    %c0_44 = arith.constant 0 : index
    %48 = vector.load %arg4[%c3, %c0_43, %c0_44] : memref<9x128x128xbf16, #tpu.memory_space<vmem>>, vector<1x128x128xbf16>
    %49 = vector.shape_cast %48 : vector<1x128x128xbf16> to vector<128x128xbf16>
    %cst_45 = arith.constant dense<0.000000e+00> : vector<256x128xf32>
    %50 = tpu.matmul %47, %49, %cst_45 {dimension_numbers = #tpu.dot_dimension_numbers<[1], [0], [0], [1], [0, 0, 1, 1], [], []>} : vector<256x128xbf16>, vector<128x128xbf16>, vector<256x128xf32> -> vector<256x128xf32>
    %c0_46 = arith.constant 0 : index
    %c0_47 = arith.constant 0 : index
    %51 = vector.load %arg6[%c0_46, %c0_47] : memref<256x128xf32, #tpu.memory_space<vmem>>, vector<256x128xf32>
    %52 = arith.addf %51, %50 : vector<256x128xf32>
    %c0_48 = arith.constant 0 : index
    %c0_49 = arith.constant 0 : index
    %53 = vector.load %arg6[%c0_48, %c0_49] : memref<256x128xf32, #tpu.memory_space<vmem>>, vector<256x128xf32>
    tpu.vector_store %arg6[%c0_48, %c0_49], %52 {strides = array<i32>} : memref<256x128xf32, #tpu.memory_space<vmem>>, vector<256x128xf32>,
    %c1_50 = arith.constant 1 : index
    %c8_51 = arith.constant 8 : index
    %c0_52 = arith.constant 0 : index
    %54 = vector.load %arg7[%c1_50, %c8_51, %c0_52] : memref<18x25x128xf32, #tpu.memory_space<vmem>>, vector<16x16x128xf32>
    %55 = vector.shape_cast %54 : vector<16x16x128xf32> to vector<256x128xf32>
    %56 = arith.truncf %55 : vector<256x128xf32> to vector<256x128xbf16>
    %c4 = arith.constant 4 : index
    %c0_53 = arith.constant 0 : index
    %c0_54 = arith.constant 0 : index
    %57 = vector.load %arg4[%c4, %c0_53, %c0_54] : memref<9x128x128xbf16, #tpu.memory_space<vmem>>, vector<1x128x128xbf16>
    %58 = vector.shape_cast %57 : vector<1x128x128xbf16> to vector<128x128xbf16>
    %cst_55 = arith.constant dense<0.000000e+00> : vector<256x128xf32>
    %59 = tpu.matmul %56, %58, %cst_55 {dimension_numbers = #tpu.dot_dimension_numbers<[1], [0], [0], [1], [0, 0, 1, 1], [], []>} : vector<256x128xbf16>, vector<128x128xbf16>, vector<256x128xf32> -> vector<256x128xf32>
    %c0_56 = arith.constant 0 : index
    %c0_57 = arith.constant 0 : index
    %60 = vector.load %arg6[%c0_56, %c0_57] : memref<256x128xf32, #tpu.memory_space<vmem>>, vector<256x128xf32>
    %61 = arith.addf %60, %59 : vector<256x128xf32>
    %c0_58 = arith.constant 0 : index
    %c0_59 = arith.constant 0 : index
    %62 = vector.load %arg6[%c0_58, %c0_59] : memref<256x128xf32, #tpu.memory_space<vmem>>, vector<256x128xf32>
    tpu.vector_store %arg6[%c0_58, %c0_59], %61 {strides = array<i32>} : memref<256x128xf32, #tpu.memory_space<vmem>>, vector<256x128xf32>,
    %c1_60 = arith.constant 1 : index
    %c9_61 = arith.constant 9 : index
    %c0_62 = arith.constant 0 : index
    %63 = vector.load %arg7[%c1_60, %c9_61, %c0_62] : memref<18x25x128xf32, #tpu.memory_space<vmem>>, vector<16x16x128xf32>
    %64 = vector.shape_cast %63 : vector<16x16x128xf32> to vector<256x128xf32>
    %65 = arith.truncf %64 : vector<256x128xf32> to vector<256x128xbf16>
    %c5 = arith.constant 5 : index
    %c0_63 = arith.constant 0 : index
    %c0_64 = arith.constant 0 : index
    %66 = vector.load %arg4[%c5, %c0_63, %c0_64] : memref<9x128x128xbf16, #tpu.memory_space<vmem>>, vector<1x128x128xbf16>
    %67 = vector.shape_cast %66 : vector<1x128x128xbf16> to vector<128x128xbf16>
    %cst_65 = arith.constant dense<0.000000e+00> : vector<256x128xf32>
    %68 = tpu.matmul %65, %67, %cst_65 {dimension_numbers = #tpu.dot_dimension_numbers<[1], [0], [0], [1], [0, 0, 1, 1], [], []>} : vector<256x128xbf16>, vector<128x128xbf16>, vector<256x128xf32> -> vector<256x128xf32>
    %c0_66 = arith.constant 0 : index
    %c0_67 = arith.constant 0 : index
    %69 = vector.load %arg6[%c0_66, %c0_67] : memref<256x128xf32, #tpu.memory_space<vmem>>, vector<256x128xf32>
    %70 = arith.addf %69, %68 : vector<256x128xf32>
    %c0_68 = arith.constant 0 : index
    %c0_69 = arith.constant 0 : index
    %71 = vector.load %arg6[%c0_68, %c0_69] : memref<256x128xf32, #tpu.memory_space<vmem>>, vector<256x128xf32>
    tpu.vector_store %arg6[%c0_68, %c0_69], %70 {strides = array<i32>} : memref<256x128xf32, #tpu.memory_space<vmem>>, vector<256x128xf32>,
    %c2_70 = arith.constant 2 : index
    %c7_71 = arith.constant 7 : index
    %c0_72 = arith.constant 0 : index
    %72 = vector.load %arg7[%c2_70, %c7_71, %c0_72] : memref<18x25x128xf32, #tpu.memory_space<vmem>>, vector<16x16x128xf32>
    %73 = vector.shape_cast %72 : vector<16x16x128xf32> to vector<256x128xf32>
    %74 = arith.truncf %73 : vector<256x128xf32> to vector<256x128xbf16>
    %c6 = arith.constant 6 : index
    %c0_73 = arith.constant 0 : index
    %c0_74 = arith.constant 0 : index
    %75 = vector.load %arg4[%c6, %c0_73, %c0_74] : memref<9x128x128xbf16, #tpu.memory_space<vmem>>, vector<1x128x128xbf16>
    %76 = vector.shape_cast %75 : vector<1x128x128xbf16> to vector<128x128xbf16>
    %cst_75 = arith.constant dense<0.000000e+00> : vector<256x128xf32>
    %77 = tpu.matmul %74, %76, %cst_75 {dimension_numbers = #tpu.dot_dimension_numbers<[1], [0], [0], [1], [0, 0, 1, 1], [], []>} : vector<256x128xbf16>, vector<128x128xbf16>, vector<256x128xf32> -> vector<256x128xf32>
    %c0_76 = arith.constant 0 : index
    %c0_77 = arith.constant 0 : index
    %78 = vector.load %arg6[%c0_76, %c0_77] : memref<256x128xf32, #tpu.memory_space<vmem>>, vector<256x128xf32>
    %79 = arith.addf %78, %77 : vector<256x128xf32>
    %c0_78 = arith.constant 0 : index
    %c0_79 = arith.constant 0 : index
    %80 = vector.load %arg6[%c0_78, %c0_79] : memref<256x128xf32, #tpu.memory_space<vmem>>, vector<256x128xf32>
    tpu.vector_store %arg6[%c0_78, %c0_79], %79 {strides = array<i32>} : memref<256x128xf32, #tpu.memory_space<vmem>>, vector<256x128xf32>,
    %c2_80 = arith.constant 2 : index
    %c8_81 = arith.constant 8 : index
    %c0_82 = arith.constant 0 : index
    %81 = vector.load %arg7[%c2_80, %c8_81, %c0_82] : memref<18x25x128xf32, #tpu.memory_space<vmem>>, vector<16x16x128xf32>
    %82 = vector.shape_cast %81 : vector<16x16x128xf32> to vector<256x128xf32>
    %83 = arith.truncf %82 : vector<256x128xf32> to vector<256x128xbf16>
    %c7_83 = arith.constant 7 : index
    %c0_84 = arith.constant 0 : index
    %c0_85 = arith.constant 0 : index
    %84 = vector.load %arg4[%c7_83, %c0_84, %c0_85] : memref<9x128x128xbf16, #tpu.memory_space<vmem>>, vector<1x128x128xbf16>
    %85 = vector.shape_cast %84 : vector<1x128x128xbf16> to vector<128x128xbf16>
    %cst_86 = arith.constant dense<0.000000e+00> : vector<256x128xf32>
    %86 = tpu.matmul %83, %85, %cst_86 {dimension_numbers = #tpu.dot_dimension_numbers<[1], [0], [0], [1], [0, 0, 1, 1], [], []>} : vector<256x128xbf16>, vector<128x128xbf16>, vector<256x128xf32> -> vector<256x128xf32>
    %c0_87 = arith.constant 0 : index
    %c0_88 = arith.constant 0 : index
    %87 = vector.load %arg6[%c0_87, %c0_88] : memref<256x128xf32, #tpu.memory_space<vmem>>, vector<256x128xf32>
    %88 = arith.addf %87, %86 : vector<256x128xf32>
    %c0_89 = arith.constant 0 : index
    %c0_90 = arith.constant 0 : index
    %89 = vector.load %arg6[%c0_89, %c0_90] : memref<256x128xf32, #tpu.memory_space<vmem>>, vector<256x128xf32>
    tpu.vector_store %arg6[%c0_89, %c0_90], %88 {strides = array<i32>} : memref<256x128xf32, #tpu.memory_space<vmem>>, vector<256x128xf32>,
    %c2_91 = arith.constant 2 : index
    %c9_92 = arith.constant 9 : index
    %c0_93 = arith.constant 0 : index
    %90 = vector.load %arg7[%c2_91, %c9_92, %c0_93] : memref<18x25x128xf32, #tpu.memory_space<vmem>>, vector<16x16x128xf32>
    %91 = vector.shape_cast %90 : vector<16x16x128xf32> to vector<256x128xf32>
    %92 = arith.truncf %91 : vector<256x128xf32> to vector<256x128xbf16>
    %c8_94 = arith.constant 8 : index
    %c0_95 = arith.constant 0 : index
    %c0_96 = arith.constant 0 : index
    %93 = vector.load %arg4[%c8_94, %c0_95, %c0_96] : memref<9x128x128xbf16, #tpu.memory_space<vmem>>, vector<1x128x128xbf16>
    %94 = vector.shape_cast %93 : vector<1x128x128xbf16> to vector<128x128xbf16>
    %cst_97 = arith.constant dense<0.000000e+00> : vector<256x128xf32>
    %95 = tpu.matmul %92, %94, %cst_97 {dimension_numbers = #tpu.dot_dimension_numbers<[1], [0], [0], [1], [0, 0, 1, 1], [], []>} : vector<256x128xbf16>, vector<128x128xbf16>, vector<256x128xf32> -> vector<256x128xf32>
    %c0_98 = arith.constant 0 : index
    %c0_99 = arith.constant 0 : index
    %96 = vector.load %arg6[%c0_98, %c0_99] : memref<256x128xf32, #tpu.memory_space<vmem>>, vector<256x128xf32>
    %97 = arith.addf %96, %95 : vector<256x128xf32>
    %c0_100 = arith.constant 0 : index
    %c0_101 = arith.constant 0 : index
    %98 = vector.load %arg6[%c0_100, %c0_101] : memref<256x128xf32, #tpu.memory_space<vmem>>, vector<256x128xf32>
    tpu.vector_store %arg6[%c0_100, %c0_101], %97 {strides = array<i32>} : memref<256x128xf32, #tpu.memory_space<vmem>>, vector<256x128xf32>,
    return
  }
  func.func @transform_0(%arg0: i32) -> (i32, i32) {
    %c0_i32 = arith.constant 0 : i32
    %c0_i32_0 = arith.constant 0 : i32
    return %arg0, %c0_i32 : i32, i32
  }
  func.func @transform_1(%arg0: i32) -> (i32, i32) {
    %c0_i32 = arith.constant 0 : i32
    %c0_i32_0 = arith.constant 0 : i32
    %c0_i32_1 = arith.constant 0 : i32
    return %c0_i32, %c0_i32_0 : i32, i32
  }
  func.func @transform_2(%arg0: i32) -> (i32, i32) {
    %c0_i32 = arith.constant 0 : i32
    %c0_i32_0 = arith.constant 0 : i32
    %c0_i32_1 = arith.constant 0 : i32
    return %c0_i32, %c0_i32_0 : i32, i32
  }
  func.func @transform_3(%arg0: i32) -> (i32, i32, i32) {
    %c0_i32 = arith.constant 0 : i32
    %c0_i32_0 = arith.constant 0 : i32
    %c0_i32_1 = arith.constant 0 : i32
    %c0_i32_2 = arith.constant 0 : i32
    return %c0_i32, %c0_i32_0, %c0_i32_1 : i32, i32, i32
  }
  func.func @transform_4(%arg0: i32) -> (i32, i32) {
    %c0_i32 = arith.constant 0 : i32
    %c0_i32_0 = arith.constant 0 : i32
    %c0_i32_1 = arith.constant 0 : i32
    return %c0_i32, %c0_i32_0 : i32, i32
  }
  func.func @transform_5(%arg0: i32) -> (i32, i32) {
    %c0_i32 = arith.constant 0 : i32
    %c0_i32_0 = arith.constant 0 : i32
    return %arg0, %c0_i32 : i32, i32
  }
}

module attributes {stable_mosaic.version = 11 : i64} {
  func.func @_bn_silu_conv1x1_kernel(%arg0: i32, %arg1: memref<256x16xf32, #tpu.memory_space<vmem>>, %arg2: memref<1x16xf32, #tpu.memory_space<vmem>>, %arg3: memref<1x16xf32, #tpu.memory_space<vmem>>, %arg4: memref<16x128xbf16, #tpu.memory_space<vmem>>, %arg5: memref<256x128xf32, #tpu.memory_space<vmem>>) attributes {dimension_semantics = [#tpu.dimension_semantics<parallel>], iteration_bounds = array<i64: 2>, scalar_prefetch = 0 : i64, scratch_operands = 0 : i64, tpu.core_type = #tpu.core_type<tc>, window_params = [{transform_indices = @transform_0, window_bounds = array<i64: 256, 16>}, {pipeline_mode = #tpu.pipeline_mode<synchronous>, transform_indices = @transform_1, window_bounds = array<i64: 1, 16>}, {pipeline_mode = #tpu.pipeline_mode<synchronous>, transform_indices = @transform_2, window_bounds = array<i64: 1, 16>}, {pipeline_mode = #tpu.pipeline_mode<synchronous>, transform_indices = @transform_3, window_bounds = array<i64: 16, 128>}, {transform_indices = @transform_4, window_bounds = array<i64: 256, 128>}]} {
    %c0 = arith.constant 0 : index
    %c0_0 = arith.constant 0 : index
    %0 = vector.load %arg1[%c0, %c0_0] : memref<256x16xf32, #tpu.memory_space<vmem>>, vector<256x16xf32>
    %c0_1 = arith.constant 0 : index
    %c0_2 = arith.constant 0 : index
    %1 = vector.load %arg2[%c0_1, %c0_2] : memref<1x16xf32, #tpu.memory_space<vmem>>, vector<1x16xf32>
    %2 = vector.broadcast %1 : vector<1x16xf32> to vector<256x16xf32>
    %3 = arith.mulf %0, %2 : vector<256x16xf32>
    %c0_3 = arith.constant 0 : index
    %c0_4 = arith.constant 0 : index
    %4 = vector.load %arg3[%c0_3, %c0_4] : memref<1x16xf32, #tpu.memory_space<vmem>>, vector<1x16xf32>
    %5 = vector.broadcast %4 : vector<1x16xf32> to vector<256x16xf32>
    %6 = arith.addf %3, %5 : vector<256x16xf32>
    %7 = arith.negf %6 : vector<256x16xf32>
    %8 = math.exp %7 : vector<256x16xf32>
    %cst = arith.constant 1.000000e+00 : f32
    %9 = vector.broadcast %cst : f32 to vector<256x16xf32>
    %10 = arith.addf %9, %8 : vector<256x16xf32>
    %11 = arith.divf %9, %10 : vector<256x16xf32>
    %12 = arith.mulf %6, %11 : vector<256x16xf32>
    %13 = arith.truncf %12 : vector<256x16xf32> to vector<256x16xbf16>
    %c0_5 = arith.constant 0 : index
    %c0_6 = arith.constant 0 : index
    %14 = vector.load %arg4[%c0_5, %c0_6] : memref<16x128xbf16, #tpu.memory_space<vmem>>, vector<16x128xbf16>
    %cst_7 = arith.constant dense<0.000000e+00> : vector<256x128xf32>
    %15 = tpu.matmul %13, %14, %cst_7 {dimension_numbers = #tpu.dot_dimension_numbers<[1], [0], [0], [1], [0, 0, 1, 1], [], []>} : vector<256x16xbf16>, vector<16x128xbf16>, vector<256x128xf32> -> vector<256x128xf32>
    %c0_8 = arith.constant 0 : index
    %c0_9 = arith.constant 0 : index
    %16 = vector.load %arg5[%c0_8, %c0_9] : memref<256x128xf32, #tpu.memory_space<vmem>>, vector<256x128xf32>
    tpu.vector_store %arg5[%c0_8, %c0_9], %15 {strides = array<i32>} : memref<256x128xf32, #tpu.memory_space<vmem>>, vector<256x128xf32>,
    return
  }
  func.func @transform_0(%arg0: i32) -> (i32, i32) {
    %c0_i32 = arith.constant 0 : i32
    %c0_i32_0 = arith.constant 0 : i32
    return %arg0, %c0_i32 : i32, i32
  }
  func.func @transform_1(%arg0: i32) -> (i32, i32) {
    %c0_i32 = arith.constant 0 : i32
    %c0_i32_0 = arith.constant 0 : i32
    %c0_i32_1 = arith.constant 0 : i32
    return %c0_i32, %c0_i32_0 : i32, i32
  }
  func.func @transform_2(%arg0: i32) -> (i32, i32) {
    %c0_i32 = arith.constant 0 : i32
    %c0_i32_0 = arith.constant 0 : i32
    %c0_i32_1 = arith.constant 0 : i32
    return %c0_i32, %c0_i32_0 : i32, i32
  }
  func.func @transform_3(%arg0: i32) -> (i32, i32) {
    %c0_i32 = arith.constant 0 : i32
    %c0_i32_0 = arith.constant 0 : i32
    %c0_i32_1 = arith.constant 0 : i32
    return %c0_i32, %c0_i32_0 : i32, i32
  }
  func.func @transform_4(%arg0: i32) -> (i32, i32) {
    %c0_i32 = arith.constant 0 : i32
    %c0_i32_0 = arith.constant 0 : i32
    return %arg0, %c0_i32 : i32, i32
  }
}

</mosaic_0001>

<llo_original>
// kernel: _lambda_.4
$region0: #{_lambda_.4}
  #allocation0 [shape = 'u32[]', space=smem, size = 0x4, offset = 0x4, fixed_abs, tag = 'smem constant byte address 0x4 - core index']
  #allocation1 [shape = 'u32[144,128]{1,0:T(1,128)}', space=vmem, size = 0x12000, scoped, tag = 'internal scratch']
  %s0 = inlined_call_operand.vmem [shape: f32[512,8], index: 0, kind: input, shape index: {}]
  %s1 = inlined_call_operand.vmem [shape: f32[1,8], index: 1, kind: input, shape index: {}]
  %s2 = inlined_call_operand.vmem [shape: f32[1,8], index: 2, kind: input, shape index: {}]
  %s3 = inlined_call_operand.vmem [shape: bf16[8,128], index: 3, kind: input, shape index: {}]
  %s4 = inlined_call_operand.vmem [shape: f32[512,128], index: 4, kind: output, shape index: {}]
  %s5 = sld [smem:[#allocation0]]
  $region49: #{_lambda_.4} parent=0
    _
  %s7 = ssub.s32 1, %s5
  %s8 = scalar_select 0, %s7, %s5
  loop: start=0, step=1, limit=4
  $region2: #{_lambda_.4} parent=0 // loop_pre_header
    _
  $region3: #{_lambda_.4} parent=0 // loop_header
    %s10 = sphi 0, %s14
    %p11 = scmp.ge.s32.totalorder %s10, 4
    %s20 = sphi 0, %s22
    %s23 = sphi 0, %s20
    %s24 = sphi 0, %s23
    %s40 = sphi 0, %s24
    %s44 = sphi 0, %s44
    %s46 = sphi 0, %s44
    %s47 = sphi 0, %s46
    %s61 = sphi 0, %s47
    %s65 = sphi 0, %s65
    %s67 = sphi 0, %s65
    %s68 = sphi 0, %s67
    %s82 = sphi 0, %s68
    %s86 = sphi 0, %s86
    %s88 = sphi 0, %s86
    %s89 = sphi 0, %s88
    %s103 = sphi 0, %s89
    %s109 = sphi 0, %s111
    %s112 = sphi 0, %s109
    %s113 = sphi 0, %s112
    %s129 = sphi 0, %s113
  $region4: #{_lambda_.4} parent=0 // loop_header_branch
    %13 = sbr.rel (%p11) target = $region8
  $region5: #{_lambda_.4} parent=0 // loop_body
    %s15 = ssub.s32 %s10, 1
    %s16 = ssub.s32 %s10, 2
    %s17 = sadd.s32 %s10, 1
    %s18 = ssub.s32 %s10, %s17
    %p19 = scmp.eq.s32.totalorder %s18, 0
    %s21 = sadd.s32 %s20, 1
    %s22 = scalar_select %p19, %s20, %s21
    %p25 = pneg %p19
    %p26 = scmp.eq.s32.totalorder %s10, 1
    %p27 = por %p25, %p26
    %p28 = scmp.ne.s32.totalorder %s20, %s23
    %p29 = scmp.eq.s32.totalorder %s10, 0
    %p30 = por %p28, %p29
    %p31 = scmp.ne.s32.totalorder %s20, %s23
    %p32 = scmp.eq.s32.totalorder %s15, 1
    %p33 = por %p31, %p32
    %p34 = scmp.ne.s32.totalorder %s23, %s24
    %p35 = scmp.eq.s32.totalorder %s15, 0
    %p36 = por %p34, %p35
    %p37 = scmp.ne.s32.totalorder %s23, %s24
    %p38 = scmp.eq.s32.totalorder %s16, 1
    %p39 = por %p37, %p38
    %p41 = scmp.ne.s32.totalorder %s24, %s40
    %p42 = scmp.eq.s32.totalorder %s16, 0
    %p43 = por %p41, %p42
    %s45 = sadd.s32 %s44, 1
    %p48 = scmp.eq.s32.totalorder %s10, 1
    %p49 = scmp.ne.s32.totalorder %s44, %s46
    %p50 = scmp.eq.s32.totalorder %s10, 0
    %p51 = por %p49, %p50
    %p52 = scmp.ne.s32.totalorder %s44, %s46
    %p53 = scmp.eq.s32.totalorder %s15, 1
    %p54 = por %p52, %p53
    %p55 = scmp.ne.s32.totalorder %s46, %s47
    %p56 = scmp.eq.s32.totalorder %s15, 0
    %p57 = por %p55, %p56
    %p58 = scmp.ne.s32.totalorder %s46, %s47
    %p59 = scmp.eq.s32.totalorder %s16, 1
    %p60 = por %p58, %p59
    %p62 = scmp.ne.s32.totalorder %s47, %s61
    %p63 = scmp.eq.s32.totalorder %s16, 0
    %p64 = por %p62, %p63
    %s66 = sadd.s32 %s65, 1
    %p69 = scmp.eq.s32.totalorder %s10, 1
    %p70 = scmp.ne.s32.totalorder %s65, %s67
    %p71 = scmp.eq.s32.totalorder %s10, 0
    %p72 = por %p70, %p71
    %p73 = scmp.ne.s32.totalorder %s65, %s67
    %p74 = scmp.eq.s32.totalorder %s15, 1
    %p75 = por %p73, %p74
    %p76 = scmp.ne.s32.totalorder %s67, %s68
    %p77 = scmp.eq.s32.totalorder %s15, 0
    %p78 = por %p76, %p77
    %p79 = scmp.ne.s32.totalorder %s67, %s68
    %p80 = scmp.eq.s32.totalorder %s16, 1
    %p81 = por %p79, %p80
    %p83 = scmp.ne.s32.totalorder %s68, %s82
    %p84 = scmp.eq.s32.totalorder %s16, 0
    %p85 = por %p83, %p84
    %s87 = sadd.s32 %s86, 1
    %p90 = scmp.eq.s32.totalorder %s10, 1
    %p91 = scmp.ne.s32.totalorder %s86, %s88
    %p92 = scmp.eq.s32.totalorder %s10, 0
    %p93 = por %p91, %p92
    %p94 = scmp.ne.s32.totalorder %s86, %s88
    %p95 = scmp.eq.s32.totalorder %s15, 1
    %p96 = por %p94, %p95
    %p97 = scmp.ne.s32.totalorder %s88, %s89
    %p98 = scmp.eq.s32.totalorder %s15, 0
    %p99 = por %p97, %p98
    %p100 = scmp.ne.s32.totalorder %s88, %s89
    %p101 = scmp.eq.s32.totalorder %s16, 1
    %p102 = por %p100, %p101
    %p104 = scmp.ne.s32.totalorder %s89, %s103
    %p105 = scmp.eq.s32.totalorder %s16, 0
    %p106 = por %p104, %p105
    %s107 = ssub.s32 %s10, %s17
    %p108 = scmp.eq.s32.totalorder %s107, 0
    %s110 = sadd.s32 %s109, 1
    %s111 = scalar_select %p108, %s109, %s110
    %p114 = pneg %p108
    %p115 = scmp.eq.s32.totalorder %s10, 1
    %p116 = por %p114, %p115
    %p117 = scmp.ne.s32.totalorder %s109, %s112
    %p118 = scmp.eq.s32.totalorder %s10, 0
    %p119 = por %p117, %p118
    %p120 = scmp.ne.s32.totalorder %s109, %s112
    %p121 = scmp.eq.s32.totalorder %s15, 1
    %p122 = por %p120, %p121
    %p123 = scmp.ne.s32.totalorder %s112, %s113
    %p124 = scmp.eq.s32.totalorder %s15, 0
    %p125 = por %p123, %p124
    %p126 = scmp.ne.s32.totalorder %s112, %s113
    %p127 = scmp.eq.s32.totalorder %s16, 1
    %p128 = por %p126, %p127
    %p130 = scmp.ne.s32.totalorder %s113, %s129
    %p131 = scmp.eq.s32.totalorder %s16, 0
    %p132 = por %p130, %p131
    %p133 = scmp.le.s32.totalorder 1, %s10
    %p134 = scmp.lt.s32.totalorder %s10, 3
    %p135 = pnand %p133, %p134
    %p136 = pneg %p135
    // Predicated region
    $region9: #{_lambda_.4} parent=5 // pred_check
      _
    $region10: #{_lambda_.4} parent=5 // pred_check_branch
      %138 = sbr.rel (%p135) target = $region12
    $region11: #{_lambda_.4} parent=5 // pred_region
      %s139 = ssub.s32 %s10, 1
      // Predicated region
      $region13: #{_lambda_.4} parent=11 // pred_check
        %p140 = pneg %p57
      $region14: #{_lambda_.4} parent=11 // pred_check_branch
        %142 = sbr.rel (%p140) target = $region16
      $region15: #{_lambda_.4} parent=11 // pred_region
        _
      $region16: #{_lambda_.4} parent=11 // pred_fallthru
        _
      // Predicated region
      $region17: #{_lambda_.4} parent=11 // pred_check
        %p143 = pneg %p78
      $region18: #{_lambda_.4} parent=11 // pred_check_branch
        %145 = sbr.rel (%p143) target = $region20
      $region19: #{_lambda_.4} parent=11 // pred_region
        _
      $region20: #{_lambda_.4} parent=11 // pred_fallthru
        _
      // Predicated region
      $region21: #{_lambda_.4} parent=11 // pred_check
        %p146 = pneg %p99
      $region22: #{_lambda_.4} parent=11 // pred_check_branch
        %148 = sbr.rel (%p146) target = $region24
      $region23: #{_lambda_.4} parent=11 // pred_region
        _
      $region24: #{_lambda_.4} parent=11 // pred_fallthru
        _
    $region12: #{_lambda_.4} parent=5 // pred_fallthru
      _
    %p149 = scmp.lt.s32.totalorder %s10, 2
    // Predicated region
    $region25: #{_lambda_.4} parent=5 // pred_check
      %p150 = pneg %p149
    $region26: #{_lambda_.4} parent=5 // pred_check_branch
      %152 = sbr.rel (%p150) target = $region28
    $region27: #{_lambda_.4} parent=5 // pred_region
      // Predicated region
      $region29: #{_lambda_.4} parent=27 // pred_check
        %p153 = pneg %p30
      $region30: #{_lambda_.4} parent=27 // pred_check_branch
        %155 = sbr.rel (%p153) target = $region32
      $region31: #{_lambda_.4} parent=27 // pred_region
        %s156 = smul.u32 32, %s10
        %p157 = scmp.lt.s32.totalorder %s156, 63
        %s158 = scalar_select %p157, %s156, 63
        %s159 = smul.addr %s158, 8
        %s160 = scalar_lea.vmem %s0, %s159
        %s161 = smul.u32 32, %s10
      $region32: #{_lambda_.4} parent=27 // pred_fallthru
        _
    $region28: #{_lambda_.4} parent=5 // pred_fallthru
      _
    %p162 = scmp.le.s32.totalorder 1, %s10
    %p163 = scmp.lt.s32.totalorder %s10, 3
    %p164 = pnand %p162, %p163
    %p165 = pneg %p164
    // Predicated region
    $region33: #{_lambda_.4} parent=5 // pred_check
      _
    $region34: #{_lambda_.4} parent=5 // pred_check_branch
      %167 = sbr.rel (%p164) target = $region36
    $region35: #{_lambda_.4} parent=5 // pred_region
      %s168 = ssub.s32 %s10, 1
      %s169 = smul.u32 32, %s15
      %p170 = scmp.lt.s32.totalorder %s169, 63
      %s171 = scalar_select %p170, %s169, 63
      %s172 = smul.addr %s171, 8
      %s173 = scalar_lea.vmem %s0, %s172
      %p174 = pneg %p36
      %p175 = pneg %p33
      %p176 = pneg %p57
      %p177 = pneg %p54
      %p178 = pneg %p78
      %p179 = pneg %p75
      %p180 = pneg %p99
      %p181 = pneg %p96
      %p182 = pneg %p125
      %p183 = pneg %p122
      %s184 = smul.u32 32, %s15
      %p185 = scmp.lt.s32.totalorder %s184, 63
      %s186 = scalar_select %p185, %s184, 63
      %s187 = smul.addr %s186, 8
      %s188 = scalar_lea.vmem %s4, %s187
      %s189 = smul.u32 32, %s15
      %p190 = scmp.lt.s32.totalorder %s189, 63
      %s191 = scalar_select %p190, %s189, 63
      %s192 = smul.addr %s191, 8
      %s193 = scalar_lea.vmem %s0, %s192
      %s194 = smul.u32 32, %s15
      %s195 = smul.u32 32, %s15
      %p196 = scmp.lt.s32.totalorder %s195, 63
      %s197 = scalar_select %p196, %s195, 63
      %s198 = smul.addr %s197, 8
      %s199 = scalar_lea.vmem %s4, %s198
      %s200 = smul.u32 32, %s15
      %v202 = vld [vmem:[%s193] sm:$0xff]
      %v203 = vld [vmem:[%s193 + $0x8] sm:$0xff]
      %v204 = vld [vmem:[%s193 + $0x10] sm:$0xff]
      %v205 = vld [vmem:[%s193 + $0x18] sm:$0xff]
      %v206 = vld [vmem:[%s193 + $0x20] sm:$0xff]
      %v207 = vld [vmem:[%s193 + $0x28] sm:$0xff]
      %v208 = vld [vmem:[%s193 + $0x30] sm:$0xff]
      %v209 = vld [vmem:[%s193 + $0x38] sm:$0xff]
      %v210 = vld [vmem:[%s193 + $0x40] sm:$0xff]
      %v211 = vld [vmem:[%s193 + $0x48] sm:$0xff]
      %v212 = vld [vmem:[%s193 + $0x50] sm:$0xff]
      %v213 = vld [vmem:[%s193 + $0x58] sm:$0xff]
      %v214 = vld [vmem:[%s193 + $0x60] sm:$0xff]
      %v215 = vld [vmem:[%s193 + $0x68] sm:$0xff]
      %v216 = vld [vmem:[%s193 + $0x70] sm:$0xff]
      %v217 = vld [vmem:[%s193 + $0x78] sm:$0xff]
      %v218 = vld [vmem:[%s193 + $0x80] sm:$0xff]
      %v219 = vld [vmem:[%s193 + $0x88] sm:$0xff]
      %v220 = vld [vmem:[%s193 + $0x90] sm:$0xff]
      %v221 = vld [vmem:[%s193 + $0x98] sm:$0xff]
      %v222 = vld [vmem:[%s193 + $0xa0] sm:$0xff]
      %v223 = vld [vmem:[%s193 + $0xa8] sm:$0xff]
      %v224 = vld [vmem:[%s193 + $0xb0] sm:$0xff]
      %v225 = vld [vmem:[%s193 + $0xb8] sm:$0xff]
      %v226 = vld [vmem:[%s193 + $0xc0] sm:$0xff]
      %v227 = vld [vmem:[%s193 + $0xc8] sm:$0xff]
      %v228 = vld [vmem:[%s193 + $0xd0] sm:$0xff]
      %v229 = vld [vmem:[%s193 + $0xd8] sm:$0xff]
      %v230 = vld [vmem:[%s193 + $0xe0] sm:$0xff]
      %v231 = vld [vmem:[%s193 + $0xe8] sm:$0xff]
      %v232 = vld [vmem:[%s193 + $0xf0] sm:$0xff]
      %v233 = vld [vmem:[%s193 + $0xf8] sm:$0xff]
      %v234 = vld [vmem:[%s1] sm:$0x1]
      %v236 = vlaneseq
      %v237 = vshrl.u32 %v236, 7
      %v238 = vsub.s32 0, %v237
      %v239 = vrot.slane %v234, %v238
      %v241 = vmul.f32 %v202, %v239
      %v242 = vmul.f32 %v203, %v239
      %v243 = vmul.f32 %v204, %v239
      %v244 = vmul.f32 %v205, %v239
      %v245 = vmul.f32 %v206, %v239
      %v246 = vmul.f32 %v207, %v239
      %v247 = vmul.f32 %v208, %v239
      %v248 = vmul.f32 %v209, %v239
      %v249 = vmul.f32 %v210, %v239
      %v250 = vmul.f32 %v211, %v239
      %v251 = vmul.f32 %v212, %v239
      %v252 = vmul.f32 %v213, %v239
      %v253 = vmul.f32 %v214, %v239
      %v254 = vmul.f32 %v215, %v239
      %v255 = vmul.f32 %v216, %v239
      %v256 = vmul.f32 %v217, %v239
      %v257 = vmul.f32 %v218, %v239
      %v258 = vmul.f32 %v219, %v239
      %v259 = vmul.f32 %v220, %v239
      %v260 = vmul.f32 %v221, %v239
      %v261 = vmul.f32 %v222, %v239
      %v262 = vmul.f32 %v223, %v239
      %v263 = vmul.f32 %v224, %v239
      %v264 = vmul.f32 %v225, %v239
      %v265 = vmul.f32 %v226, %v239
      %v266 = vmul.f32 %v227, %v239
      %v267 = vmul.f32 %v228, %v239
      %v268 = vmul.f32 %v229, %v239
      %v269 = vmul.f32 %v230, %v239
      %v270 = vmul.f32 %v231, %v239
      %v271 = vmul.f32 %v232, %v239
      %v272 = vmul.f32 %v233, %v239
      %v273 = vld [vmem:[%s2] sm:$0x1]
      %v275 = vlaneseq
      %v276 = vshrl.u32 %v275, 7
      %v277 = vsub.s32 0, %v276
      %v278 = vrot.slane %v273, %v277
      %v280 = vadd.f32 %v241, %v278
      %v281 = vadd.f32 %v242, %v278
      %v282 = vadd.f32 %v243, %v278
      %v283 = vadd.f32 %v244, %v278
      %v284 = vadd.f32 %v245, %v278
      %v285 = vadd.f32 %v246, %v278
      %v286 = vadd.f32 %v247, %v278
      %v287 = vadd.f32 %v248, %v278
      %v288 = vadd.f32 %v249, %v278
      %v289 = vadd.f32 %v250, %v278
      %v290 = vadd.f32 %v251, %v278
      %v291 = vadd.f32 %v252, %v278
      %v292 = vadd.f32 %v253, %v278
      %v293 = vadd.f32 %v254, %v278
      %v294 = vadd.f32 %v255, %v278
      %v295 = vadd.f32 %v256, %v278
      %v296 = vadd.f32 %v257, %v278
      %v297 = vadd.f32 %v258, %v278
      %v298 = vadd.f32 %v259, %v278
      %v299 = vadd.f32 %v260, %v278
      %v300 = vadd.f32 %v261, %v278
      %v301 = vadd.f32 %v262, %v278
      %v302 = vadd.f32 %v263, %v278
      %v303 = vadd.f32 %v264, %v278
      %v304 = vadd.f32 %v265, %v278
      %v305 = vadd.f32 %v266, %v278
      %v306 = vadd.f32 %v267, %v278
      %v307 = vadd.f32 %v268, %v278
      %v308 = vadd.f32 %v269, %v278
      %v309 = vadd.f32 %v270, %v278
      %v310 = vadd.f32 %v271, %v278
      %v311 = vadd.f32 %v272, %v278
      %v312 = vxor.u32 %v280, 2147483648
      %v313 = vxor.u32 %v281, 2147483648
      %v314 = vxor.u32 %v282, 2147483648
      %v315 = vxor.u32 %v283, 2147483648
      %v316 = vxor.u32 %v284, 2147483648
      %v317 = vxor.u32 %v285, 2147483648
      %v318 = vxor.u32 %v286, 2147483648
      %v319 = vxor.u32 %v287, 2147483648
      %v320 = vxor.u32 %v288, 2147483648
      %v321 = vxor.u32 %v289, 2147483648
      %v322 = vxor.u32 %v290, 2147483648
      %v323 = vxor.u32 %v291, 2147483648
      %v324 = vxor.u32 %v292, 2147483648
      %v325 = vxor.u32 %v293, 2147483648
      %v326 = vxor.u32 %v294, 2147483648
      %v327 = vxor.u32 %v295, 2147483648
      %v328 = vxor.u32 %v296, 2147483648
      %v329 = vxor.u32 %v297, 2147483648
      %v330 = vxor.u32 %v298, 2147483648
      %v331 = vxor.u32 %v299, 2147483648
      %v332 = vxor.u32 %v300, 2147483648
      %v333 = vxor.u32 %v301, 2147483648
      %v334 = vxor.u32 %v302, 2147483648
      %v335 = vxor.u32 %v303, 2147483648
      %v336 = vxor.u32 %v304, 2147483648
      %v337 = vxor.u32 %v305, 2147483648
      %v338 = vxor.u32 %v306, 2147483648
      %v339 = vxor.u32 %v307, 2147483648
      %v340 = vxor.u32 %v308, 2147483648
      %v341 = vxor.u32 %v309, 2147483648
      %v342 = vxor.u32 %v310, 2147483648
      %v343 = vxor.u32 %v311, 2147483648
      %v344 = vmul.f32 %v312, 1.442695
      %v345 = vpow.pop %v344
      %v346 = vmul.f32 %v313, 1.442695
      %v347 = vpow.pop %v346
      %v348 = vmul.f32 %v314, 1.442695
      %v349 = vpow.pop %v348
      %v350 = vmul.f32 %v315, 1.442695
      %v351 = vpow.pop %v350
      %v352 = vmul.f32 %v316, 1.442695
      %v353 = vpow.pop %v352
      %v354 = vmul.f32 %v317, 1.442695
      %v355 = vpow.pop %v354
      %v356 = vmul.f32 %v318, 1.442695
      %v357 = vpow.pop %v356
      %v358 = vmul.f32 %v319, 1.442695
      %v359 = vpow.pop %v358
      %v360 = vmul.f32 %v320, 1.442695
      %v361 = vpow.pop %v360
      %v362 = vmul.f32 %v321, 1.442695
      %v363 = vpow.pop %v362
      %v364 = vmul.f32 %v322, 1.442695
      %v365 = vpow.pop %v364
      %v366 = vmul.f32 %v323, 1.442695
      %v367 = vpow.pop %v366
      %v368 = vmul.f32 %v324, 1.442695
      %v369 = vpow.pop %v368
      %v370 = vmul.f32 %v325, 1.442695
      %v371 = vpow.pop %v370
      %v372 = vmul.f32 %v326, 1.442695
      %v373 = vpow.pop %v372
      %v374 = vmul.f32 %v327, 1.442695
      %v375 = vpow.pop %v374
      %v376 = vmul.f32 %v328, 1.442695
      %v377 = vpow.pop %v376
      %v378 = vmul.f32 %v329, 1.442695
      %v379 = vpow.pop %v378
      %v380 = vmul.f32 %v330, 1.442695
      %v381 = vpow.pop %v380
      %v382 = vmul.f32 %v331, 1.442695
      %v383 = vpow.pop %v382
      %v384 = vmul.f32 %v332, 1.442695
      %v385 = vpow.pop %v384
      %v386 = vmul.f32 %v333, 1.442695
      %v387 = vpow.pop %v386
      %v388 = vmul.f32 %v334, 1.442695
      %v389 = vpow.pop %v388
      %v390 = vmul.f32 %v335, 1.442695
      %v391 = vpow.pop %v390
      %v392 = vmul.f32 %v336, 1.442695
      %v393 = vpow.pop %v392
      %v394 = vmul.f32 %v337, 1.442695
      %v395 = vpow.pop %v394
      %v396 = vmul.f32 %v338, 1.442695
      %v397 = vpow.pop %v396
      %v398 = vmul.f32 %v339, 1.442695
      %v399 = vpow.pop %v398
      %v400 = vmul.f32 %v340, 1.442695
      %v401 = vpow.pop %v400
      %v402 = vmul.f32 %v341, 1.442695
      %v403 = vpow.pop %v402
      %v404 = vmul.f32 %v342, 1.442695
      %v405 = vpow.pop %v404
      %v406 = vmul.f32 %v343, 1.442695
      %v407 = vpow.pop %v406
      %v408 = vadd.f32 %v345, 1.0
      %v409 = vadd.f32 %v347, 1.0
      %v410 = vadd.f32 %v349, 1.0
      %v411 = vadd.f32 %v351, 1.0
      %v412 = vadd.f32 %v353, 1.0
      %v413 = vadd.f32 %v355, 1.0
      %v414 = vadd.f32 %v357, 1.0
      %v415 = vadd.f32 %v359, 1.0
      %v416 = vadd.f32 %v361, 1.0
      %v417 = vadd.f32 %v363, 1.0
      %v418 = vadd.f32 %v365, 1.0
      %v419 = vadd.f32 %v367, 1.0
      %v420 = vadd.f32 %v369, 1.0
      %v421 = vadd.f32 %v371, 1.0
      %v422 = vadd.f32 %v373, 1.0
      %v423 = vadd.f32 %v375, 1.0
      %v424 = vadd.f32 %v377, 1.0
      %v425 = vadd.f32 %v379, 1.0
      %v426 = vadd.f32 %v381, 1.0
      %v427 = vadd.f32 %v383, 1.0
      %v428 = vadd.f32 %v385, 1.0
      %v429 = vadd.f32 %v387, 1.0
      %v430 = vadd.f32 %v389, 1.0
      %v431 = vadd.f32 %v391, 1.0
      %v432 = vadd.f32 %v393, 1.0
      %v433 = vadd.f32 %v395, 1.0
      %v434 = vadd.f32 %v397, 1.0
      %v435 = vadd.f32 %v399, 1.0
      %v436 = vadd.f32 %v401, 1.0
      %v437 = vadd.f32 %v403, 1.0
      %v438 = vadd.f32 %v405, 1.0
      %v439 = vadd.f32 %v407, 1.0
      %v440 = vrcp.pop %v408
      %v441 = vmul.f32 1.0, %v440
      %v442 = vrcp.pop %v409
      %v443 = vmul.f32 1.0, %v442
      %v444 = vrcp.pop %v410
      %v445 = vmul.f32 1.0, %v444
      %v446 = vrcp.pop %v411
      %v447 = vmul.f32 1.0, %v446
      %v448 = vrcp.pop %v412
      %v449 = vmul.f32 1.0, %v448
      %v450 = vrcp.pop %v413
      %v451 = vmul.f32 1.0, %v450
      %v452 = vrcp.pop %v414
      %v453 = vmul.f32 1.0, %v452
      %v454 = vrcp.pop %v415
      %v455 = vmul.f32 1.0, %v454
      %v456 = vrcp.pop %v416
      %v457 = vmul.f32 1.0, %v456
      %v458 = vrcp.pop %v417
      %v459 = vmul.f32 1.0, %v458
      %v460 = vrcp.pop %v418
      %v461 = vmul.f32 1.0, %v460
      %v462 = vrcp.pop %v419
      %v463 = vmul.f32 1.0, %v462
      %v464 = vrcp.pop %v420
      %v465 = vmul.f32 1.0, %v464
      %v466 = vrcp.pop %v421
      %v467 = vmul.f32 1.0, %v466
      %v468 = vrcp.pop %v422
      %v469 = vmul.f32 1.0, %v468
      %v470 = vrcp.pop %v423
      %v471 = vmul.f32 1.0, %v470
      %v472 = vrcp.pop %v424
      %v473 = vmul.f32 1.0, %v472
      %v474 = vrcp.pop %v425
      %v475 = vmul.f32 1.0, %v474
      %v476 = vrcp.pop %v426
      %v477 = vmul.f32 1.0, %v476
      %v478 = vrcp.pop %v427
      %v479 = vmul.f32 1.0, %v478
      %v480 = vrcp.pop %v428
      %v481 = vmul.f32 1.0, %v480
      %v482 = vrcp.pop %v429
      %v483 = vmul.f32 1.0, %v482
      %v484 = vrcp.pop %v430
      %v485 = vmul.f32 1.0, %v484
      %v486 = vrcp.pop %v431
      %v487 = vmul.f32 1.0, %v486
      %v488 = vrcp.pop %v432
      %v489 = vmul.f32 1.0, %v488
      %v490 = vrcp.pop %v433
      %v491 = vmul.f32 1.0, %v490
      %v492 = vrcp.pop %v434
      %v493 = vmul.f32 1.0, %v492
      %v494 = vrcp.pop %v435
      %v495 = vmul.f32 1.0, %v494
      %v496 = vrcp.pop %v436
      %v497 = vmul.f32 1.0, %v496
      %v498 = vrcp.pop %v437
      %v499 = vmul.f32 1.0, %v498
      %v500 = vrcp.pop %v438
      %v501 = vmul.f32 1.0, %v500
      %v502 = vrcp.pop %v439
      %v503 = vmul.f32 1.0, %v502
      %v504 = vmul.f32 %v280, %v441
      %v505 = vmul.f32 %v281, %v443
      %v506 = vmul.f32 %v282, %v445
      %v507 = vmul.f32 %v283, %v447
      %v508 = vmul.f32 %v284, %v449
      %v509 = vmul.f32 %v285, %v451
      %v510 = vmul.f32 %v286, %v453
      %v511 = vmul.f32 %v287, %v455
      %v512 = vmul.f32 %v288, %v457
      %v513 = vmul.f32 %v289, %v459
      %v514 = vmul.f32 %v290, %v461
      %v515 = vmul.f32 %v291, %v463
      %v516 = vmul.f32 %v292, %v465
      %v517 = vmul.f32 %v293, %v467
      %v518 = vmul.f32 %v294, %v469
      %v519 = vmul.f32 %v295, %v471
      %v520 = vmul.f32 %v296, %v473
      %v521 = vmul.f32 %v297, %v475
      %v522 = vmul.f32 %v298, %v477
      %v523 = vmul.f32 %v299, %v479
      %v524 = vmul.f32 %v300, %v481
      %v525 = vmul.f32 %v301, %v483
      %v526 = vmul.f32 %v302, %v485
      %v527 = vmul.f32 %v303, %v487
      %v528 = vmul.f32 %v304, %v489
      %v529 = vmul.f32 %v305, %v491
      %v530 = vmul.f32 %v306, %v493
      %v531 = vmul.f32 %v307, %v495
      %v532 = vmul.f32 %v308, %v497
      %v533 = vmul.f32 %v309, %v499
      %v534 = vmul.f32 %v310, %v501
      %v535 = vmul.f32 %v311, %v503
      %v536 = vpack.c.bf16 %v505, %v504
      %v537 = vpack.c.bf16 %v507, %v506
      %v538 = vpack.c.bf16 %v509, %v508
      %v539 = vpack.c.bf16 %v511, %v510
      %v540 = vpack.c.bf16 %v513, %v512
      %v541 = vpack.c.bf16 %v515, %v514
      %v542 = vpack.c.bf16 %v517, %v516
      %v543 = vpack.c.bf16 %v519, %v518
      %v544 = vpack.c.bf16 %v521, %v520
      %v545 = vpack.c.bf16 %v523, %v522
      %v546 = vpack.c.bf16 %v525, %v524
      %v547 = vpack.c.bf16 %v527, %v526
      %v548 = vpack.c.bf16 %v529, %v528
      %v549 = vpack.c.bf16 %v531, %v530
      %v550 = vpack.c.bf16 %v533, %v532
      %v551 = vpack.c.bf16 %v535, %v534
      %v552 = vld [vmem:[%s3] sm:$0xf]
      %vm553 = vcmask 64512
      %v555 = vsel %vm553, %v536, 0
      %v558 = vsel %vm553, %v537, 0
      %v561 = vsel %vm553, %v538, 0
      %v564 = vsel %vm553, %v539, 0
      %v567 = vsel %vm553, %v540, 0
      %v570 = vsel %vm553, %v541, 0
      %v573 = vsel %vm553, %v542, 0
      %v576 = vsel %vm553, %v543, 0
      %v579 = vsel %vm553, %v544, 0
      %v582 = vsel %vm553, %v545, 0
      %v585 = vsel %vm553, %v546, 0
      %v588 = vsel %vm553, %v547, 0
      %v591 = vsel %vm553, %v548, 0
      %v594 = vsel %vm553, %v549, 0
      %v597 = vsel %vm553, %v550, 0
      %v600 = vsel %vm553, %v551, 0
      %vm602 = vcmask 1043456
      %v604 = vsel %vm602, %v552, 0
      %606 = vmatprep.subr.bf16.mxu0 0
      %607 = vmatpush1.bf16.msra.mxu0 %v604
      %608 = vmatprep.subr.bf16.mxu0 0
      %609 = vmatpush1.bf16.msra.mxu0 0
      %610 = vmatprep.subr.bf16.mxu0 0
      %611 = vmatpush1.bf16.msra.mxu0 0
      %612 = vmatprep.subr.bf16.mxu0 0
      %613 = vmatpush1.bf16.msra.mxu0 0
      %614 = vmatprep.subr.bf16.mxu0 0
      %615 = vmatpush1.bf16.msra.mxu0 0
      %616 = vmatprep.subr.bf16.mxu0 0
      %617 = vmatpush1.bf16.msra.mxu0 0
      %618 = vmatprep.subr.bf16.mxu0 0
      %619 = vmatpush1.bf16.msra.mxu0 0
      %620 = vmatprep.subr.bf16.mxu0 0
      %621 = vmatpush1.bf16.msra.mxu0 0
      %622 = vmatprep.subr.bf16.mxu0 0
      %623 = vmatpush1.bf16.msra.mxu0 0
      %624 = vmatprep.subr.bf16.mxu0 0
      %625 = vmatpush1.bf16.msra.mxu0 0
      %626 = vmatprep.subr.bf16.mxu0 0
      %627 = vmatpush1.bf16.msra.mxu0 0
      %628 = vmatprep.subr.bf16.mxu0 0
      %629 = vmatpush1.bf16.msra.mxu0 0
      %630 = vmatprep.subr.bf16.mxu0 0
      %631 = vmatpush1.bf16.msra.mxu0 0
      %632 = vmatprep.subr.bf16.mxu0 0
      %633 = vmatpush1.bf16.msra.mxu0 0
      %634 = vmatprep.subr.bf16.mxu0 0
      %635 = vmatpush1.bf16.msra.mxu0 0
      %636 = vmatprep.subr.bf16.mxu0 0
      %637 = vmatpush1.bf16.msra.mxu0 0
      %638 = vmatprep.mubr.bf16.mxu0 0
      %639 = vmatmul.mubr.bf16.gmra.mrb[0].mxu0 %v555
      %v640 = vpop.f32.mrb[0].mxu0
      %v641 = vadd.f32 0.0, %v640
      %v642 = vpop.f32.mrb[0].mxu0
      %v643 = vpop.f32.mrb[0].mxu0
      %v644 = vadd.f32 0.0, %v643
      %v645 = vpop.f32.mrb[0].mxu0
      %646 = vmatprep.mubr.bf16.mxu0 0
      %647 = vmatmul.mubr.bf16.gmra.mrb[0].mxu0 %v558
      %v648 = vpop.f32.mrb[0].mxu0
      %v649 = vadd.f32 0.0, %v648
      %v650 = vpop.f32.mrb[0].mxu0
      %v651 = vpop.f32.mrb[0].mxu0
      %v652 = vadd.f32 0.0, %v651
      %v653 = vpop.f32.mrb[0].mxu0
      %654 = vmatprep.mubr.bf16.mxu0 0
      %655 = vmatmul.mubr.bf16.gmra.mrb[0].mxu0 %v561
      %v656 = vpop.f32.mrb[0].mxu0
      %v657 = vadd.f32 0.0, %v656
      %v658 = vpop.f32.mrb[0].mxu0
      %v659 = vpop.f32.mrb[0].mxu0
      %v660 = vadd.f32 0.0, %v659
      %v661 = vpop.f32.mrb[0].mxu0
      %662 = vmatprep.mubr.bf16.mxu0 0
      %663 = vmatmul.mubr.bf16.gmra.mrb[0].mxu0 %v564
      %v664 = vpop.f32.mrb[0].mxu0
      %v665 = vadd.f32 0.0, %v664
      %v666 = vpop.f32.mrb[0].mxu0
      %v667 = vpop.f32.mrb[0].mxu0
      %v668 = vadd.f32 0.0, %v667
      %v669 = vpop.f32.mrb[0].mxu0
      %670 = vmatprep.mubr.bf16.mxu0 0
      %671 = vmatmul.mubr.bf16.gmra.mrb[0].mxu0 %v567
      %v672 = vpop.f32.mrb[0].mxu0
      %v673 = vadd.f32 0.0, %v672
      %v674 = vpop.f32.mrb[0].mxu0
      %v675 = vpop.f32.mrb[0].mxu0
      %v676 = vadd.f32 0.0, %v675
      %v677 = vpop.f32.mrb[0].mxu0
      %678 = vmatprep.mubr.bf16.mxu0 0
      %679 = vmatmul.mubr.bf16.gmra.mrb[0].mxu0 %v570
      %v680 = vpop.f32.mrb[0].mxu0
      %v681 = vadd.f32 0.0, %v680
      %v682 = vpop.f32.mrb[0].mxu0
      %v683 = vpop.f32.mrb[0].mxu0
      %v684 = vadd.f32 0.0, %v683
      %v685 = vpop.f32.mrb[0].mxu0
      %686 = vmatprep.mubr.bf16.mxu0 0
      %687 = vmatmul.mubr.bf16.gmra.mrb[0].mxu0 %v573
      %v688 = vpop.f32.mrb[0].mxu0
      %v689 = vadd.f32 0.0, %v688
      %v690 = vpop.f32.mrb[0].mxu0
      %v691 = vpop.f32.mrb[0].mxu0
      %v692 = vadd.f32 0.0, %v691
      %v693 = vpop.f32.mrb[0].mxu0
      %694 = vmatprep.mubr.bf16.mxu0 0
      %695 = vmatmul.mubr.bf16.gmra.mrb[0].mxu0 %v576
      %v696 = vpop.f32.mrb[0].mxu0
      %v697 = vadd.f32 0.0, %v696
      %v698 = vpop.f32.mrb[0].mxu0
      %v699 = vpop.f32.mrb[0].mxu0
      %v700 = vadd.f32 0.0, %v699
      %v701 = vpop.f32.mrb[0].mxu0
      %702 = vmatprep.mubr.bf16.mxu0 0
      %703 = vmatmul.mubr.bf16.gmra.mrb[0].mxu0 %v579
      %v704 = vpop.f32.mrb[0].mxu0
      %v705 = vadd.f32 0.0, %v704
      %v706 = vpop.f32.mrb[0].mxu0
      %v707 = vpop.f32.mrb[0].mxu0
      %v708 = vadd.f32 0.0, %v707
      %v709 = vpop.f32.mrb[0].mxu0
      %710 = vmatprep.mubr.bf16.mxu0 0
      %711 = vmatmul.mubr.bf16.gmra.mrb[0].mxu0 %v582
      %v712 = vpop.f32.mrb[0].mxu0
      %v713 = vadd.f32 0.0, %v712
      %v714 = vpop.f32.mrb[0].mxu0
      %v715 = vpop.f32.mrb[0].mxu0
      %v716 = vadd.f32 0.0, %v715
      %v717 = vpop.f32.mrb[0].mxu0
      %718 = vmatprep.mubr.bf16.mxu0 0
      %719 = vmatmul.mubr.bf16.gmra.mrb[0].mxu0 %v585
      %v720 = vpop.f32.mrb[0].mxu0
      %v721 = vadd.f32 0.0, %v720
      %v722 = vpop.f32.mrb[0].mxu0
      %v723 = vpop.f32.mrb[0].mxu0
      %v724 = vadd.f32 0.0, %v723
      %v725 = vpop.f32.mrb[0].mxu0
      %726 = vmatprep.mubr.bf16.mxu0 0
      %727 = vmatmul.mubr.bf16.gmra.mrb[0].mxu0 %v588
      %v728 = vpop.f32.mrb[0].mxu0
      %v729 = vadd.f32 0.0, %v728
      %v730 = vpop.f32.mrb[0].mxu0
      %v731 = vpop.f32.mrb[0].mxu0
      %v732 = vadd.f32 0.0, %v731
      %v733 = vpop.f32.mrb[0].mxu0
      %734 = vmatprep.mubr.bf16.mxu0 0
      %735 = vmatmul.mubr.bf16.gmra.mrb[0].mxu0 %v591
      %v736 = vpop.f32.mrb[0].mxu0
      %v737 = vadd.f32 0.0, %v736
      %v738 = vpop.f32.mrb[0].mxu0
      %v739 = vpop.f32.mrb[0].mxu0
      %v740 = vadd.f32 0.0, %v739
      %v741 = vpop.f32.mrb[0].mxu0
      %742 = vmatprep.mubr.bf16.mxu0 0
      %743 = vmatmul.mubr.bf16.gmra.mrb[0].mxu0 %v594
      %v744 = vpop.f32.mrb[0].mxu0
      %v745 = vadd.f32 0.0, %v744
      %v746 = vpop.f32.mrb[0].mxu0
      %v747 = vpop.f32.mrb[0].mxu0
      %v748 = vadd.f32 0.0, %v747
      %v749 = vpop.f32.mrb[0].mxu0
      %750 = vmatprep.mubr.bf16.mxu0 0
      %751 = vmatmul.mubr.bf16.gmra.mrb[0].mxu0 %v597
      %v752 = vpop.f32.mrb[0].mxu0
      %v753 = vadd.f32 0.0, %v752
      %v754 = vpop.f32.mrb[0].mxu0
      %v755 = vpop.f32.mrb[0].mxu0
      %v756 = vadd.f32 0.0, %v755
      %v757 = vpop.f32.mrb[0].mxu0
      %758 = vmatprep.mubr.bf16.mxu0 0
      %759 = vmatmul.mubr.bf16.gmra.mrb[0].mxu0 %v600
      %v760 = vpop.f32.mrb[0].mxu0
      %v761 = vadd.f32 0.0, %v760
      %v762 = vpop.f32.mrb[0].mxu0
      %v763 = vpop.f32.mrb[0].mxu0
      %v764 = vadd.f32 0.0, %v763
      %v765 = vpop.f32.mrb[0].mxu0
      %766 = vdwg.mxu0
      %767 = vst [vmem:[%s199] sm:$0xff] %v641
      %768 = vst [vmem:[%s199 + $0x8] sm:$0xff] %v644
      %769 = vst [vmem:[%s199 + $0x10] sm:$0xff] %v649
      %770 = vst [vmem:[%s199 + $0x18] sm:$0xff] %v652
      %771 = vst [vmem:[%s199 + $0x20] sm:$0xff] %v657
      %772 = vst [vmem:[%s199 + $0x28] sm:$0xff] %v660
      %773 = vst [vmem:[%s199 + $0x30] sm:$0xff] %v665
      %774 = vst [vmem:[%s199 + $0x38] sm:$0xff] %v668
      %775 = vst [vmem:[%s199 + $0x40] sm:$0xff] %v673
      %776 = vst [vmem:[%s199 + $0x48] sm:$0xff] %v676
      %777 = vst [vmem:[%s199 + $0x50] sm:$0xff] %v681
      %778 = vst [vmem:[%s199 + $0x58] sm:$0xff] %v684
      %779 = vst [vmem:[%s199 + $0x60] sm:$0xff] %v689
      %780 = vst [vmem:[%s199 + $0x68] sm:$0xff] %v692
      %781 = vst [vmem:[%s199 + $0x70] sm:$0xff] %v697
      %782 = vst [vmem:[%s199 + $0x78] sm:$0xff] %v700
      %783 = vst [vmem:[%s199 + $0x80] sm:$0xff] %v705
      %784 = vst [vmem:[%s199 + $0x88] sm:$0xff] %v708
      %785 = vst [vmem:[%s199 + $0x90] sm:$0xff] %v713
      %786 = vst [vmem:[%s199 + $0x98] sm:$0xff] %v716
      %787 = vst [vmem:[%s199 + $0xa0] sm:$0xff] %v721
      %788 = vst [vmem:[%s199 + $0xa8] sm:$0xff] %v724
      %789 = vst [vmem:[%s199 + $0xb0] sm:$0xff] %v729
      %790 = vst [vmem:[%s199 + $0xb8] sm:$0xff] %v732
      %791 = vst [vmem:[%s199 + $0xc0] sm:$0xff] %v737
      %792 = vst [vmem:[%s199 + $0xc8] sm:$0xff] %v740
      %793 = vst [vmem:[%s199 + $0xd0] sm:$0xff] %v745
      %794 = vst [vmem:[%s199 + $0xd8] sm:$0xff] %v748
      %795 = vst [vmem:[%s199 + $0xe0] sm:$0xff] %v753
      %796 = vst [vmem:[%s199 + $0xe8] sm:$0xff] %v756
      %797 = vst [vmem:[%s199 + $0xf0] sm:$0xff] %v761
      %798 = vst [vmem:[%s199 + $0xf8] sm:$0xff] %v764
      %s799 = smul.u32 32, %s15
      %p800 = scmp.lt.s32.totalorder %s799, 63
      %s801 = scalar_select %p800, %s799, 63
      %s802 = smul.addr %s801, 8
      %s803 = scalar_lea.vmem %s4, %s802
      // Predicated region
      $region37: #{_lambda_.4} parent=35 // pred_check
        %p804 = pneg %p122
      $region38: #{_lambda_.4} parent=35 // pred_check_branch
        %806 = sbr.rel (%p804) target = $region40
      $region39: #{_lambda_.4} parent=35 // pred_region
        %s807 = smul.u32 32, %s15
      $region40: #{_lambda_.4} parent=35 // pred_fallthru
        _
    $region36: #{_lambda_.4} parent=5 // pred_fallthru
      _
    %p808 = scmp.le.s32.totalorder 2, %s10
    // Predicated region
    $region41: #{_lambda_.4} parent=5 // pred_check
      %p809 = pneg %p808
    $region42: #{_lambda_.4} parent=5 // pred_check_branch
      %811 = sbr.rel (%p809) target = $region44
    $region43: #{_lambda_.4} parent=5 // pred_region
      %s812 = ssub.s32 %s10, 2
      // Predicated region
      $region45: #{_lambda_.4} parent=43 // pred_check
        %p813 = pneg %p128
      $region46: #{_lambda_.4} parent=43 // pred_check_branch
        %815 = sbr.rel (%p813) target = $region48
      $region47: #{_lambda_.4} parent=43 // pred_region
        %s816 = smul.u32 32, %s16
        %p817 = scmp.lt.s32.totalorder %s816, 63
        %s818 = scalar_select %p817, %s816, 63
        %s819 = smul.addr %s818, 8
        %s820 = scalar_lea.vmem %s4, %s819
      $region48: #{_lambda_.4} parent=43 // pred_fallthru
        _
    $region44: #{_lambda_.4} parent=5 // pred_fallthru
      _
  $region6: #{_lambda_.4} parent=0 // loop_footer
    %s14 = sadd.s32 1, %s10
  $region7: #{_lambda_.4} parent=0 // loop_footer_branch
    %9 = sbr.rel target = $region3
  $region8: #{_lambda_.4} parent=0 // loop_exit
    _

// kernel: _lambda_.6
$region0: #{_lambda_.6}
  #allocation0 [shape = 'u32[]', space=smem, size = 0x4, offset = 0x4, fixed_abs, tag = 'smem constant byte address 0x4 - core index']
  #allocation1 [shape = 'u32[144,128]{1,0:T(1,128)}', space=vmem, size = 0x12000, scoped, tag = 'internal scratch']
  %s0 = inlined_call_operand.vmem [shape: f32[512,16], index: 0, kind: input, shape index: {}]
  %s1 = inlined_call_operand.vmem [shape: f32[1,16], index: 1, kind: input, shape index: {}]
  %s2 = inlined_call_operand.vmem [shape: f32[1,16], index: 2, kind: input, shape index: {}]
  %s3 = inlined_call_operand.vmem [shape: bf16[16,128], index: 3, kind: input, shape index: {}]
  %s4 = inlined_call_operand.vmem [shape: f32[512,128], index: 4, kind: output, shape index: {}]
  %s5 = sld [smem:[#allocation0]]
  $region49: #{_lambda_.6} parent=0
    _
  %s7 = ssub.s32 1, %s5
  %s8 = scalar_select 0, %s7, %s5
  loop: start=0, step=1, limit=4
  $region2: #{_lambda_.6} parent=0 // loop_pre_header
    _
  $region3: #{_lambda_.6} parent=0 // loop_header
    %s10 = sphi 0, %s14
    %p11 = scmp.ge.s32.totalorder %s10, 4
    %s20 = sphi 0, %s22
    %s23 = sphi 0, %s20
    %s24 = sphi 0, %s23
    %s40 = sphi 0, %s24
    %s44 = sphi 0, %s44
    %s46 = sphi 0, %s44
    %s47 = sphi 0, %s46
    %s61 = sphi 0, %s47
    %s65 = sphi 0, %s65
    %s67 = sphi 0, %s65
    %s68 = sphi 0, %s67
    %s82 = sphi 0, %s68
    %s86 = sphi 0, %s86
    %s88 = sphi 0, %s86
    %s89 = sphi 0, %s88
    %s103 = sphi 0, %s89
    %s109 = sphi 0, %s111
    %s112 = sphi 0, %s109
    %s113 = sphi 0, %s112
    %s129 = sphi 0, %s113
  $region4: #{_lambda_.6} parent=0 // loop_header_branch
    %13 = sbr.rel (%p11) target = $region8
  $region5: #{_lambda_.6} parent=0 // loop_body
    %s15 = ssub.s32 %s10, 1
    %s16 = ssub.s32 %s10, 2
    %s17 = sadd.s32 %s10, 1
    %s18 = ssub.s32 %s10, %s17
    %p19 = scmp.eq.s32.totalorder %s18, 0
    %s21 = sadd.s32 %s20, 1
    %s22 = scalar_select %p19, %s20, %s21
    %p25 = pneg %p19
    %p26 = scmp.eq.s32.totalorder %s10, 1
    %p27 = por %p25, %p26
    %p28 = scmp.ne.s32.totalorder %s20, %s23
    %p29 = scmp.eq.s32.totalorder %s10, 0
    %p30 = por %p28, %p29
    %p31 = scmp.ne.s32.totalorder %s20, %s23
    %p32 = scmp.eq.s32.totalorder %s15, 1
    %p33 = por %p31, %p32
    %p34 = scmp.ne.s32.totalorder %s23, %s24
    %p35 = scmp.eq.s32.totalorder %s15, 0
    %p36 = por %p34, %p35
    %p37 = scmp.ne.s32.totalorder %s23, %s24
    %p38 = scmp.eq.s32.totalorder %s16, 1
    %p39 = por %p37, %p38
    %p41 = scmp.ne.s32.totalorder %s24, %s40
    %p42 = scmp.eq.s32.totalorder %s16, 0
    %p43 = por %p41, %p42
    %s45 = sadd.s32 %s44, 1
    %p48 = scmp.eq.s32.totalorder %s10, 1
    %p49 = scmp.ne.s32.totalorder %s44, %s46
    %p50 = scmp.eq.s32.totalorder %s10, 0
    %p51 = por %p49, %p50
    %p52 = scmp.ne.s32.totalorder %s44, %s46
    %p53 = scmp.eq.s32.totalorder %s15, 1
    %p54 = por %p52, %p53
    %p55 = scmp.ne.s32.totalorder %s46, %s47
    %p56 = scmp.eq.s32.totalorder %s15, 0
    %p57 = por %p55, %p56
    %p58 = scmp.ne.s32.totalorder %s46, %s47
    %p59 = scmp.eq.s32.totalorder %s16, 1
    %p60 = por %p58, %p59
    %p62 = scmp.ne.s32.totalorder %s47, %s61
    %p63 = scmp.eq.s32.totalorder %s16, 0
    %p64 = por %p62, %p63
    %s66 = sadd.s32 %s65, 1
    %p69 = scmp.eq.s32.totalorder %s10, 1
    %p70 = scmp.ne.s32.totalorder %s65, %s67
    %p71 = scmp.eq.s32.totalorder %s10, 0
    %p72 = por %p70, %p71
    %p73 = scmp.ne.s32.totalorder %s65, %s67
    %p74 = scmp.eq.s32.totalorder %s15, 1
    %p75 = por %p73, %p74
    %p76 = scmp.ne.s32.totalorder %s67, %s68
    %p77 = scmp.eq.s32.totalorder %s15, 0
    %p78 = por %p76, %p77
    %p79 = scmp.ne.s32.totalorder %s67, %s68
    %p80 = scmp.eq.s32.totalorder %s16, 1
    %p81 = por %p79, %p80
    %p83 = scmp.ne.s32.totalorder %s68, %s82
    %p84 = scmp.eq.s32.totalorder %s16, 0
    %p85 = por %p83, %p84
    %s87 = sadd.s32 %s86, 1
    %p90 = scmp.eq.s32.totalorder %s10, 1
    %p91 = scmp.ne.s32.totalorder %s86, %s88
    %p92 = scmp.eq.s32.totalorder %s10, 0
    %p93 = por %p91, %p92
    %p94 = scmp.ne.s32.totalorder %s86, %s88
    %p95 = scmp.eq.s32.totalorder %s15, 1
    %p96 = por %p94, %p95
    %p97 = scmp.ne.s32.totalorder %s88, %s89
    %p98 = scmp.eq.s32.totalorder %s15, 0
    %p99 = por %p97, %p98
    %p100 = scmp.ne.s32.totalorder %s88, %s89
    %p101 = scmp.eq.s32.totalorder %s16, 1
    %p102 = por %p100, %p101
    %p104 = scmp.ne.s32.totalorder %s89, %s103
    %p105 = scmp.eq.s32.totalorder %s16, 0
    %p106 = por %p104, %p105
    %s107 = ssub.s32 %s10, %s17
    %p108 = scmp.eq.s32.totalorder %s107, 0
    %s110 = sadd.s32 %s109, 1
    %s111 = scalar_select %p108, %s109, %s110
    %p114 = pneg %p108
    %p115 = scmp.eq.s32.totalorder %s10, 1
    %p116 = por %p114, %p115
    %p117 = scmp.ne.s32.totalorder %s109, %s112
    %p118 = scmp.eq.s32.totalorder %s10, 0
    %p119 = por %p117, %p118
    %p120 = scmp.ne.s32.totalorder %s109, %s112
    %p121 = scmp.eq.s32.totalorder %s15, 1
    %p122 = por %p120, %p121
    %p123 = scmp.ne.s32.totalorder %s112, %s113
    %p124 = scmp.eq.s32.totalorder %s15, 0
    %p125 = por %p123, %p124
    %p126 = scmp.ne.s32.totalorder %s112, %s113
    %p127 = scmp.eq.s32.totalorder %s16, 1
    %p128 = por %p126, %p127
    %p130 = scmp.ne.s32.totalorder %s113, %s129
    %p131 = scmp.eq.s32.totalorder %s16, 0
    %p132 = por %p130, %p131
    %p133 = scmp.le.s32.totalorder 1, %s10
    %p134 = scmp.lt.s32.totalorder %s10, 3
    %p135 = pnand %p133, %p134
    %p136 = pneg %p135
    // Predicated region
    $region9: #{_lambda_.6} parent=5 // pred_check
      _
    $region10: #{_lambda_.6} parent=5 // pred_check_branch
      %138 = sbr.rel (%p135) target = $region12
    $region11: #{_lambda_.6} parent=5 // pred_region
      %s139 = ssub.s32 %s10, 1
      // Predicated region
      $region13: #{_lambda_.6} parent=11 // pred_check
        %p140 = pneg %p57
      $region14: #{_lambda_.6} parent=11 // pred_check_branch
        %142 = sbr.rel (%p140) target = $region16
      $region15: #{_lambda_.6} parent=11 // pred_region
        _
      $region16: #{_lambda_.6} parent=11 // pred_fallthru
        _
      // Predicated region
      $region17: #{_lambda_.6} parent=11 // pred_check
        %p143 = pneg %p78
      $region18: #{_lambda_.6} parent=11 // pred_check_branch
        %145 = sbr.rel (%p143) target = $region20
      $region19: #{_lambda_.6} parent=11 // pred_region
        _
      $region20: #{_lambda_.6} parent=11 // pred_fallthru
        _
      // Predicated region
      $region21: #{_lambda_.6} parent=11 // pred_check
        %p146 = pneg %p99
      $region22: #{_lambda_.6} parent=11 // pred_check_branch
        %148 = sbr.rel (%p146) target = $region24
      $region23: #{_lambda_.6} parent=11 // pred_region
        _
      $region24: #{_lambda_.6} parent=11 // pred_fallthru
        _
    $region12: #{_lambda_.6} parent=5 // pred_fallthru
      _
    %p149 = scmp.lt.s32.totalorder %s10, 2
    // Predicated region
    $region25: #{_lambda_.6} parent=5 // pred_check
      %p150 = pneg %p149
    $region26: #{_lambda_.6} parent=5 // pred_check_branch
      %152 = sbr.rel (%p150) target = $region28
    $region27: #{_lambda_.6} parent=5 // pred_region
      // Predicated region
      $region29: #{_lambda_.6} parent=27 // pred_check
        %p153 = pneg %p30
      $region30: #{_lambda_.6} parent=27 // pred_check_branch
        %155 = sbr.rel (%p153) target = $region32
      $region31: #{_lambda_.6} parent=27 // pred_region
        %s156 = smul.u32 32, %s10
        %p157 = scmp.lt.s32.totalorder %s156, 63
        %s158 = scalar_select %p157, %s156, 63
        %s159 = smul.addr %s158, 8
        %s160 = scalar_lea.vmem %s0, %s159
        %s161 = smul.u32 32, %s10
      $region32: #{_lambda_.6} parent=27 // pred_fallthru
        _
    $region28: #{_lambda_.6} parent=5 // pred_fallthru
      _
    %p162 = scmp.le.s32.totalorder 1, %s10
    %p163 = scmp.lt.s32.totalorder %s10, 3
    %p164 = pnand %p162, %p163
    %p165 = pneg %p164
    // Predicated region
    $region33: #{_lambda_.6} parent=5 // pred_check
      _
    $region34: #{_lambda_.6} parent=5 // pred_check_branch
      %167 = sbr.rel (%p164) target = $region36
    $region35: #{_lambda_.6} parent=5 // pred_region
      %s168 = ssub.s32 %s10, 1
      %s169 = smul.u32 32, %s15
      %p170 = scmp.lt.s32.totalorder %s169, 63
      %s171 = scalar_select %p170, %s169, 63
      %s172 = smul.addr %s171, 8
      %s173 = scalar_lea.vmem %s0, %s172
      %p174 = pneg %p36
      %p175 = pneg %p33
      %p176 = pneg %p57
      %p177 = pneg %p54
      %p178 = pneg %p78
      %p179 = pneg %p75
      %p180 = pneg %p99
      %p181 = pneg %p96
      %p182 = pneg %p125
      %p183 = pneg %p122
      %s184 = smul.u32 32, %s15
      %p185 = scmp.lt.s32.totalorder %s184, 63
      %s186 = scalar_select %p185, %s184, 63
      %s187 = smul.addr %s186, 8
      %s188 = scalar_lea.vmem %s4, %s187
      %s189 = smul.u32 32, %s15
      %p190 = scmp.lt.s32.totalorder %s189, 63
      %s191 = scalar_select %p190, %s189, 63
      %s192 = smul.addr %s191, 8
      %s193 = scalar_lea.vmem %s0, %s192
      %s194 = smul.u32 32, %s15
      %s195 = smul.u32 32, %s15
      %p196 = scmp.lt.s32.totalorder %s195, 63
      %s197 = scalar_select %p196, %s195, 63
      %s198 = smul.addr %s197, 8
      %s199 = scalar_lea.vmem %s4, %s198
      %s200 = smul.u32 32, %s15
      %v202 = vld [vmem:[%s193] sm:$0xff]
      %v203 = vld [vmem:[%s193 + $0x8] sm:$0xff]
      %v204 = vld [vmem:[%s193 + $0x10] sm:$0xff]
      %v205 = vld [vmem:[%s193 + $0x18] sm:$0xff]
      %v206 = vld [vmem:[%s193 + $0x20] sm:$0xff]
      %v207 = vld [vmem:[%s193 + $0x28] sm:$0xff]
      %v208 = vld [vmem:[%s193 + $0x30] sm:$0xff]
      %v209 = vld [vmem:[%s193 + $0x38] sm:$0xff]
      %v210 = vld [vmem:[%s193 + $0x40] sm:$0xff]
      %v211 = vld [vmem:[%s193 + $0x48] sm:$0xff]
      %v212 = vld [vmem:[%s193 + $0x50] sm:$0xff]
      %v213 = vld [vmem:[%s193 + $0x58] sm:$0xff]
      %v214 = vld [vmem:[%s193 + $0x60] sm:$0xff]
      %v215 = vld [vmem:[%s193 + $0x68] sm:$0xff]
      %v216 = vld [vmem:[%s193 + $0x70] sm:$0xff]
      %v217 = vld [vmem:[%s193 + $0x78] sm:$0xff]
      %v218 = vld [vmem:[%s193 + $0x80] sm:$0xff]
      %v219 = vld [vmem:[%s193 + $0x88] sm:$0xff]
      %v220 = vld [vmem:[%s193 + $0x90] sm:$0xff]
      %v221 = vld [vmem:[%s193 + $0x98] sm:$0xff]
      %v222 = vld [vmem:[%s193 + $0xa0] sm:$0xff]
      %v223 = vld [vmem:[%s193 + $0xa8] sm:$0xff]
      %v224 = vld [vmem:[%s193 + $0xb0] sm:$0xff]
      %v225 = vld [vmem:[%s193 + $0xb8] sm:$0xff]
      %v226 = vld [vmem:[%s193 + $0xc0] sm:$0xff]
      %v227 = vld [vmem:[%s193 + $0xc8] sm:$0xff]
      %v228 = vld [vmem:[%s193 + $0xd0] sm:$0xff]
      %v229 = vld [vmem:[%s193 + $0xd8] sm:$0xff]
      %v230 = vld [vmem:[%s193 + $0xe0] sm:$0xff]
      %v231 = vld [vmem:[%s193 + $0xe8] sm:$0xff]
      %v232 = vld [vmem:[%s193 + $0xf0] sm:$0xff]
      %v233 = vld [vmem:[%s193 + $0xf8] sm:$0xff]
      %v234 = vld [vmem:[%s1] sm:$0x1]
      %v236 = vlaneseq
      %v237 = vshrl.u32 %v236, 7
      %v238 = vsub.s32 0, %v237
      %v239 = vrot.slane %v234, %v238
      %v241 = vmul.f32 %v202, %v239
      %v242 = vmul.f32 %v203, %v239
      %v243 = vmul.f32 %v204, %v239
      %v244 = vmul.f32 %v205, %v239
      %v245 = vmul.f32 %v206, %v239
      %v246 = vmul.f32 %v207, %v239
      %v247 = vmul.f32 %v208, %v239
      %v248 = vmul.f32 %v209, %v239
      %v249 = vmul.f32 %v210, %v239
      %v250 = vmul.f32 %v211, %v239
      %v251 = vmul.f32 %v212, %v239
      %v252 = vmul.f32 %v213, %v239
      %v253 = vmul.f32 %v214, %v239
      %v254 = vmul.f32 %v215, %v239
      %v255 = vmul.f32 %v216, %v239
      %v256 = vmul.f32 %v217, %v239
      %v257 = vmul.f32 %v218, %v239
      %v258 = vmul.f32 %v219, %v239
      %v259 = vmul.f32 %v220, %v239
      %v260 = vmul.f32 %v221, %v239
      %v261 = vmul.f32 %v222, %v239
      %v262 = vmul.f32 %v223, %v239
      %v263 = vmul.f32 %v224, %v239
      %v264 = vmul.f32 %v225, %v239
      %v265 = vmul.f32 %v226, %v239
      %v266 = vmul.f32 %v227, %v239
      %v267 = vmul.f32 %v228, %v239
      %v268 = vmul.f32 %v229, %v239
      %v269 = vmul.f32 %v230, %v239
      %v270 = vmul.f32 %v231, %v239
      %v271 = vmul.f32 %v232, %v239
      %v272 = vmul.f32 %v233, %v239
      %v273 = vld [vmem:[%s2] sm:$0x1]
      %v275 = vlaneseq
      %v276 = vshrl.u32 %v275, 7
      %v277 = vsub.s32 0, %v276
      %v278 = vrot.slane %v273, %v277
      %v280 = vadd.f32 %v241, %v278
      %v281 = vadd.f32 %v242, %v278
      %v282 = vadd.f32 %v243, %v278
      %v283 = vadd.f32 %v244, %v278
      %v284 = vadd.f32 %v245, %v278
      %v285 = vadd.f32 %v246, %v278
      %v286 = vadd.f32 %v247, %v278
      %v287 = vadd.f32 %v248, %v278
      %v288 = vadd.f32 %v249, %v278
      %v289 = vadd.f32 %v250, %v278
      %v290 = vadd.f32 %v251, %v278
      %v291 = vadd.f32 %v252, %v278
      %v292 = vadd.f32 %v253, %v278
      %v293 = vadd.f32 %v254, %v278
      %v294 = vadd.f32 %v255, %v278
      %v295 = vadd.f32 %v256, %v278
      %v296 = vadd.f32 %v257, %v278
      %v297 = vadd.f32 %v258, %v278
      %v298 = vadd.f32 %v259, %v278
      %v299 = vadd.f32 %v260, %v278
      %v300 = vadd.f32 %v261, %v278
      %v301 = vadd.f32 %v262, %v278
      %v302 = vadd.f32 %v263, %v278
      %v303 = vadd.f32 %v264, %v278
      %v304 = vadd.f32 %v265, %v278
      %v305 = vadd.f32 %v266, %v278
      %v306 = vadd.f32 %v267, %v278
      %v307 = vadd.f32 %v268, %v278
      %v308 = vadd.f32 %v269, %v278
      %v309 = vadd.f32 %v270, %v278
      %v310 = vadd.f32 %v271, %v278
      %v311 = vadd.f32 %v272, %v278
      %v312 = vxor.u32 %v280, 2147483648
      %v313 = vxor.u32 %v281, 2147483648
      %v314 = vxor.u32 %v282, 2147483648
      %v315 = vxor.u32 %v283, 2147483648
      %v316 = vxor.u32 %v284, 2147483648
      %v317 = vxor.u32 %v285, 2147483648
      %v318 = vxor.u32 %v286, 2147483648
      %v319 = vxor.u32 %v287, 2147483648
      %v320 = vxor.u32 %v288, 2147483648
      %v321 = vxor.u32 %v289, 2147483648
      %v322 = vxor.u32 %v290, 2147483648
      %v323 = vxor.u32 %v291, 2147483648
      %v324 = vxor.u32 %v292, 2147483648
      %v325 = vxor.u32 %v293, 2147483648
      %v326 = vxor.u32 %v294, 2147483648
      %v327 = vxor.u32 %v295, 2147483648
      %v328 = vxor.u32 %v296, 2147483648
      %v329 = vxor.u32 %v297, 2147483648
      %v330 = vxor.u32 %v298, 2147483648
      %v331 = vxor.u32 %v299, 2147483648
      %v332 = vxor.u32 %v300, 2147483648
      %v333 = vxor.u32 %v301, 2147483648
      %v334 = vxor.u32 %v302, 2147483648
      %v335 = vxor.u32 %v303, 2147483648
      %v336 = vxor.u32 %v304, 2147483648
      %v337 = vxor.u32 %v305, 2147483648
      %v338 = vxor.u32 %v306, 2147483648
      %v339 = vxor.u32 %v307, 2147483648
      %v340 = vxor.u32 %v308, 2147483648
      %v341 = vxor.u32 %v309, 2147483648
      %v342 = vxor.u32 %v310, 2147483648
      %v343 = vxor.u32 %v311, 2147483648
      %v344 = vmul.f32 %v312, 1.442695
      %v345 = vpow.pop %v344
      %v346 = vmul.f32 %v313, 1.442695
      %v347 = vpow.pop %v346
      %v348 = vmul.f32 %v314, 1.442695
      %v349 = vpow.pop %v348
      %v350 = vmul.f32 %v315, 1.442695
      %v351 = vpow.pop %v350
      %v352 = vmul.f32 %v316, 1.442695
      %v353 = vpow.pop %v352
      %v354 = vmul.f32 %v317, 1.442695
      %v355 = vpow.pop %v354
      %v356 = vmul.f32 %v318, 1.442695
      %v357 = vpow.pop %v356
      %v358 = vmul.f32 %v319, 1.442695
      %v359 = vpow.pop %v358
      %v360 = vmul.f32 %v320, 1.442695
      %v361 = vpow.pop %v360
      %v362 = vmul.f32 %v321, 1.442695
      %v363 = vpow.pop %v362
      %v364 = vmul.f32 %v322, 1.442695
      %v365 = vpow.pop %v364
      %v366 = vmul.f32 %v323, 1.442695
      %v367 = vpow.pop %v366
      %v368 = vmul.f32 %v324, 1.442695
      %v369 = vpow.pop %v368
      %v370 = vmul.f32 %v325, 1.442695
      %v371 = vpow.pop %v370
      %v372 = vmul.f32 %v326, 1.442695
      %v373 = vpow.pop %v372
      %v374 = vmul.f32 %v327, 1.442695
      %v375 = vpow.pop %v374
      %v376 = vmul.f32 %v328, 1.442695
      %v377 = vpow.pop %v376
      %v378 = vmul.f32 %v329, 1.442695
      %v379 = vpow.pop %v378
      %v380 = vmul.f32 %v330, 1.442695
      %v381 = vpow.pop %v380
      %v382 = vmul.f32 %v331, 1.442695
      %v383 = vpow.pop %v382
      %v384 = vmul.f32 %v332, 1.442695
      %v385 = vpow.pop %v384
      %v386 = vmul.f32 %v333, 1.442695
      %v387 = vpow.pop %v386
      %v388 = vmul.f32 %v334, 1.442695
      %v389 = vpow.pop %v388
      %v390 = vmul.f32 %v335, 1.442695
      %v391 = vpow.pop %v390
      %v392 = vmul.f32 %v336, 1.442695
      %v393 = vpow.pop %v392
      %v394 = vmul.f32 %v337, 1.442695
      %v395 = vpow.pop %v394
      %v396 = vmul.f32 %v338, 1.442695
      %v397 = vpow.pop %v396
      %v398 = vmul.f32 %v339, 1.442695
      %v399 = vpow.pop %v398
      %v400 = vmul.f32 %v340, 1.442695
      %v401 = vpow.pop %v400
      %v402 = vmul.f32 %v341, 1.442695
      %v403 = vpow.pop %v402
      %v404 = vmul.f32 %v342, 1.442695
      %v405 = vpow.pop %v404
      %v406 = vmul.f32 %v343, 1.442695
      %v407 = vpow.pop %v406
      %v408 = vadd.f32 %v345, 1.0
      %v409 = vadd.f32 %v347, 1.0
      %v410 = vadd.f32 %v349, 1.0
      %v411 = vadd.f32 %v351, 1.0
      %v412 = vadd.f32 %v353, 1.0
      %v413 = vadd.f32 %v355, 1.0
      %v414 = vadd.f32 %v357, 1.0
      %v415 = vadd.f32 %v359, 1.0
      %v416 = vadd.f32 %v361, 1.0
      %v417 = vadd.f32 %v363, 1.0
      %v418 = vadd.f32 %v365, 1.0
      %v419 = vadd.f32 %v367, 1.0
      %v420 = vadd.f32 %v369, 1.0
      %v421 = vadd.f32 %v371, 1.0
      %v422 = vadd.f32 %v373, 1.0
      %v423 = vadd.f32 %v375, 1.0
      %v424 = vadd.f32 %v377, 1.0
      %v425 = vadd.f32 %v379, 1.0
      %v426 = vadd.f32 %v381, 1.0
      %v427 = vadd.f32 %v383, 1.0
      %v428 = vadd.f32 %v385, 1.0
      %v429 = vadd.f32 %v387, 1.0
      %v430 = vadd.f32 %v389, 1.0
      %v431 = vadd.f32 %v391, 1.0
      %v432 = vadd.f32 %v393, 1.0
      %v433 = vadd.f32 %v395, 1.0
      %v434 = vadd.f32 %v397, 1.0
      %v435 = vadd.f32 %v399, 1.0
      %v436 = vadd.f32 %v401, 1.0
      %v437 = vadd.f32 %v403, 1.0
      %v438 = vadd.f32 %v405, 1.0
      %v439 = vadd.f32 %v407, 1.0
      %v440 = vrcp.pop %v408
      %v441 = vmul.f32 1.0, %v440
      %v442 = vrcp.pop %v409
      %v443 = vmul.f32 1.0, %v442
      %v444 = vrcp.pop %v410
      %v445 = vmul.f32 1.0, %v444
      %v446 = vrcp.pop %v411
      %v447 = vmul.f32 1.0, %v446
      %v448 = vrcp.pop %v412
      %v449 = vmul.f32 1.0, %v448
      %v450 = vrcp.pop %v413
      %v451 = vmul.f32 1.0, %v450
      %v452 = vrcp.pop %v414
      %v453 = vmul.f32 1.0, %v452
      %v454 = vrcp.pop %v415
      %v455 = vmul.f32 1.0, %v454
      %v456 = vrcp.pop %v416
      %v457 = vmul.f32 1.0, %v456
      %v458 = vrcp.pop %v417
      %v459 = vmul.f32 1.0, %v458
      %v460 = vrcp.pop %v418
      %v461 = vmul.f32 1.0, %v460
      %v462 = vrcp.pop %v419
      %v463 = vmul.f32 1.0, %v462
      %v464 = vrcp.pop %v420
      %v465 = vmul.f32 1.0, %v464
      %v466 = vrcp.pop %v421
      %v467 = vmul.f32 1.0, %v466
      %v468 = vrcp.pop %v422
      %v469 = vmul.f32 1.0, %v468
      %v470 = vrcp.pop %v423
      %v471 = vmul.f32 1.0, %v470
      %v472 = vrcp.pop %v424
      %v473 = vmul.f32 1.0, %v472
      %v474 = vrcp.pop %v425
      %v475 = vmul.f32 1.0, %v474
      %v476 = vrcp.pop %v426
      %v477 = vmul.f32 1.0, %v476
      %v478 = vrcp.pop %v427
      %v479 = vmul.f32 1.0, %v478
      %v480 = vrcp.pop %v428
      %v481 = vmul.f32 1.0, %v480
      %v482 = vrcp.pop %v429
      %v483 = vmul.f32 1.0, %v482
      %v484 = vrcp.pop %v430
      %v485 = vmul.f32 1.0, %v484
      %v486 = vrcp.pop %v431
      %v487 = vmul.f32 1.0, %v486
      %v488 = vrcp.pop %v432
      %v489 = vmul.f32 1.0, %v488
      %v490 = vrcp.pop %v433
      %v491 = vmul.f32 1.0, %v490
      %v492 = vrcp.pop %v434
      %v493 = vmul.f32 1.0, %v492
      %v494 = vrcp.pop %v435
      %v495 = vmul.f32 1.0, %v494
      %v496 = vrcp.pop %v436
      %v497 = vmul.f32 1.0, %v496
      %v498 = vrcp.pop %v437
      %v499 = vmul.f32 1.0, %v498
      %v500 = vrcp.pop %v438
      %v501 = vmul.f32 1.0, %v500
      %v502 = vrcp.pop %v439
      %v503 = vmul.f32 1.0, %v502
      %v504 = vmul.f32 %v280, %v441
      %v505 = vmul.f32 %v281, %v443
      %v506 = vmul.f32 %v282, %v445
      %v507 = vmul.f32 %v283, %v447
      %v508 = vmul.f32 %v284, %v449
      %v509 = vmul.f32 %v285, %v451
      %v510 = vmul.f32 %v286, %v453
      %v511 = vmul.f32 %v287, %v455
      %v512 = vmul.f32 %v288, %v457
      %v513 = vmul.f32 %v289, %v459
      %v514 = vmul.f32 %v290, %v461
      %v515 = vmul.f32 %v291, %v463
      %v516 = vmul.f32 %v292, %v465
      %v517 = vmul.f32 %v293, %v467
      %v518 = vmul.f32 %v294, %v469
      %v519 = vmul.f32 %v295, %v471
      %v520 = vmul.f32 %v296, %v473
      %v521 = vmul.f32 %v297, %v475
      %v522 = vmul.f32 %v298, %v477
      %v523 = vmul.f32 %v299, %v479
      %v524 = vmul.f32 %v300, %v481
      %v525 = vmul.f32 %v301, %v483
      %v526 = vmul.f32 %v302, %v485
      %v527 = vmul.f32 %v303, %v487
      %v528 = vmul.f32 %v304, %v489
      %v529 = vmul.f32 %v305, %v491
      %v530 = vmul.f32 %v306, %v493
      %v531 = vmul.f32 %v307, %v495
      %v532 = vmul.f32 %v308, %v497
      %v533 = vmul.f32 %v309, %v499
      %v534 = vmul.f32 %v310, %v501
      %v535 = vmul.f32 %v311, %v503
      %v536 = vpack.c.bf16 %v505, %v504
      %v537 = vpack.c.bf16 %v507, %v506
      %v538 = vpack.c.bf16 %v509, %v508
      %v539 = vpack.c.bf16 %v511, %v510
      %v540 = vpack.c.bf16 %v513, %v512
      %v541 = vpack.c.bf16 %v515, %v514
      %v542 = vpack.c.bf16 %v517, %v516
      %v543 = vpack.c.bf16 %v519, %v518
      %v544 = vpack.c.bf16 %v521, %v520
      %v545 = vpack.c.bf16 %v523, %v522
      %v546 = vpack.c.bf16 %v525, %v524
      %v547 = vpack.c.bf16 %v527, %v526
      %v548 = vpack.c.bf16 %v529, %v528
      %v549 = vpack.c.bf16 %v531, %v530
      %v550 = vpack.c.bf16 %v533, %v532
      %v551 = vpack.c.bf16 %v535, %v534
      %v552 = vld [vmem:[%s3] sm:$0xf]
      %v553 = vld [vmem:[%s3 + $0x4] sm:$0xf]
      %v556 = vunpack.c.l.b16 %v552
      %v557 = vunpack.c.l.b16 %v553
      %v558 = vpack.c.b16 %v557, %v556
      %vm560 = vcmask 130048
      %v562 = vsel %vm560, %v536, 0
      %v565 = vsel %vm560, %v537, 0
      %v568 = vsel %vm560, %v538, 0
      %v571 = vsel %vm560, %v539, 0
      %v574 = vsel %vm560, %v540, 0
      %v577 = vsel %vm560, %v541, 0
      %v580 = vsel %vm560, %v542, 0
      %v583 = vsel %vm560, %v543, 0
      %v586 = vsel %vm560, %v544, 0
      %v589 = vsel %vm560, %v545, 0
      %v592 = vsel %vm560, %v546, 0
      %v595 = vsel %vm560, %v547, 0
      %v598 = vsel %vm560, %v548, 0
      %v601 = vsel %vm560, %v549, 0
      %v604 = vsel %vm560, %v550, 0
      %v607 = vsel %vm560, %v551, 0
      %609 = vmatprep.subr.bf16.mxu0 0
      %610 = vmatpush1.bf16.msra.mxu0 %v558
      %611 = vmatprep.subr.bf16.mxu0 0
      %612 = vmatpush1.bf16.msra.mxu0 0
      %613 = vmatprep.subr.bf16.mxu0 0
      %614 = vmatpush1.bf16.msra.mxu0 0
      %615 = vmatprep.subr.bf16.mxu0 0
      %616 = vmatpush1.bf16.msra.mxu0 0
      %617 = vmatprep.subr.bf16.mxu0 0
      %618 = vmatpush1.bf16.msra.mxu0 0
      %619 = vmatprep.subr.bf16.mxu0 0
      %620 = vmatpush1.bf16.msra.mxu0 0
      %621 = vmatprep.subr.bf16.mxu0 0
      %622 = vmatpush1.bf16.msra.mxu0 0
      %623 = vmatprep.subr.bf16.mxu0 0
      %624 = vmatpush1.bf16.msra.mxu0 0
      %625 = vmatprep.subr.bf16.mxu0 0
      %626 = vmatpush1.bf16.msra.mxu0 0
      %627 = vmatprep.subr.bf16.mxu0 0
      %628 = vmatpush1.bf16.msra.mxu0 0
      %629 = vmatprep.subr.bf16.mxu0 0
      %630 = vmatpush1.bf16.msra.mxu0 0
      %631 = vmatprep.subr.bf16.mxu0 0
      %632 = vmatpush1.bf16.msra.mxu0 0
      %633 = vmatprep.subr.bf16.mxu0 0
      %634 = vmatpush1.bf16.msra.mxu0 0
      %635 = vmatprep.subr.bf16.mxu0 0
      %636 = vmatpush1.bf16.msra.mxu0 0
      %637 = vmatprep.subr.bf16.mxu0 0
      %638 = vmatpush1.bf16.msra.mxu0 0
      %639 = vmatprep.subr.bf16.mxu0 0
      %640 = vmatpush1.bf16.msra.mxu0 0
      %641 = vmatprep.mubr.bf16.mxu0 0
      %642 = vmatmul.mubr.bf16.gmra.mrb[0].mxu0 %v562
      %v643 = vpop.f32.mrb[0].mxu0
      %v644 = vadd.f32 0.0, %v643
      %v645 = vpop.f32.mrb[0].mxu0
      %v646 = vpop.f32.mrb[0].mxu0
      %v647 = vadd.f32 0.0, %v646
      %v648 = vpop.f32.mrb[0].mxu0
      %649 = vmatprep.mubr.bf16.mxu0 0
      %650 = vmatmul.mubr.bf16.gmra.mrb[0].mxu0 %v565
      %v651 = vpop.f32.mrb[0].mxu0
      %v652 = vadd.f32 0.0, %v651
      %v653 = vpop.f32.mrb[0].mxu0
      %v654 = vpop.f32.mrb[0].mxu0
      %v655 = vadd.f32 0.0, %v654
      %v656 = vpop.f32.mrb[0].mxu0
      %657 = vmatprep.mubr.bf16.mxu0 0
      %658 = vmatmul.mubr.bf16.gmra.mrb[0].mxu0 %v568
      %v659 = vpop.f32.mrb[0].mxu0
      %v660 = vadd.f32 0.0, %v659
      %v661 = vpop.f32.mrb[0].mxu0
      %v662 = vpop.f32.mrb[0].mxu0
      %v663 = vadd.f32 0.0, %v662
      %v664 = vpop.f32.mrb[0].mxu0
      %665 = vmatprep.mubr.bf16.mxu0 0
      %666 = vmatmul.mubr.bf16.gmra.mrb[0].mxu0 %v571
      %v667 = vpop.f32.mrb[0].mxu0
      %v668 = vadd.f32 0.0, %v667
      %v669 = vpop.f32.mrb[0].mxu0
      %v670 = vpop.f32.mrb[0].mxu0
      %v671 = vadd.f32 0.0, %v670
      %v672 = vpop.f32.mrb[0].mxu0
      %673 = vmatprep.mubr.bf16.mxu0 0
      %674 = vmatmul.mubr.bf16.gmra.mrb[0].mxu0 %v574
      %v675 = vpop.f32.mrb[0].mxu0
      %v676 = vadd.f32 0.0, %v675
      %v677 = vpop.f32.mrb[0].mxu0
      %v678 = vpop.f32.mrb[0].mxu0
      %v679 = vadd.f32 0.0, %v678
      %v680 = vpop.f32.mrb[0].mxu0
      %681 = vmatprep.mubr.bf16.mxu0 0
      %682 = vmatmul.mubr.bf16.gmra.mrb[0].mxu0 %v577
      %v683 = vpop.f32.mrb[0].mxu0
      %v684 = vadd.f32 0.0, %v683
      %v685 = vpop.f32.mrb[0].mxu0
      %v686 = vpop.f32.mrb[0].mxu0
      %v687 = vadd.f32 0.0, %v686
      %v688 = vpop.f32.mrb[0].mxu0
      %689 = vmatprep.mubr.bf16.mxu0 0
      %690 = vmatmul.mubr.bf16.gmra.mrb[0].mxu0 %v580
      %v691 = vpop.f32.mrb[0].mxu0
      %v692 = vadd.f32 0.0, %v691
      %v693 = vpop.f32.mrb[0].mxu0
      %v694 = vpop.f32.mrb[0].mxu0
      %v695 = vadd.f32 0.0, %v694
      %v696 = vpop.f32.mrb[0].mxu0
      %697 = vmatprep.mubr.bf16.mxu0 0
      %698 = vmatmul.mubr.bf16.gmra.mrb[0].mxu0 %v583
      %v699 = vpop.f32.mrb[0].mxu0
      %v700 = vadd.f32 0.0, %v699
      %v701 = vpop.f32.mrb[0].mxu0
      %v702 = vpop.f32.mrb[0].mxu0
      %v703 = vadd.f32 0.0, %v702
      %v704 = vpop.f32.mrb[0].mxu0
      %705 = vmatprep.mubr.bf16.mxu0 0
      %706 = vmatmul.mubr.bf16.gmra.mrb[0].mxu0 %v586
      %v707 = vpop.f32.mrb[0].mxu0
      %v708 = vadd.f32 0.0, %v707
      %v709 = vpop.f32.mrb[0].mxu0
      %v710 = vpop.f32.mrb[0].mxu0
      %v711 = vadd.f32 0.0, %v710
      %v712 = vpop.f32.mrb[0].mxu0
      %713 = vmatprep.mubr.bf16.mxu0 0
      %714 = vmatmul.mubr.bf16.gmra.mrb[0].mxu0 %v589
      %v715 = vpop.f32.mrb[0].mxu0
      %v716 = vadd.f32 0.0, %v715
      %v717 = vpop.f32.mrb[0].mxu0
      %v718 = vpop.f32.mrb[0].mxu0
      %v719 = vadd.f32 0.0, %v718
      %v720 = vpop.f32.mrb[0].mxu0
      %721 = vmatprep.mubr.bf16.mxu0 0
      %722 = vmatmul.mubr.bf16.gmra.mrb[0].mxu0 %v592
      %v723 = vpop.f32.mrb[0].mxu0
      %v724 = vadd.f32 0.0, %v723
      %v725 = vpop.f32.mrb[0].mxu0
      %v726 = vpop.f32.mrb[0].mxu0
      %v727 = vadd.f32 0.0, %v726
      %v728 = vpop.f32.mrb[0].mxu0
      %729 = vmatprep.mubr.bf16.mxu0 0
      %730 = vmatmul.mubr.bf16.gmra.mrb[0].mxu0 %v595
      %v731 = vpop.f32.mrb[0].mxu0
      %v732 = vadd.f32 0.0, %v731
      %v733 = vpop.f32.mrb[0].mxu0
      %v734 = vpop.f32.mrb[0].mxu0
      %v735 = vadd.f32 0.0, %v734
      %v736 = vpop.f32.mrb[0].mxu0
      %737 = vmatprep.mubr.bf16.mxu0 0
      %738 = vmatmul.mubr.bf16.gmra.mrb[0].mxu0 %v598
      %v739 = vpop.f32.mrb[0].mxu0
      %v740 = vadd.f32 0.0, %v739
      %v741 = vpop.f32.mrb[0].mxu0
      %v742 = vpop.f32.mrb[0].mxu0
      %v743 = vadd.f32 0.0, %v742
      %v744 = vpop.f32.mrb[0].mxu0
      %745 = vmatprep.mubr.bf16.mxu0 0
      %746 = vmatmul.mubr.bf16.gmra.mrb[0].mxu0 %v601
      %v747 = vpop.f32.mrb[0].mxu0
      %v748 = vadd.f32 0.0, %v747
      %v749 = vpop.f32.mrb[0].mxu0
      %v750 = vpop.f32.mrb[0].mxu0
      %v751 = vadd.f32 0.0, %v750
      %v752 = vpop.f32.mrb[0].mxu0
      %753 = vmatprep.mubr.bf16.mxu0 0
      %754 = vmatmul.mubr.bf16.gmra.mrb[0].mxu0 %v604
      %v755 = vpop.f32.mrb[0].mxu0
      %v756 = vadd.f32 0.0, %v755
      %v757 = vpop.f32.mrb[0].mxu0
      %v758 = vpop.f32.mrb[0].mxu0
      %v759 = vadd.f32 0.0, %v758
      %v760 = vpop.f32.mrb[0].mxu0
      %761 = vmatprep.mubr.bf16.mxu0 0
      %762 = vmatmul.mubr.bf16.gmra.mrb[0].mxu0 %v607
      %v763 = vpop.f32.mrb[0].mxu0
      %v764 = vadd.f32 0.0, %v763
      %v765 = vpop.f32.mrb[0].mxu0
      %v766 = vpop.f32.mrb[0].mxu0
      %v767 = vadd.f32 0.0, %v766
      %v768 = vpop.f32.mrb[0].mxu0
      %769 = vdwg.mxu0
      %770 = vst [vmem:[%s199] sm:$0xff] %v644
      %771 = vst [vmem:[%s199 + $0x8] sm:$0xff] %v647
      %772 = vst [vmem:[%s199 + $0x10] sm:$0xff] %v652
      %773 = vst [vmem:[%s199 + $0x18] sm:$0xff] %v655
      %774 = vst [vmem:[%s199 + $0x20] sm:$0xff] %v660
      %775 = vst [vmem:[%s199 + $0x28] sm:$0xff] %v663
      %776 = vst [vmem:[%s199 + $0x30] sm:$0xff] %v668
      %777 = vst [vmem:[%s199 + $0x38] sm:$0xff] %v671
      %778 = vst [vmem:[%s199 + $0x40] sm:$0xff] %v676
      %779 = vst [vmem:[%s199 + $0x48] sm:$0xff] %v679
      %780 = vst [vmem:[%s199 + $0x50] sm:$0xff] %v684
      %781 = vst [vmem:[%s199 + $0x58] sm:$0xff] %v687
      %782 = vst [vmem:[%s199 + $0x60] sm:$0xff] %v692
      %783 = vst [vmem:[%s199 + $0x68] sm:$0xff] %v695
      %784 = vst [vmem:[%s199 + $0x70] sm:$0xff] %v700
      %785 = vst [vmem:[%s199 + $0x78] sm:$0xff] %v703
      %786 = vst [vmem:[%s199 + $0x80] sm:$0xff] %v708
      %787 = vst [vmem:[%s199 + $0x88] sm:$0xff] %v711
      %788 = vst [vmem:[%s199 + $0x90] sm:$0xff] %v716
      %789 = vst [vmem:[%s199 + $0x98] sm:$0xff] %v719
      %790 = vst [vmem:[%s199 + $0xa0] sm:$0xff] %v724
      %791 = vst [vmem:[%s199 + $0xa8] sm:$0xff] %v727
      %792 = vst [vmem:[%s199 + $0xb0] sm:$0xff] %v732
      %793 = vst [vmem:[%s199 + $0xb8] sm:$0xff] %v735
      %794 = vst [vmem:[%s199 + $0xc0] sm:$0xff] %v740
      %795 = vst [vmem:[%s199 + $0xc8] sm:$0xff] %v743
      %796 = vst [vmem:[%s199 + $0xd0] sm:$0xff] %v748
      %797 = vst [vmem:[%s199 + $0xd8] sm:$0xff] %v751
      %798 = vst [vmem:[%s199 + $0xe0] sm:$0xff] %v756
      %799 = vst [vmem:[%s199 + $0xe8] sm:$0xff] %v759
      %800 = vst [vmem:[%s199 + $0xf0] sm:$0xff] %v764
      %801 = vst [vmem:[%s199 + $0xf8] sm:$0xff] %v767
      %s802 = smul.u32 32, %s15
      %p803 = scmp.lt.s32.totalorder %s802, 63
      %s804 = scalar_select %p803, %s802, 63
      %s805 = smul.addr %s804, 8
      %s806 = scalar_lea.vmem %s4, %s805
      // Predicated region
      $region37: #{_lambda_.6} parent=35 // pred_check
        %p807 = pneg %p122
      $region38: #{_lambda_.6} parent=35 // pred_check_branch
        %809 = sbr.rel (%p807) target = $region40
      $region39: #{_lambda_.6} parent=35 // pred_region
        %s810 = smul.u32 32, %s15
      $region40: #{_lambda_.6} parent=35 // pred_fallthru
        _
    $region36: #{_lambda_.6} parent=5 // pred_fallthru
      _
    %p811 = scmp.le.s32.totalorder 2, %s10
    // Predicated region
    $region41: #{_lambda_.6} parent=5 // pred_check
      %p812 = pneg %p811
    $region42: #{_lambda_.6} parent=5 // pred_check_branch
      %814 = sbr.rel (%p812) target = $region44
    $region43: #{_lambda_.6} parent=5 // pred_region
      %s815 = ssub.s32 %s10, 2
      // Predicated region
      $region45: #{_lambda_.6} parent=43 // pred_check
        %p816 = pneg %p128
      $region46: #{_lambda_.6} parent=43 // pred_check_branch
        %818 = sbr.rel (%p816) target = $region48
      $region47: #{_lambda_.6} parent=43 // pred_region
        %s819 = smul.u32 32, %s16
        %p820 = scmp.lt.s32.totalorder %s819, 63
        %s821 = scalar_select %p820, %s819, 63
        %s822 = smul.addr %s821, 8
        %s823 = scalar_lea.vmem %s4, %s822
      $region48: #{_lambda_.6} parent=43 // pred_fallthru
        _
    $region44: #{_lambda_.6} parent=5 // pred_fallthru
      _
  $region6: #{_lambda_.6} parent=0 // loop_footer
    %s14 = sadd.s32 1, %s10
  $region7: #{_lambda_.6} parent=0 // loop_footer_branch
    %9 = sbr.rel target = $region3
  $region8: #{_lambda_.6} parent=0 // loop_exit
    _

// kernel: _lambda_.5
$region0: #{_lambda_.5}
  #allocation0 [shape = 'u32[]', space=smem, size = 0x4, offset = 0x4, fixed_abs, tag = 'smem constant byte address 0x4 - core index']
  #allocation1 [shape = 'u32[144,128]{1,0:T(1,128)}', space=vmem, size = 0x12000, scoped, tag = 'internal scratch']
  #allocation2 [shape = 'f32[18,25,128]{2,1,0:T(8,128)}', space=vmem, size = 0x48000, scoped, tag = 'scratch operand']
  %s0 = inlined_call_operand.vmem [shape: f32[512,128], index: 0, kind: input, shape index: {}]
  %s1 = inlined_call_operand.vmem [shape: f32[1,128], index: 1, kind: input, shape index: {}]
  %s2 = inlined_call_operand.vmem [shape: f32[1,128], index: 2, kind: input, shape index: {}]
  %s3 = inlined_call_operand.vmem [shape: bf16[9,128,128], index: 3, kind: input, shape index: {}]
  %s4 = inlined_call_operand.vmem [shape: f32[1,128], index: 4, kind: input, shape index: {}]
  %s5 = inlined_call_operand.vmem [shape: f32[512,128], index: 5, kind: output, shape index: {}]
  %s6 = sld [smem:[#allocation0]]
  $region53: #{_lambda_.5} parent=0
    _
  %s8 = ssub.s32 1, %s6
  %s9 = scalar_select 0, %s8, %s6
  loop: start=0, step=1, limit=4
  $region2: #{_lambda_.5} parent=0 // loop_pre_header
    _
  $region3: #{_lambda_.5} parent=0 // loop_header
    %s11 = sphi 0, %s15
    %p12 = scmp.ge.s32.totalorder %s11, 4
    %s21 = sphi 0, %s23
    %s24 = sphi 0, %s21
    %s25 = sphi 0, %s24
    %s41 = sphi 0, %s25
    %s45 = sphi 0, %s45
    %s47 = sphi 0, %s45
    %s48 = sphi 0, %s47
    %s62 = sphi 0, %s48
    %s66 = sphi 0, %s66
    %s68 = sphi 0, %s66
    %s69 = sphi 0, %s68
    %s83 = sphi 0, %s69
    %s87 = sphi 0, %s87
    %s89 = sphi 0, %s87
    %s90 = sphi 0, %s89
    %s104 = sphi 0, %s90
    %s108 = sphi 0, %s108
    %s110 = sphi 0, %s108
    %s111 = sphi 0, %s110
    %s125 = sphi 0, %s111
    %s131 = sphi 0, %s133
    %s134 = sphi 0, %s131
    %s135 = sphi 0, %s134
    %s151 = sphi 0, %s135
  $region4: #{_lambda_.5} parent=0 // loop_header_branch
    %14 = sbr.rel (%p12) target = $region8
  $region5: #{_lambda_.5} parent=0 // loop_body
    %s16 = ssub.s32 %s11, 1
    %s17 = ssub.s32 %s11, 2
    %s18 = sadd.s32 %s11, 1
    %s19 = ssub.s32 %s11, %s18
    %p20 = scmp.eq.s32.totalorder %s19, 0
    %s22 = sadd.s32 %s21, 1
    %s23 = scalar_select %p20, %s21, %s22
    %p26 = pneg %p20
    %p27 = scmp.eq.s32.totalorder %s11, 1
    %p28 = por %p26, %p27
    %p29 = scmp.ne.s32.totalorder %s21, %s24
    %p30 = scmp.eq.s32.totalorder %s11, 0
    %p31 = por %p29, %p30
    %p32 = scmp.ne.s32.totalorder %s21, %s24
    %p33 = scmp.eq.s32.totalorder %s16, 1
    %p34 = por %p32, %p33
    %p35 = scmp.ne.s32.totalorder %s24, %s25
    %p36 = scmp.eq.s32.totalorder %s16, 0
    %p37 = por %p35, %p36
    %p38 = scmp.ne.s32.totalorder %s24, %s25
    %p39 = scmp.eq.s32.totalorder %s17, 1
    %p40 = por %p38, %p39
    %p42 = scmp.ne.s32.totalorder %s25, %s41
    %p43 = scmp.eq.s32.totalorder %s17, 0
    %p44 = por %p42, %p43
    %s46 = sadd.s32 %s45, 1
    %p49 = scmp.eq.s32.totalorder %s11, 1
    %p50 = scmp.ne.s32.totalorder %s45, %s47
    %p51 = scmp.eq.s32.totalorder %s11, 0
    %p52 = por %p50, %p51
    %p53 = scmp.ne.s32.totalorder %s45, %s47
    %p54 = scmp.eq.s32.totalorder %s16, 1
    %p55 = por %p53, %p54
    %p56 = scmp.ne.s32.totalorder %s47, %s48
    %p57 = scmp.eq.s32.totalorder %s16, 0
    %p58 = por %p56, %p57
    %p59 = scmp.ne.s32.totalorder %s47, %s48
    %p60 = scmp.eq.s32.totalorder %s17, 1
    %p61 = por %p59, %p60
    %p63 = scmp.ne.s32.totalorder %s48, %s62
    %p64 = scmp.eq.s32.totalorder %s17, 0
    %p65 = por %p63, %p64
    %s67 = sadd.s32 %s66, 1
    %p70 = scmp.eq.s32.totalorder %s11, 1
    %p71 = scmp.ne.s32.totalorder %s66, %s68
    %p72 = scmp.eq.s32.totalorder %s11, 0
    %p73 = por %p71, %p72
    %p74 = scmp.ne.s32.totalorder %s66, %s68
    %p75 = scmp.eq.s32.totalorder %s16, 1
    %p76 = por %p74, %p75
    %p77 = scmp.ne.s32.totalorder %s68, %s69
    %p78 = scmp.eq.s32.totalorder %s16, 0
    %p79 = por %p77, %p78
    %p80 = scmp.ne.s32.totalorder %s68, %s69
    %p81 = scmp.eq.s32.totalorder %s17, 1
    %p82 = por %p80, %p81
    %p84 = scmp.ne.s32.totalorder %s69, %s83
    %p85 = scmp.eq.s32.totalorder %s17, 0
    %p86 = por %p84, %p85
    %s88 = sadd.s32 %s87, 1
    %p91 = scmp.eq.s32.totalorder %s11, 1
    %p92 = scmp.ne.s32.totalorder %s87, %s89
    %p93 = scmp.eq.s32.totalorder %s11, 0
    %p94 = por %p92, %p93
    %p95 = scmp.ne.s32.totalorder %s87, %s89
    %p96 = scmp.eq.s32.totalorder %s16, 1
    %p97 = por %p95, %p96
    %p98 = scmp.ne.s32.totalorder %s89, %s90
    %p99 = scmp.eq.s32.totalorder %s16, 0
    %p100 = por %p98, %p99
    %p101 = scmp.ne.s32.totalorder %s89, %s90
    %p102 = scmp.eq.s32.totalorder %s17, 1
    %p103 = por %p101, %p102
    %p105 = scmp.ne.s32.totalorder %s90, %s104
    %p106 = scmp.eq.s32.totalorder %s17, 0
    %p107 = por %p105, %p106
    %s109 = sadd.s32 %s108, 1
    %p112 = scmp.eq.s32.totalorder %s11, 1
    %p113 = scmp.ne.s32.totalorder %s108, %s110
    %p114 = scmp.eq.s32.totalorder %s11, 0
    %p115 = por %p113, %p114
    %p116 = scmp.ne.s32.totalorder %s108, %s110
    %p117 = scmp.eq.s32.totalorder %s16, 1
    %p118 = por %p116, %p117
    %p119 = scmp.ne.s32.totalorder %s110, %s111
    %p120 = scmp.eq.s32.totalorder %s16, 0
    %p121 = por %p119, %p120
    %p122 = scmp.ne.s32.totalorder %s110, %s111
    %p123 = scmp.eq.s32.totalorder %s17, 1
    %p124 = por %p122, %p123
    %p126 = scmp.ne.s32.totalorder %s111, %s125
    %p127 = scmp.eq.s32.totalorder %s17, 0
    %p128 = por %p126, %p127
    %s129 = ssub.s32 %s11, %s18
    %p130 = scmp.eq.s32.totalorder %s129, 0
    %s132 = sadd.s32 %s131, 1
    %s133 = scalar_select %p130, %s131, %s132
    %p136 = pneg %p130
    %p137 = scmp.eq.s32.totalorder %s11, 1
    %p138 = por %p136, %p137
    %p139 = scmp.ne.s32.totalorder %s131, %s134
    %p140 = scmp.eq.s32.totalorder %s11, 0
    %p141 = por %p139, %p140
    %p142 = scmp.ne.s32.totalorder %s131, %s134
    %p143 = scmp.eq.s32.totalorder %s16, 1
    %p144 = por %p142, %p143
    %p145 = scmp.ne.s32.totalorder %s134, %s135
    %p146 = scmp.eq.s32.totalorder %s16, 0
    %p147 = por %p145, %p146
    %p148 = scmp.ne.s32.totalorder %s134, %s135
    %p149 = scmp.eq.s32.totalorder %s17, 1
    %p150 = por %p148, %p149
    %p152 = scmp.ne.s32.totalorder %s135, %s151
    %p153 = scmp.eq.s32.totalorder %s17, 0
    %p154 = por %p152, %p153
    %p155 = scmp.le.s32.totalorder 1, %s11
    %p156 = scmp.lt.s32.totalorder %s11, 3
    %p157 = pnand %p155, %p156
    %p158 = pneg %p157
    // Predicated region
    $region9: #{_lambda_.5} parent=5 // pred_check
      _
    $region10: #{_lambda_.5} parent=5 // pred_check_branch
      %160 = sbr.rel (%p157) target = $region12
    $region11: #{_lambda_.5} parent=5 // pred_region
      %s161 = ssub.s32 %s11, 1
      // Predicated region
      $region13: #{_lambda_.5} parent=11 // pred_check
        %p162 = pneg %p58
      $region14: #{_lambda_.5} parent=11 // pred_check_branch
        %164 = sbr.rel (%p162) target = $region16
      $region15: #{_lambda_.5} parent=11 // pred_region
        _
      $region16: #{_lambda_.5} parent=11 // pred_fallthru
        _
      // Predicated region
      $region17: #{_lambda_.5} parent=11 // pred_check
        %p165 = pneg %p79
      $region18: #{_lambda_.5} parent=11 // pred_check_branch
        %167 = sbr.rel (%p165) target = $region20
      $region19: #{_lambda_.5} parent=11 // pred_region
        _
      $region20: #{_lambda_.5} parent=11 // pred_fallthru
        _
      // Predicated region
      $region21: #{_lambda_.5} parent=11 // pred_check
        %p168 = pneg %p100
      $region22: #{_lambda_.5} parent=11 // pred_check_branch
        %170 = sbr.rel (%p168) target = $region24
      $region23: #{_lambda_.5} parent=11 // pred_region
        _
      $region24: #{_lambda_.5} parent=11 // pred_fallthru
        _
      // Predicated region
      $region25: #{_lambda_.5} parent=11 // pred_check
        %p171 = pneg %p121
      $region26: #{_lambda_.5} parent=11 // pred_check_branch
        %173 = sbr.rel (%p171) target = $region28
      $region27: #{_lambda_.5} parent=11 // pred_region
        _
      $region28: #{_lambda_.5} parent=11 // pred_fallthru
        _
    $region12: #{_lambda_.5} parent=5 // pred_fallthru
      _
    %p174 = scmp.lt.s32.totalorder %s11, 2
    // Predicated region
    $region29: #{_lambda_.5} parent=5 // pred_check
      %p175 = pneg %p174
    $region30: #{_lambda_.5} parent=5 // pred_check_branch
      %177 = sbr.rel (%p175) target = $region32
    $region31: #{_lambda_.5} parent=5 // pred_region
      // Predicated region
      $region33: #{_lambda_.5} parent=31 // pred_check
        %p178 = pneg %p31
      $region34: #{_lambda_.5} parent=31 // pred_check_branch
        %180 = sbr.rel (%p178) target = $region36
      $region35: #{_lambda_.5} parent=31 // pred_region
        %s181 = smul.u32 32, %s11
        %p182 = scmp.lt.s32.totalorder %s181, 63
        %s183 = scalar_select %p182, %s181, 63
        %s184 = smul.addr %s183, 8
        %s185 = scalar_lea.vmem %s0, %s184
        %s186 = smul.u32 32, %s11
      $region36: #{_lambda_.5} parent=31 // pred_fallthru
        _
    $region32: #{_lambda_.5} parent=5 // pred_fallthru
      _
    %p187 = scmp.le.s32.totalorder 1, %s11
    %p188 = scmp.lt.s32.totalorder %s11, 3
    %p189 = pnand %p187, %p188
    %p190 = pneg %p189
    // Predicated region
    $region37: #{_lambda_.5} parent=5 // pred_check
      _
    $region38: #{_lambda_.5} parent=5 // pred_check_branch
      %192 = sbr.rel (%p189) target = $region40
    $region39: #{_lambda_.5} parent=5 // pred_region
      %s193 = ssub.s32 %s11, 1
      %s194 = smul.u32 32, %s16
      %p195 = scmp.lt.s32.totalorder %s194, 63
      %s196 = scalar_select %p195, %s194, 63
      %s197 = smul.addr %s196, 8
      %s198 = scalar_lea.vmem %s0, %s197
      %p199 = pneg %p37
      %p200 = pneg %p34
      %p201 = pneg %p58
      %p202 = pneg %p55
      %p203 = pneg %p79
      %p204 = pneg %p76
      %p205 = pneg %p100
      %p206 = pneg %p97
      %p207 = pneg %p121
      %p208 = pneg %p118
      %p209 = pneg %p147
      %p210 = pneg %p144
      %s211 = smul.u32 32, %s16
      %p212 = scmp.lt.s32.totalorder %s211, 63
      %s213 = scalar_select %p212, %s211, 63
      %s214 = smul.addr %s213, 8
      %s215 = scalar_lea.vmem %s5, %s214
      %s216 = smul.u32 32, %s16
      %p217 = scmp.lt.s32.totalorder %s216, 63
      %s218 = scalar_select %p217, %s216, 63
      %s219 = smul.addr %s218, 8
      %s220 = scalar_lea.vmem %s0, %s219
      %s221 = smul.u32 32, %s16
      %s222 = smul.u32 32, %s16
      %p223 = scmp.lt.s32.totalorder %s222, 63
      %s224 = scalar_select %p223, %s222, 63
      %s225 = smul.addr %s224, 8
      %s226 = scalar_lea.vmem %s5, %s225
      %s227 = smul.u32 32, %s16
      %v229 = vld [vmem:[%s220] sm:$0xff]
      %v230 = vld [vmem:[%s220 + $0x8] sm:$0xff]
      %v231 = vld [vmem:[%s220 + $0x10] sm:$0xff]
      %v232 = vld [vmem:[%s220 + $0x18] sm:$0xff]
      %v233 = vld [vmem:[%s220 + $0x20] sm:$0xff]
      %v234 = vld [vmem:[%s220 + $0x28] sm:$0xff]
      %v235 = vld [vmem:[%s220 + $0x30] sm:$0xff]
      %v236 = vld [vmem:[%s220 + $0x38] sm:$0xff]
      %v237 = vld [vmem:[%s220 + $0x40] sm:$0xff]
      %v238 = vld [vmem:[%s220 + $0x48] sm:$0xff]
      %v239 = vld [vmem:[%s220 + $0x50] sm:$0xff]
      %v240 = vld [vmem:[%s220 + $0x58] sm:$0xff]
      %v241 = vld [vmem:[%s220 + $0x60] sm:$0xff]
      %v242 = vld [vmem:[%s220 + $0x68] sm:$0xff]
      %v243 = vld [vmem:[%s220 + $0x70] sm:$0xff]
      %v244 = vld [vmem:[%s220 + $0x78] sm:$0xff]
      %v245 = vld [vmem:[%s220 + $0x80] sm:$0xff]
      %v246 = vld [vmem:[%s220 + $0x88] sm:$0xff]
      %v247 = vld [vmem:[%s220 + $0x90] sm:$0xff]
      %v248 = vld [vmem:[%s220 + $0x98] sm:$0xff]
      %v249 = vld [vmem:[%s220 + $0xa0] sm:$0xff]
      %v250 = vld [vmem:[%s220 + $0xa8] sm:$0xff]
      %v251 = vld [vmem:[%s220 + $0xb0] sm:$0xff]
      %v252 = vld [vmem:[%s220 + $0xb8] sm:$0xff]
      %v253 = vld [vmem:[%s220 + $0xc0] sm:$0xff]
      %v254 = vld [vmem:[%s220 + $0xc8] sm:$0xff]
      %v255 = vld [vmem:[%s220 + $0xd0] sm:$0xff]
      %v256 = vld [vmem:[%s220 + $0xd8] sm:$0xff]
      %v257 = vld [vmem:[%s220 + $0xe0] sm:$0xff]
      %v258 = vld [vmem:[%s220 + $0xe8] sm:$0xff]
      %v259 = vld [vmem:[%s220 + $0xf0] sm:$0xff]
      %v260 = vld [vmem:[%s220 + $0xf8] sm:$0xff]
      %v261 = vld [vmem:[%s1] sm:$0x1]
      %v263 = vlaneseq
      %v264 = vshrl.u32 %v263, 7
      %v265 = vsub.s32 0, %v264
      %v266 = vrot.slane %v261, %v265
      %v268 = vmul.f32 %v229, %v266
      %v269 = vmul.f32 %v230, %v266
      %v270 = vmul.f32 %v231, %v266
      %v271 = vmul.f32 %v232, %v266
      %v272 = vmul.f32 %v233, %v266
      %v273 = vmul.f32 %v234, %v266
      %v274 = vmul.f32 %v235, %v266
      %v275 = vmul.f32 %v236, %v266
      %v276 = vmul.f32 %v237, %v266
      %v277 = vmul.f32 %v238, %v266
      %v278 = vmul.f32 %v239, %v266
      %v279 = vmul.f32 %v240, %v266
      %v280 = vmul.f32 %v241, %v266
      %v281 = vmul.f32 %v242, %v266
      %v282 = vmul.f32 %v243, %v266
      %v283 = vmul.f32 %v244, %v266
      %v284 = vmul.f32 %v245, %v266
      %v285 = vmul.f32 %v246, %v266
      %v286 = vmul.f32 %v247, %v266
      %v287 = vmul.f32 %v248, %v266
      %v288 = vmul.f32 %v249, %v266
      %v289 = vmul.f32 %v250, %v266
      %v290 = vmul.f32 %v251, %v266
      %v291 = vmul.f32 %v252, %v266
      %v292 = vmul.f32 %v253, %v266
      %v293 = vmul.f32 %v254, %v266
      %v294 = vmul.f32 %v255, %v266
      %v295 = vmul.f32 %v256, %v266
      %v296 = vmul.f32 %v257, %v266
      %v297 = vmul.f32 %v258, %v266
      %v298 = vmul.f32 %v259, %v266
      %v299 = vmul.f32 %v260, %v266
      %v300 = vld [vmem:[%s2] sm:$0x1]
      %v302 = vlaneseq
      %v303 = vshrl.u32 %v302, 7
      %v304 = vsub.s32 0, %v303
      %v305 = vrot.slane %v300, %v304
      %v307 = vadd.f32 %v268, %v305
      %v308 = vadd.f32 %v269, %v305
      %v309 = vadd.f32 %v270, %v305
      %v310 = vadd.f32 %v271, %v305
      %v311 = vadd.f32 %v272, %v305
      %v312 = vadd.f32 %v273, %v305
      %v313 = vadd.f32 %v274, %v305
      %v314 = vadd.f32 %v275, %v305
      %v315 = vadd.f32 %v276, %v305
      %v316 = vadd.f32 %v277, %v305
      %v317 = vadd.f32 %v278, %v305
      %v318 = vadd.f32 %v279, %v305
      %v319 = vadd.f32 %v280, %v305
      %v320 = vadd.f32 %v281, %v305
      %v321 = vadd.f32 %v282, %v305
      %v322 = vadd.f32 %v283, %v305
      %v323 = vadd.f32 %v284, %v305
      %v324 = vadd.f32 %v285, %v305
      %v325 = vadd.f32 %v286, %v305
      %v326 = vadd.f32 %v287, %v305
      %v327 = vadd.f32 %v288, %v305
      %v328 = vadd.f32 %v289, %v305
      %v329 = vadd.f32 %v290, %v305
      %v330 = vadd.f32 %v291, %v305
      %v331 = vadd.f32 %v292, %v305
      %v332 = vadd.f32 %v293, %v305
      %v333 = vadd.f32 %v294, %v305
      %v334 = vadd.f32 %v295, %v305
      %v335 = vadd.f32 %v296, %v305
      %v336 = vadd.f32 %v297, %v305
      %v337 = vadd.f32 %v298, %v305
      %v338 = vadd.f32 %v299, %v305
      %v339 = vxor.u32 %v307, 2147483648
      %v340 = vxor.u32 %v308, 2147483648
      %v341 = vxor.u32 %v309, 2147483648
      %v342 = vxor.u32 %v310, 2147483648
      %v343 = vxor.u32 %v311, 2147483648
      %v344 = vxor.u32 %v312, 2147483648
      %v345 = vxor.u32 %v313, 2147483648
      %v346 = vxor.u32 %v314, 2147483648
      %v347 = vxor.u32 %v315, 2147483648
      %v348 = vxor.u32 %v316, 2147483648
      %v349 = vxor.u32 %v317, 2147483648
      %v350 = vxor.u32 %v318, 2147483648
      %v351 = vxor.u32 %v319, 2147483648
      %v352 = vxor.u32 %v320, 2147483648
      %v353 = vxor.u32 %v321, 2147483648
      %v354 = vxor.u32 %v322, 2147483648
      %v355 = vxor.u32 %v323, 2147483648
      %v356 = vxor.u32 %v324, 2147483648
      %v357 = vxor.u32 %v325, 2147483648
      %v358 = vxor.u32 %v326, 2147483648
      %v359 = vxor.u32 %v327, 2147483648
      %v360 = vxor.u32 %v328, 2147483648
      %v361 = vxor.u32 %v329, 2147483648
      %v362 = vxor.u32 %v330, 2147483648
      %v363 = vxor.u32 %v331, 2147483648
      %v364 = vxor.u32 %v332, 2147483648
      %v365 = vxor.u32 %v333, 2147483648
      %v366 = vxor.u32 %v334, 2147483648
      %v367 = vxor.u32 %v335, 2147483648
      %v368 = vxor.u32 %v336, 2147483648
      %v369 = vxor.u32 %v337, 2147483648
      %v370 = vxor.u32 %v338, 2147483648
      %v371 = vmul.f32 %v339, 1.442695
      %v372 = vpow.pop %v371
      %v373 = vmul.f32 %v340, 1.442695
      %v374 = vpow.pop %v373
      %v375 = vmul.f32 %v341, 1.442695
      %v376 = vpow.pop %v375
      %v377 = vmul.f32 %v342, 1.442695
      %v378 = vpow.pop %v377
      %v379 = vmul.f32 %v343, 1.442695
      %v380 = vpow.pop %v379
      %v381 = vmul.f32 %v344, 1.442695
      %v382 = vpow.pop %v381
      %v383 = vmul.f32 %v345, 1.442695
      %v384 = vpow.pop %v383
      %v385 = vmul.f32 %v346, 1.442695
      %v386 = vpow.pop %v385
      %v387 = vmul.f32 %v347, 1.442695
      %v388 = vpow.pop %v387
      %v389 = vmul.f32 %v348, 1.442695
      %v390 = vpow.pop %v389
      %v391 = vmul.f32 %v349, 1.442695
      %v392 = vpow.pop %v391
      %v393 = vmul.f32 %v350, 1.442695
      %v394 = vpow.pop %v393
      %v395 = vmul.f32 %v351, 1.442695
      %v396 = vpow.pop %v395
      %v397 = vmul.f32 %v352, 1.442695
      %v398 = vpow.pop %v397
      %v399 = vmul.f32 %v353, 1.442695
      %v400 = vpow.pop %v399
      %v401 = vmul.f32 %v354, 1.442695
      %v402 = vpow.pop %v401
      %v403 = vmul.f32 %v355, 1.442695
      %v404 = vpow.pop %v403
      %v405 = vmul.f32 %v356, 1.442695
      %v406 = vpow.pop %v405
      %v407 = vmul.f32 %v357, 1.442695
      %v408 = vpow.pop %v407
      %v409 = vmul.f32 %v358, 1.442695
      %v410 = vpow.pop %v409
      %v411 = vmul.f32 %v359, 1.442695
      %v412 = vpow.pop %v411
      %v413 = vmul.f32 %v360, 1.442695
      %v414 = vpow.pop %v413
      %v415 = vmul.f32 %v361, 1.442695
      %v416 = vpow.pop %v415
      %v417 = vmul.f32 %v362, 1.442695
      %v418 = vpow.pop %v417
      %v419 = vmul.f32 %v363, 1.442695
      %v420 = vpow.pop %v419
      %v421 = vmul.f32 %v364, 1.442695
      %v422 = vpow.pop %v421
      %v423 = vmul.f32 %v365, 1.442695
      %v424 = vpow.pop %v423
      %v425 = vmul.f32 %v366, 1.442695
      %v426 = vpow.pop %v425
      %v427 = vmul.f32 %v367, 1.442695
      %v428 = vpow.pop %v427
      %v429 = vmul.f32 %v368, 1.442695
      %v430 = vpow.pop %v429
      %v431 = vmul.f32 %v369, 1.442695
      %v432 = vpow.pop %v431
      %v433 = vmul.f32 %v370, 1.442695
      %v434 = vpow.pop %v433
      %v435 = vadd.f32 %v372, 1.0
      %v436 = vadd.f32 %v374, 1.0
      %v437 = vadd.f32 %v376, 1.0
      %v438 = vadd.f32 %v378, 1.0
      %v439 = vadd.f32 %v380, 1.0
      %v440 = vadd.f32 %v382, 1.0
      %v441 = vadd.f32 %v384, 1.0
      %v442 = vadd.f32 %v386, 1.0
      %v443 = vadd.f32 %v388, 1.0
      %v444 = vadd.f32 %v390, 1.0
      %v445 = vadd.f32 %v392, 1.0
      %v446 = vadd.f32 %v394, 1.0
      %v447 = vadd.f32 %v396, 1.0
      %v448 = vadd.f32 %v398, 1.0
      %v449 = vadd.f32 %v400, 1.0
      %v450 = vadd.f32 %v402, 1.0
      %v451 = vadd.f32 %v404, 1.0
      %v452 = vadd.f32 %v406, 1.0
      %v453 = vadd.f32 %v408, 1.0
      %v454 = vadd.f32 %v410, 1.0
      %v455 = vadd.f32 %v412, 1.0
      %v456 = vadd.f32 %v414, 1.0
      %v457 = vadd.f32 %v416, 1.0
      %v458 = vadd.f32 %v418, 1.0
      %v459 = vadd.f32 %v420, 1.0
      %v460 = vadd.f32 %v422, 1.0
      %v461 = vadd.f32 %v424, 1.0
      %v462 = vadd.f32 %v426, 1.0
      %v463 = vadd.f32 %v428, 1.0
      %v464 = vadd.f32 %v430, 1.0
      %v465 = vadd.f32 %v432, 1.0
      %v466 = vadd.f32 %v434, 1.0
      %v467 = vrcp.pop %v435
      %v468 = vmul.f32 1.0, %v467
      %v469 = vrcp.pop %v436
      %v470 = vmul.f32 1.0, %v469
      %v471 = vrcp.pop %v437
      %v472 = vmul.f32 1.0, %v471
      %v473 = vrcp.pop %v438
      %v474 = vmul.f32 1.0, %v473
      %v475 = vrcp.pop %v439
      %v476 = vmul.f32 1.0, %v475
      %v477 = vrcp.pop %v440
      %v478 = vmul.f32 1.0, %v477
      %v479 = vrcp.pop %v441
      %v480 = vmul.f32 1.0, %v479
      %v481 = vrcp.pop %v442
      %v482 = vmul.f32 1.0, %v481
      %v483 = vrcp.pop %v443
      %v484 = vmul.f32 1.0, %v483
      %v485 = vrcp.pop %v444
      %v486 = vmul.f32 1.0, %v485
      %v487 = vrcp.pop %v445
      %v488 = vmul.f32 1.0, %v487
      %v489 = vrcp.pop %v446
      %v490 = vmul.f32 1.0, %v489
      %v491 = vrcp.pop %v447
      %v492 = vmul.f32 1.0, %v491
      %v493 = vrcp.pop %v448
      %v494 = vmul.f32 1.0, %v493
      %v495 = vrcp.pop %v449
      %v496 = vmul.f32 1.0, %v495
      %v497 = vrcp.pop %v450
      %v498 = vmul.f32 1.0, %v497
      %v499 = vrcp.pop %v451
      %v500 = vmul.f32 1.0, %v499
      %v501 = vrcp.pop %v452
      %v502 = vmul.f32 1.0, %v501
      %v503 = vrcp.pop %v453
      %v504 = vmul.f32 1.0, %v503
      %v505 = vrcp.pop %v454
      %v506 = vmul.f32 1.0, %v505
      %v507 = vrcp.pop %v455
      %v508 = vmul.f32 1.0, %v507
      %v509 = vrcp.pop %v456
      %v510 = vmul.f32 1.0, %v509
      %v511 = vrcp.pop %v457
      %v512 = vmul.f32 1.0, %v511
      %v513 = vrcp.pop %v458
      %v514 = vmul.f32 1.0, %v513
      %v515 = vrcp.pop %v459
      %v516 = vmul.f32 1.0, %v515
      %v517 = vrcp.pop %v460
      %v518 = vmul.f32 1.0, %v517
      %v519 = vrcp.pop %v461
      %v520 = vmul.f32 1.0, %v519
      %v521 = vrcp.pop %v462
      %v522 = vmul.f32 1.0, %v521
      %v523 = vrcp.pop %v463
      %v524 = vmul.f32 1.0, %v523
      %v525 = vrcp.pop %v464
      %v526 = vmul.f32 1.0, %v525
      %v527 = vrcp.pop %v465
      %v528 = vmul.f32 1.0, %v527
      %v529 = vrcp.pop %v466
      %v530 = vmul.f32 1.0, %v529
      %v531 = vmul.f32 %v307, %v468
      %v532 = vmul.f32 %v308, %v470
      %v533 = vmul.f32 %v309, %v472
      %v534 = vmul.f32 %v310, %v474
      %v535 = vmul.f32 %v311, %v476
      %v536 = vmul.f32 %v312, %v478
      %v537 = vmul.f32 %v313, %v480
      %v538 = vmul.f32 %v314, %v482
      %v539 = vmul.f32 %v315, %v484
      %v540 = vmul.f32 %v316, %v486
      %v541 = vmul.f32 %v317, %v488
      %v542 = vmul.f32 %v318, %v490
      %v543 = vmul.f32 %v319, %v492
      %v544 = vmul.f32 %v320, %v494
      %v545 = vmul.f32 %v321, %v496
      %v546 = vmul.f32 %v322, %v498
      %v547 = vmul.f32 %v323, %v500
      %v548 = vmul.f32 %v324, %v502
      %v549 = vmul.f32 %v325, %v504
      %v550 = vmul.f32 %v326, %v506
      %v551 = vmul.f32 %v327, %v508
      %v552 = vmul.f32 %v328, %v510
      %v553 = vmul.f32 %v329, %v512
      %v554 = vmul.f32 %v330, %v514
      %v555 = vmul.f32 %v331, %v516
      %v556 = vmul.f32 %v332, %v518
      %v557 = vmul.f32 %v333, %v520
      %v558 = vmul.f32 %v334, %v522
      %v559 = vmul.f32 %v335, %v524
      %v560 = vmul.f32 %v336, %v526
      %v561 = vmul.f32 %v337, %v528
      %v562 = vmul.f32 %v338, %v530
      %563 = vst [vmem:[#allocation2] sm:$0xff] 0.0
      %564 = vst [vmem:[#allocation2 + $0x8] sm:$0xff] 0.0
      %565 = vst [vmem:[#allocation2 + $0x10] sm:$0xff] 0.0
      %566 = vst [vmem:[#allocation2 + $0x18] sm:$0x1] 0.0
      %567 = vst [vmem:[#allocation2 + $0x20] sm:$0xff] 0.0
      %568 = vst [vmem:[#allocation2 + $0x28] sm:$0xff] 0.0
      %569 = vst [vmem:[#allocation2 + $0x30] sm:$0xff] 0.0
      %570 = vst [vmem:[#allocation2 + $0x38] sm:$0x1] 0.0
      %571 = vst [vmem:[#allocation2 + $0x40] sm:$0xff] 0.0
      %572 = vst [vmem:[#allocation2 + $0x48] sm:$0xff] 0.0
      %573 = vst [vmem:[#allocation2 + $0x50] sm:$0xff] 0.0
      %574 = vst [vmem:[#allocation2 + $0x58] sm:$0x1] 0.0
      %575 = vst [vmem:[#allocation2 + $0x60] sm:$0xff] 0.0
      %576 = vst [vmem:[#allocation2 + $0x68] sm:$0xff] 0.0
      %577 = vst [vmem:[#allocation2 + $0x70] sm:$0xff] 0.0
      %578 = vst [vmem:[#allocation2 + $0x78] sm:$0x1] 0.0
      %579 = vst [vmem:[#allocation2 + $0x80] sm:$0xff] 0.0
      %580 = vst [vmem:[#allocation2 + $0x88] sm:$0xff] 0.0
      %581 = vst [vmem:[#allocation2 + $0x90] sm:$0xff] 0.0
      %582 = vst [vmem:[#allocation2 + $0x98] sm:$0x1] 0.0
      %583 = vst [vmem:[#allocation2 + $0xa0] sm:$0xff] 0.0
      %584 = vst [vmem:[#allocation2 + $0xa8] sm:$0xff] 0.0
      %585 = vst [vmem:[#allocation2 + $0xb0] sm:$0xff] 0.0
      %586 = vst [vmem:[#allocation2 + $0xb8] sm:$0x1] 0.0
      %587 = vst [vmem:[#allocation2 + $0xc0] sm:$0xff] 0.0
      %588 = vst [vmem:[#allocation2 + $0xc8] sm:$0xff] 0.0
      %589 = vst [vmem:[#allocation2 + $0xd0] sm:$0xff] 0.0
      %590 = vst [vmem:[#allocation2 + $0xd8] sm:$0x1] 0.0
      %591 = vst [vmem:[#allocation2 + $0xe0] sm:$0xff] 0.0
      %592 = vst [vmem:[#allocation2 + $0xe8] sm:$0xff] 0.0
      %593 = vst [vmem:[#allocation2 + $0xf0] sm:$0xff] 0.0
      %594 = vst [vmem:[#allocation2 + $0xf8] sm:$0x1] 0.0
      %595 = vst [vmem:[#allocation2 + $0x100] sm:$0xff] 0.0
      %596 = vst [vmem:[#allocation2 + $0x108] sm:$0xff] 0.0
      %597 = vst [vmem:[#allocation2 + $0x110] sm:$0xff] 0.0
      %598 = vst [vmem:[#allocation2 + $0x118] sm:$0x1] 0.0
      %599 = vst [vmem:[#allocation2 + $0x120] sm:$0xff] 0.0
      %600 = vst [vmem:[#allocation2 + $0x128] sm:$0xff] 0.0
      %601 = vst [vmem:[#allocation2 + $0x130] sm:$0xff] 0.0
      %602 = vst [vmem:[#allocation2 + $0x138] sm:$0x1] 0.0
      %603 = vst [vmem:[#allocation2 + $0x140] sm:$0xff] 0.0
      %604 = vst [vmem:[#allocation2 + $0x148] sm:$0xff] 0.0
      %605 = vst [vmem:[#allocation2 + $0x150] sm:$0xff] 0.0
      %606 = vst [vmem:[#allocation2 + $0x158] sm:$0x1] 0.0
      %607 = vst [vmem:[#allocation2 + $0x160] sm:$0xff] 0.0
      %608 = vst [vmem:[#allocation2 + $0x168] sm:$0xff] 0.0
      %609 = vst [vmem:[#allocation2 + $0x170] sm:$0xff] 0.0
      %610 = vst [vmem:[#allocation2 + $0x178] sm:$0x1] 0.0
      %611 = vst [vmem:[#allocation2 + $0x180] sm:$0xff] 0.0
      %612 = vst [vmem:[#allocation2 + $0x188] sm:$0xff] 0.0
      %613 = vst [vmem:[#allocation2 + $0x190] sm:$0xff] 0.0
      %614 = vst [vmem:[#allocation2 + $0x198] sm:$0x1] 0.0
      %615 = vst [vmem:[#allocation2 + $0x1a0] sm:$0xff] 0.0
      %616 = vst [vmem:[#allocation2 + $0x1a8] sm:$0xff] 0.0
      %617 = vst [vmem:[#allocation2 + $0x1b0] sm:$0xff] 0.0
      %618 = vst [vmem:[#allocation2 + $0x1b8] sm:$0x1] 0.0
      %619 = vst [vmem:[#allocation2 + $0x1c0] sm:$0xff] 0.0
      %620 = vst [vmem:[#allocation2 + $0x1c8] sm:$0xff] 0.0
      %621 = vst [vmem:[#allocation2 + $0x1d0] sm:$0xff] 0.0
      %622 = vst [vmem:[#allocation2 + $0x1d8] sm:$0x1] 0.0
      %623 = vst [vmem:[#allocation2 + $0x1e0] sm:$0xff] 0.0
      %624 = vst [vmem:[#allocation2 + $0x1e8] sm:$0xff] 0.0
      %625 = vst [vmem:[#allocation2 + $0x1f0] sm:$0xff] 0.0
      %626 = vst [vmem:[#allocation2 + $0x1f8] sm:$0x1] 0.0
      %627 = vst [vmem:[#allocation2 + $0x200] sm:$0xff] 0.0
      %628 = vst [vmem:[#allocation2 + $0x208] sm:$0xff] 0.0
      %629 = vst [vmem:[#allocation2 + $0x210] sm:$0xff] 0.0
      %630 = vst [vmem:[#allocation2 + $0x218] sm:$0x1] 0.0
      %631 = vst [vmem:[#allocation2 + $0x220] sm:$0xff] 0.0
      %632 = vst [vmem:[#allocation2 + $0x228] sm:$0xff] 0.0
      %633 = vst [vmem:[#allocation2 + $0x230] sm:$0xff] 0.0
      %634 = vst [vmem:[#allocation2 + $0x238] sm:$0x1] 0.0
      %s635 = scalar_lea.vmem [#allocation2], 32
      %636 = vst [vmem:[%s635 + $0x8] sm:$0xff] %v531
      %637 = vst [vmem:[%s635 + $0x10] sm:$0xff] %v532
      %638 = vst [vmem:[%s635 + $0x28] sm:$0xff] %v533
      %639 = vst [vmem:[%s635 + $0x30] sm:$0xff] %v534
      %640 = vst [vmem:[%s635 + $0x48] sm:$0xff] %v535
      %641 = vst [vmem:[%s635 + $0x50] sm:$0xff] %v536
      %642 = vst [vmem:[%s635 + $0x68] sm:$0xff] %v537
      %643 = vst [vmem:[%s635 + $0x70] sm:$0xff] %v538
      %644 = vst [vmem:[%s635 + $0x88] sm:$0xff] %v539
      %645 = vst [vmem:[%s635 + $0x90] sm:$0xff] %v540
      %646 = vst [vmem:[%s635 + $0xa8] sm:$0xff] %v541
      %647 = vst [vmem:[%s635 + $0xb0] sm:$0xff] %v542
      %648 = vst [vmem:[%s635 + $0xc8] sm:$0xff] %v543
      %649 = vst [vmem:[%s635 + $0xd0] sm:$0xff] %v544
      %650 = vst [vmem:[%s635 + $0xe8] sm:$0xff] %v545
      %651 = vst [vmem:[%s635 + $0xf0] sm:$0xff] %v546
      %652 = vst [vmem:[%s635 + $0x108] sm:$0xff] %v547
      %653 = vst [vmem:[%s635 + $0x110] sm:$0xff] %v548
      %654 = vst [vmem:[%s635 + $0x128] sm:$0xff] %v549
      %655 = vst [vmem:[%s635 + $0x130] sm:$0xff] %v550
      %656 = vst [vmem:[%s635 + $0x148] sm:$0xff] %v551
      %657 = vst [vmem:[%s635 + $0x150] sm:$0xff] %v552
      %658 = vst [vmem:[%s635 + $0x168] sm:$0xff] %v553
      %659 = vst [vmem:[%s635 + $0x170] sm:$0xff] %v554
      %660 = vst [vmem:[%s635 + $0x188] sm:$0xff] %v555
      %661 = vst [vmem:[%s635 + $0x190] sm:$0xff] %v556
      %662 = vst [vmem:[%s635 + $0x1a8] sm:$0xff] %v557
      %663 = vst [vmem:[%s635 + $0x1b0] sm:$0xff] %v558
      %664 = vst [vmem:[%s635 + $0x1c8] sm:$0xff] %v559
      %665 = vst [vmem:[%s635 + $0x1d0] sm:$0xff] %v560
      %666 = vst [vmem:[%s635 + $0x1e8] sm:$0xff] %v561
      %667 = vst [vmem:[%s635 + $0x1f0] sm:$0xff] %v562
      %v668 = vld [vmem:[#allocation2 + $0x7] sm:$0xff]
      %v669 = vld [vmem:[#allocation2 + $0xf] sm:$0xff]
      %v670 = vld [vmem:[#allocation2 + $0x27] sm:$0xff]
      %v671 = vld [vmem:[#allocation2 + $0x2f] sm:$0xff]
      %v672 = vld [vmem:[#allocation2 + $0x47] sm:$0xff]
      %v673 = vld [vmem:[#allocation2 + $0x4f] sm:$0xff]
      %v674 = vld [vmem:[#allocation2 + $0x67] sm:$0xff]
      %v675 = vld [vmem:[#allocation2 + $0x6f] sm:$0xff]
      %v676 = vld [vmem:[#allocation2 + $0x87] sm:$0xff]
      %v677 = vld [vmem:[#allocation2 + $0x8f] sm:$0xff]
      %v678 = vld [vmem:[#allocation2 + $0xa7] sm:$0xff]
      %v679 = vld [vmem:[#allocation2 + $0xaf] sm:$0xff]
      %v680 = vld [vmem:[#allocation2 + $0xc7] sm:$0xff]
      %v681 = vld [vmem:[#allocation2 + $0xcf] sm:$0xff]
      %v682 = vld [vmem:[#allocation2 + $0xe7] sm:$0xff]
      %v683 = vld [vmem:[#allocation2 + $0xef] sm:$0xff]
      %v684 = vld [vmem:[#allocation2 + $0x107] sm:$0xff]
      %v685 = vld [vmem:[#allocation2 + $0x10f] sm:$0xff]
      %v686 = vld [vmem:[#allocation2 + $0x127] sm:$0xff]
      %v687 = vld [vmem:[#allocation2 + $0x12f] sm:$0xff]
      %v688 = vld [vmem:[#allocation2 + $0x147] sm:$0xff]
      %v689 = vld [vmem:[#allocation2 + $0x14f] sm:$0xff]
      %v690 = vld [vmem:[#allocation2 + $0x167] sm:$0xff]
      %v691 = vld [vmem:[#allocation2 + $0x16f] sm:$0xff]
      %v692 = vld [vmem:[#allocation2 + $0x187] sm:$0xff]
      %v693 = vld [vmem:[#allocation2 + $0x18f] sm:$0xff]
      %v694 = vld [vmem:[#allocation2 + $0x1a7] sm:$0xff]
      %v695 = vld [vmem:[#allocation2 + $0x1af] sm:$0xff]
      %v696 = vld [vmem:[#allocation2 + $0x1c7] sm:$0xff]
      %v697 = vld [vmem:[#allocation2 + $0x1cf] sm:$0xff]
      %v698 = vld [vmem:[#allocation2 + $0x1e7] sm:$0xff]
      %v699 = vld [vmem:[#allocation2 + $0x1ef] sm:$0xff]
      %v700 = vpack.c.bf16 %v669, %v668
      %v701 = vpack.c.bf16 %v671, %v670
      %v702 = vpack.c.bf16 %v673, %v672
      %v703 = vpack.c.bf16 %v675, %v674
      %v704 = vpack.c.bf16 %v677, %v676
      %v705 = vpack.c.bf16 %v679, %v678
      %v706 = vpack.c.bf16 %v681, %v680
      %v707 = vpack.c.bf16 %v683, %v682
      %v708 = vpack.c.bf16 %v685, %v684
      %v709 = vpack.c.bf16 %v687, %v686
      %v710 = vpack.c.bf16 %v689, %v688
      %v711 = vpack.c.bf16 %v691, %v690
      %v712 = vpack.c.bf16 %v693, %v692
      %v713 = vpack.c.bf16 %v695, %v694
      %v714 = vpack.c.bf16 %v697, %v696
      %v715 = vpack.c.bf16 %v699, %v698
      %v716 = vld [vmem:[%s3] sm:$0xf]
      %v717 = vld [vmem:[%s3 + $0x4] sm:$0xf]
      %v718 = vld [vmem:[%s3 + $0x8] sm:$0xf]
      %v719 = vld [vmem:[%s3 + $0xc] sm:$0xf]
      %v720 = vld [vmem:[%s3 + $0x10] sm:$0xf]
      %v721 = vld [vmem:[%s3 + $0x14] sm:$0xf]
      %v722 = vld [vmem:[%s3 + $0x18] sm:$0xf]
      %v723 = vld [vmem:[%s3 + $0x1c] sm:$0xf]
      %v724 = vld [vmem:[%s3 + $0x20] sm:$0xf]
      %v725 = vld [vmem:[%s3 + $0x24] sm:$0xf]
      %v726 = vld [vmem:[%s3 + $0x28] sm:$0xf]
      %v727 = vld [vmem:[%s3 + $0x2c] sm:$0xf]
      %v728 = vld [vmem:[%s3 + $0x30] sm:$0xf]
      %v729 = vld [vmem:[%s3 + $0x34] sm:$0xf]
      %v730 = vld [vmem:[%s3 + $0x38] sm:$0xf]
      %v731 = vld [vmem:[%s3 + $0x3c] sm:$0xf]
      %v732 = vld [vmem:[%s4] sm:$0x1]
      %v734 = vlaneseq
      %v735 = vshrl.u32 %v734, 7
      %v736 = vsub.s32 0, %v735
      %v737 = vrot.slane %v732, %v736
      %v755 = vunpack.c.l.b16 %v716
      %v756 = vunpack.c.l.b16 %v717
      %v757 = vunpack.c.l.b16 %v718
      %v758 = vunpack.c.l.b16 %v719
      %v759 = vunpack.c.l.b16 %v720
      %v760 = vunpack.c.l.b16 %v721
      %v761 = vunpack.c.l.b16 %v722
      %v762 = vunpack.c.l.b16 %v723
      %v763 = vunpack.c.l.b16 %v724
      %v764 = vunpack.c.l.b16 %v725
      %v765 = vunpack.c.l.b16 %v726
      %v766 = vunpack.c.l.b16 %v727
      %v767 = vunpack.c.l.b16 %v728
      %v768 = vunpack.c.l.b16 %v729
      %v769 = vunpack.c.l.b16 %v730
      %v770 = vunpack.c.l.b16 %v731
      %v771 = vpack.c.b16 %v756, %v755
      %v772 = vpack.c.b16 %v758, %v757
      %v773 = vpack.c.b16 %v760, %v759
      %v774 = vpack.c.b16 %v762, %v761
      %v775 = vpack.c.b16 %v764, %v763
      %v776 = vpack.c.b16 %v766, %v765
      %v777 = vpack.c.b16 %v768, %v767
      %v778 = vpack.c.b16 %v770, %v769
      %787 = vmatprep.subr.bf16.mxu0 0
      %788 = vmatpush1.bf16.msra.mxu0 %v771
      %789 = vmatprep.subr.bf16.mxu0 0
      %790 = vmatpush1.bf16.msra.mxu0 %v772
      %791 = vmatprep.subr.bf16.mxu0 0
      %792 = vmatpush1.bf16.msra.mxu0 %v773
      %793 = vmatprep.subr.bf16.mxu0 0
      %794 = vmatpush1.bf16.msra.mxu0 %v774
      %795 = vmatprep.subr.bf16.mxu0 0
      %796 = vmatpush1.bf16.msra.mxu0 %v775
      %797 = vmatprep.subr.bf16.mxu0 0
      %798 = vmatpush1.bf16.msra.mxu0 %v776
      %799 = vmatprep.subr.bf16.mxu0 0
      %800 = vmatpush1.bf16.msra.mxu0 %v777
      %801 = vmatprep.subr.bf16.mxu0 0
      %802 = vmatpush1.bf16.msra.mxu0 %v778
      %803 = vmatprep.subr.bf16.mxu0 0
      %804 = vmatpush1.bf16.msra.mxu0 0
      %805 = vmatprep.subr.bf16.mxu0 0
      %806 = vmatpush1.bf16.msra.mxu0 0
      %807 = vmatprep.subr.bf16.mxu0 0
      %808 = vmatpush1.bf16.msra.mxu0 0
      %809 = vmatprep.subr.bf16.mxu0 0
      %810 = vmatpush1.bf16.msra.mxu0 0
      %811 = vmatprep.subr.bf16.mxu0 0
      %812 = vmatpush1.bf16.msra.mxu0 0
      %813 = vmatprep.subr.bf16.mxu0 0
      %814 = vmatpush1.bf16.msra.mxu0 0
      %815 = vmatprep.subr.bf16.mxu0 0
      %816 = vmatpush1.bf16.msra.mxu0 0
      %817 = vmatprep.subr.bf16.mxu0 0
      %818 = vmatpush1.bf16.msra.mxu0 0
      %819 = vmatprep.mubr.bf16.mxu0 0
      %820 = vmatmul.mubr.bf16.gmra.mrb[0].mxu0 %v700
      %v821 = vpop.f32.mrb[0].mxu0
      %v822 = vadd.f32 %v737, %v821
      %v823 = vpop.f32.mrb[0].mxu0
      %v824 = vpop.f32.mrb[0].mxu0
      %v825 = vadd.f32 %v737, %v824
      %v826 = vpop.f32.mrb[0].mxu0
      %827 = vmatprep.mubr.bf16.mxu0 0
      %828 = vmatmul.mubr.bf16.gmra.mrb[0].mxu0 %v701
      %v829 = vpop.f32.mrb[0].mxu0
      %v830 = vadd.f32 %v737, %v829
      %v831 = vpop.f32.mrb[0].mxu0
      %v832 = vpop.f32.mrb[0].mxu0
      %v833 = vadd.f32 %v737, %v832
      %v834 = vpop.f32.mrb[0].mxu0
      %835 = vmatprep.mubr.bf16.mxu0 0
      %836 = vmatmul.mubr.bf16.gmra.mrb[0].mxu0 %v702
      %v837 = vpop.f32.mrb[0].mxu0
      %v838 = vadd.f32 %v737, %v837
      %v839 = vpop.f32.mrb[0].mxu0
      %v840 = vpop.f32.mrb[0].mxu0
      %v841 = vadd.f32 %v737, %v840
      %v842 = vpop.f32.mrb[0].mxu0
      %843 = vmatprep.mubr.bf16.mxu0 0
      %844 = vmatmul.mubr.bf16.gmra.mrb[0].mxu0 %v703
      %v845 = vpop.f32.mrb[0].mxu0
      %v846 = vadd.f32 %v737, %v845
      %v847 = vpop.f32.mrb[0].mxu0
      %v848 = vpop.f32.mrb[0].mxu0
      %v849 = vadd.f32 %v737, %v848
      %v850 = vpop.f32.mrb[0].mxu0
      %851 = vmatprep.mubr.bf16.mxu0 0
      %852 = vmatmul.mubr.bf16.gmra.mrb[0].mxu0 %v704
      %v853 = vpop.f32.mrb[0].mxu0
      %v854 = vadd.f32 %v737, %v853
      %v855 = vpop.f32.mrb[0].mxu0
      %v856 = vpop.f32.mrb[0].mxu0
      %v857 = vadd.f32 %v737, %v856
      %v858 = vpop.f32.mrb[0].mxu0
      %859 = vmatprep.mubr.bf16.mxu0 0
      %860 = vmatmul.mubr.bf16.gmra.mrb[0].mxu0 %v705
      %v861 = vpop.f32.mrb[0].mxu0
      %v862 = vadd.f32 %v737, %v861
      %v863 = vpop.f32.mrb[0].mxu0
      %v864 = vpop.f32.mrb[0].mxu0
      %v865 = vadd.f32 %v737, %v864
      %v866 = vpop.f32.mrb[0].mxu0
      %867 = vmatprep.mubr.bf16.mxu0 0
      %868 = vmatmul.mubr.bf16.gmra.mrb[0].mxu0 %v706
      %v869 = vpop.f32.mrb[0].mxu0
      %v870 = vadd.f32 %v737, %v869
      %v871 = vpop.f32.mrb[0].mxu0
      %v872 = vpop.f32.mrb[0].mxu0
      %v873 = vadd.f32 %v737, %v872
      %v874 = vpop.f32.mrb[0].mxu0
      %875 = vmatprep.mubr.bf16.mxu0 0
      %876 = vmatmul.mubr.bf16.gmra.mrb[0].mxu0 %v707
      %v877 = vpop.f32.mrb[0].mxu0
      %v878 = vadd.f32 %v737, %v877
      %v879 = vpop.f32.mrb[0].mxu0
      %v880 = vpop.f32.mrb[0].mxu0
      %v881 = vadd.f32 %v737, %v880
      %v882 = vpop.f32.mrb[0].mxu0
      %883 = vmatprep.mubr.bf16.mxu0 0
      %884 = vmatmul.mubr.bf16.gmra.mrb[0].mxu0 %v708
      %v885 = vpop.f32.mrb[0].mxu0
      %v886 = vadd.f32 %v737, %v885
      %v887 = vpop.f32.mrb[0].mxu0
      %v888 = vpop.f32.mrb[0].mxu0
      %v889 = vadd.f32 %v737, %v888
      %v890 = vpop.f32.mrb[0].mxu0
      %891 = vmatprep.mubr.bf16.mxu0 0
      %892 = vmatmul.mubr.bf16.gmra.mrb[0].mxu0 %v709
      %v893 = vpop.f32.mrb[0].mxu0
      %v894 = vadd.f32 %v737, %v893
      %v895 = vpop.f32.mrb[0].mxu0
      %v896 = vpop.f32.mrb[0].mxu0
      %v897 = vadd.f32 %v737, %v896
      %v898 = vpop.f32.mrb[0].mxu0
      %899 = vmatprep.mubr.bf16.mxu0 0
      %900 = vmatmul.mubr.bf16.gmra.mrb[0].mxu0 %v710
      %v901 = vpop.f32.mrb[0].mxu0
      %v902 = vadd.f32 %v737, %v901
      %v903 = vpop.f32.mrb[0].mxu0
      %v904 = vpop.f32.mrb[0].mxu0
      %v905 = vadd.f32 %v737, %v904
      %v906 = vpop.f32.mrb[0].mxu0
      %907 = vmatprep.mubr.bf16.mxu0 0
      %908 = vmatmul.mubr.bf16.gmra.mrb[0].mxu0 %v711
      %v909 = vpop.f32.mrb[0].mxu0
      %v910 = vadd.f32 %v737, %v909
      %v911 = vpop.f32.mrb[0].mxu0
      %v912 = vpop.f32.mrb[0].mxu0
      %v913 = vadd.f32 %v737, %v912
      %v914 = vpop.f32.mrb[0].mxu0
      %915 = vmatprep.mubr.bf16.mxu0 0
      %916 = vmatmul.mubr.bf16.gmra.mrb[0].mxu0 %v712
      %v917 = vpop.f32.mrb[0].mxu0
      %v918 = vadd.f32 %v737, %v917
      %v919 = vpop.f32.mrb[0].mxu0
      %v920 = vpop.f32.mrb[0].mxu0
      %v921 = vadd.f32 %v737, %v920
      %v922 = vpop.f32.mrb[0].mxu0
      %923 = vmatprep.mubr.bf16.mxu0 0
      %924 = vmatmul.mubr.bf16.gmra.mrb[0].mxu0 %v713
      %v925 = vpop.f32.mrb[0].mxu0
      %v926 = vadd.f32 %v737, %v925
      %v927 = vpop.f32.mrb[0].mxu0
      %v928 = vpop.f32.mrb[0].mxu0
      %v929 = vadd.f32 %v737, %v928
      %v930 = vpop.f32.mrb[0].mxu0
      %931 = vmatprep.mubr.bf16.mxu0 0
      %932 = vmatmul.mubr.bf16.gmra.mrb[0].mxu0 %v714
      %v933 = vpop.f32.mrb[0].mxu0
      %v934 = vadd.f32 %v737, %v933
      %v935 = vpop.f32.mrb[0].mxu0
      %v936 = vpop.f32.mrb[0].mxu0
      %v937 = vadd.f32 %v737, %v936
      %v938 = vpop.f32.mrb[0].mxu0
      %939 = vmatprep.mubr.bf16.mxu0 0
      %940 = vmatmul.mubr.bf16.gmra.mrb[0].mxu0 %v715
      %v941 = vpop.f32.mrb[0].mxu0
      %v942 = vadd.f32 %v737, %v941
      %v943 = vpop.f32.mrb[0].mxu0
      %v944 = vpop.f32.mrb[0].mxu0
      %v945 = vadd.f32 %v737, %v944
      %v946 = vpop.f32.mrb[0].mxu0
      %947 = vdwg.mxu0
      %948 = vst [vmem:[%s226] sm:$0xff] %v822
      %949 = vst [vmem:[%s226 + $0x8] sm:$0xff] %v825
      %950 = vst [vmem:[%s226 + $0x10] sm:$0xff] %v830
      %951 = vst [vmem:[%s226 + $0x18] sm:$0xff] %v833
      %952 = vst [vmem:[%s226 + $0x20] sm:$0xff] %v838
      %953 = vst [vmem:[%s226 + $0x28] sm:$0xff] %v841
      %954 = vst [vmem:[%s226 + $0x30] sm:$0xff] %v846
      %955 = vst [vmem:[%s226 + $0x38] sm:$0xff] %v849
      %956 = vst [vmem:[%s226 + $0x40] sm:$0xff] %v854
      %957 = vst [vmem:[%s226 + $0x48] sm:$0xff] %v857
      %958 = vst [vmem:[%s226 + $0x50] sm:$0xff] %v862
      %959 = vst [vmem:[%s226 + $0x58] sm:$0xff] %v865
      %960 = vst [vmem:[%s226 + $0x60] sm:$0xff] %v870
      %961 = vst [vmem:[%s226 + $0x68] sm:$0xff] %v873
      %962 = vst [vmem:[%s226 + $0x70] sm:$0xff] %v878
      %963 = vst [vmem:[%s226 + $0x78] sm:$0xff] %v881
      %964 = vst [vmem:[%s226 + $0x80] sm:$0xff] %v886
      %965 = vst [vmem:[%s226 + $0x88] sm:$0xff] %v889
      %966 = vst [vmem:[%s226 + $0x90] sm:$0xff] %v894
      %967 = vst [vmem:[%s226 + $0x98] sm:$0xff] %v897
      %968 = vst [vmem:[%s226 + $0xa0] sm:$0xff] %v902
      %969 = vst [vmem:[%s226 + $0xa8] sm:$0xff] %v905
      %970 = vst [vmem:[%s226 + $0xb0] sm:$0xff] %v910
      %971 = vst [vmem:[%s226 + $0xb8] sm:$0xff] %v913
      %972 = vst [vmem:[%s226 + $0xc0] sm:$0xff] %v918
      %973 = vst [vmem:[%s226 + $0xc8] sm:$0xff] %v921
      %974 = vst [vmem:[%s226 + $0xd0] sm:$0xff] %v926
      %975 = vst [vmem:[%s226 + $0xd8] sm:$0xff] %v929
      %976 = vst [vmem:[%s226 + $0xe0] sm:$0xff] %v934
      %977 = vst [vmem:[%s226 + $0xe8] sm:$0xff] %v937
      %978 = vst [vmem:[%s226 + $0xf0] sm:$0xff] %v942
      %979 = vst [vmem:[%s226 + $0xf8] sm:$0xff] %v945
      %v980 = vld [vmem:[#allocation2 + $0x8] sm:$0xff]
      %v981 = vld [vmem:[#allocation2 + $0x10] sm:$0xff]
      %v982 = vld [vmem:[#allocation2 + $0x28] sm:$0xff]
      %v983 = vld [vmem:[#allocation2 + $0x30] sm:$0xff]
      %v984 = vld [vmem:[#allocation2 + $0x48] sm:$0xff]
      %v985 = vld [vmem:[#allocation2 + $0x50] sm:$0xff]
      %v986 = vld [vmem:[#allocation2 + $0x68] sm:$0xff]
      %v987 = vld [vmem:[#allocation2 + $0x70] sm:$0xff]
      %v988 = vld [vmem:[#allocation2 + $0x88] sm:$0xff]
      %v989 = vld [vmem:[#allocation2 + $0x90] sm:$0xff]
      %v990 = vld [vmem:[#allocation2 + $0xa8] sm:$0xff]
      %v991 = vld [vmem:[#allocation2 + $0xb0] sm:$0xff]
      %v992 = vld [vmem:[#allocation2 + $0xc8] sm:$0xff]
      %v993 = vld [vmem:[#allocation2 + $0xd0] sm:$0xff]
      %v994 = vld [vmem:[#allocation2 + $0xe8] sm:$0xff]
      %v995 = vld [vmem:[#allocation2 + $0xf0] sm:$0xff]
      %v996 = vld [vmem:[#allocation2 + $0x108] sm:$0xff]
      %v997 = vld [vmem:[#allocation2 + $0x110] sm:$0xff]
      %v998 = vld [vmem:[#allocation2 + $0x128] sm:$0xff]
      %v999 = vld [vmem:[#allocation2 + $0x130] sm:$0xff]
      %v1000 = vld [vmem:[#allocation2 + $0x148] sm:$0xff]
      %v1001 = vld [vmem:[#allocation2 + $0x150] sm:$0xff]
      %v1002 = vld [vmem:[#allocation2 + $0x168] sm:$0xff]
      %v1003 = vld [vmem:[#allocation2 + $0x170] sm:$0xff]
      %v1004 = vld [vmem:[#allocation2 + $0x188] sm:$0xff]
      %v1005 = vld [vmem:[#allocation2 + $0x190] sm:$0xff]
      %v1006 = vld [vmem:[#allocation2 + $0x1a8] sm:$0xff]
      %v1007 = vld [vmem:[#allocation2 + $0x1b0] sm:$0xff]
      %v1008 = vld [vmem:[#allocation2 + $0x1c8] sm:$0xff]
      %v1009 = vld [vmem:[#allocation2 + $0x1d0] sm:$0xff]
      %v1010 = vld [vmem:[#allocation2 + $0x1e8] sm:$0xff]
      %v1011 = vld [vmem:[#allocation2 + $0x1f0] sm:$0xff]
      %v1012 = vpack.c.bf16 %v981, %v980
      %v1013 = vpack.c.bf16 %v983, %v982
      %v1014 = vpack.c.bf16 %v985, %v984
      %v1015 = vpack.c.bf16 %v987, %v986
      %v1016 = vpack.c.bf16 %v989, %v988
      %v1017 = vpack.c.bf16 %v991, %v990
      %v1018 = vpack.c.bf16 %v993, %v992
      %v1019 = vpack.c.bf16 %v995, %v994
      %v1020 = vpack.c.bf16 %v997, %v996
      %v1021 = vpack.c.bf16 %v999, %v998
      %v1022 = vpack.c.bf16 %v1001, %v1000
      %v1023 = vpack.c.bf16 %v1003, %v1002
      %v1024 = vpack.c.bf16 %v1005, %v1004
      %v1025 = vpack.c.bf16 %v1007, %v1006
      %v1026 = vpack.c.bf16 %v1009, %v1008
      %v1027 = vpack.c.bf16 %v1011, %v1010
      %s1028 = scalar_lea.vmem %s3, 64
      %v1029 = vld [vmem:[%s1028] sm:$0xf]
      %v1030 = vld [vmem:[%s1028 + $0x4] sm:$0xf]
      %v1031 = vld [vmem:[%s1028 + $0x8] sm:$0xf]
      %v1032 = vld [vmem:[%s1028 + $0xc] sm:$0xf]
      %v1033 = vld [vmem:[%s1028 + $0x10] sm:$0xf]
      %v1034 = vld [vmem:[%s1028 + $0x14] sm:$0xf]
      %v1035 = vld [vmem:[%s1028 + $0x18] sm:$0xf]
      %v1036 = vld [vmem:[%s1028 + $0x1c] sm:$0xf]
      %v1037 = vld [vmem:[%s1028 + $0x20] sm:$0xf]
      %v1038 = vld [vmem:[%s1028 + $0x24] sm:$0xf]
      %v1039 = vld [vmem:[%s1028 + $0x28] sm:$0xf]
      %v1040 = vld [vmem:[%s1028 + $0x2c] sm:$0xf]
      %v1041 = vld [vmem:[%s1028 + $0x30] sm:$0xf]
      %v1042 = vld [vmem:[%s1028 + $0x34] sm:$0xf]
      %v1043 = vld [vmem:[%s1028 + $0x38] sm:$0xf]
      %v1044 = vld [vmem:[%s1028 + $0x3c] sm:$0xf]
      %v1061 = vunpack.c.l.b16 %v1029
      %v1062 = vunpack.c.l.b16 %v1030
      %v1063 = vunpack.c.l.b16 %v1031
      %v1064 = vunpack.c.l.b16 %v1032
      %v1065 = vunpack.c.l.b16 %v1033
      %v1066 = vunpack.c.l.b16 %v1034
      %v1067 = vunpack.c.l.b16 %v1035
      %v1068 = vunpack.c.l.b16 %v1036
      %v1069 = vunpack.c.l.b16 %v1037
      %v1070 = vunpack.c.l.b16 %v1038
      %v1071 = vunpack.c.l.b16 %v1039
      %v1072 = vunpack.c.l.b16 %v1040
      %v1073 = vunpack.c.l.b16 %v1041
      %v1074 = vunpack.c.l.b16 %v1042
      %v1075 = vunpack.c.l.b16 %v1043
      %v1076 = vunpack.c.l.b16 %v1044
      %v1077 = vpack.c.b16 %v1062, %v1061
      %v1078 = vpack.c.b16 %v1064, %v1063
      %v1079 = vpack.c.b16 %v1066, %v1065
      %v1080 = vpack.c.b16 %v1068, %v1067
      %v1081 = vpack.c.b16 %v1070, %v1069
      %v1082 = vpack.c.b16 %v1072, %v1071
      %v1083 = vpack.c.b16 %v1074, %v1073
      %v1084 = vpack.c.b16 %v1076, %v1075
      %1093 = vmatprep.subr.bf16.mxu0 0
      %1094 = vmatpush1.bf16.msra.mxu0 %v1077
      %1095 = vmatprep.subr.bf16.mxu0 0
      %1096 = vmatpush1.bf16.msra.mxu0 %v1078
      %1097 = vmatprep.subr.bf16.mxu0 0
      %1098 = vmatpush1.bf16.msra.mxu0 %v1079
      %1099 = vmatprep.subr.bf16.mxu0 0
      %1100 = vmatpush1.bf16.msra.mxu0 %v1080
      %1101 = vmatprep.subr.bf16.mxu0 0
      %1102 = vmatpush1.bf16.msra.mxu0 %v1081
      %1103 = vmatprep.subr.bf16.mxu0 0
      %1104 = vmatpush1.bf16.msra.mxu0 %v1082
      %1105 = vmatprep.subr.bf16.mxu0 0
      %1106 = vmatpush1.bf16.msra.mxu0 %v1083
      %1107 = vmatprep.subr.bf16.mxu0 0
      %1108 = vmatpush1.bf16.msra.mxu0 %v1084
      %1109 = vmatprep.subr.bf16.mxu0 0
      %1110 = vmatpush1.bf16.msra.mxu0 0
      %1111 = vmatprep.subr.bf16.mxu0 0
      %1112 = vmatpush1.bf16.msra.mxu0 0
      %1113 = vmatprep.subr.bf16.mxu0 0
      %1114 = vmatpush1.bf16.msra.mxu0 0
      %1115 = vmatprep.subr.bf16.mxu0 0
      %1116 = vmatpush1.bf16.msra.mxu0 0
      %1117 = vmatprep.subr.bf16.mxu0 0
      %1118 = vmatpush1.bf16.msra.mxu0 0
      %1119 = vmatprep.subr.bf16.mxu0 0
      %1120 = vmatpush1.bf16.msra.mxu0 0
      %1121 = vmatprep.subr.bf16.mxu0 0
      %1122 = vmatpush1.bf16.msra.mxu0 0
      %1123 = vmatprep.subr.bf16.mxu0 0
      %1124 = vmatpush1.bf16.msra.mxu0 0
      %1125 = vmatprep.mubr.bf16.mxu0 0
      %1126 = vmatmul.mubr.bf16.gmra.mrb[0].mxu0 %v1012
      %v1127 = vpop.f32.mrb[0].mxu0
      %v1128 = vadd.f32 0.0, %v1127
      %v1129 = vpop.f32.mrb[0].mxu0
      %v1130 = vpop.f32.mrb[0].mxu0
      %v1131 = vadd.f32 0.0, %v1130
      %v1132 = vpop.f32.mrb[0].mxu0
      %1133 = vmatprep.mubr.bf16.mxu0 0
      %1134 = vmatmul.mubr.bf16.gmra.mrb[0].mxu0 %v1013
      %v1135 = vpop.f32.mrb[0].mxu0
      %v1136 = vadd.f32 0.0, %v1135
      %v1137 = vpop.f32.mrb[0].mxu0
      %v1138 = vpop.f32.mrb[0].mxu0
      %v1139 = vadd.f32 0.0, %v1138
      %v1140 = vpop.f32.mrb[0].mxu0
      %1141 = vmatprep.mubr.bf16.mxu0 0
      %1142 = vmatmul.mubr.bf16.gmra.mrb[0].mxu0 %v1014
      %v1143 = vpop.f32.mrb[0].mxu0
      %v1144 = vadd.f32 0.0, %v1143
      %v1145 = vpop.f32.mrb[0].mxu0
      %v1146 = vpop.f32.mrb[0].mxu0
      %v1147 = vadd.f32 0.0, %v1146
      %v1148 = vpop.f32.mrb[0].mxu0
      %1149 = vmatprep.mubr.bf16.mxu0 0
      %1150 = vmatmul.mubr.bf16.gmra.mrb[0].mxu0 %v1015
      %v1151 = vpop.f32.mrb[0].mxu0
      %v1152 = vadd.f32 0.0, %v1151
      %v1153 = vpop.f32.mrb[0].mxu0
      %v1154 = vpop.f32.mrb[0].mxu0
      %v1155 = vadd.f32 0.0, %v1154
      %v1156 = vpop.f32.mrb[0].mxu0
      %1157 = vmatprep.mubr.bf16.mxu0 0
      %1158 = vmatmul.mubr.bf16.gmra.mrb[0].mxu0 %v1016
      %v1159 = vpop.f32.mrb[0].mxu0
      %v1160 = vadd.f32 0.0, %v1159
      %v1161 = vpop.f32.mrb[0].mxu0
      %v1162 = vpop.f32.mrb[0].mxu0
      %v1163 = vadd.f32 0.0, %v1162
      %v1164 = vpop.f32.mrb[0].mxu0
      %1165 = vmatprep.mubr.bf16.mxu0 0
      %1166 = vmatmul.mubr.bf16.gmra.mrb[0].mxu0 %v1017
      %v1167 = vpop.f32.mrb[0].mxu0
      %v1168 = vadd.f32 0.0, %v1167
      %v1169 = vpop.f32.mrb[0].mxu0
      %v1170 = vpop.f32.mrb[0].mxu0
      %v1171 = vadd.f32 0.0, %v1170
      %v1172 = vpop.f32.mrb[0].mxu0
      %1173 = vmatprep.mubr.bf16.mxu0 0
      %1174 = vmatmul.mubr.bf16.gmra.mrb[0].mxu0 %v1018
      %v1175 = vpop.f32.mrb[0].mxu0
      %v1176 = vadd.f32 0.0, %v1175
      %v1177 = vpop.f32.mrb[0].mxu0
      %v1178 = vpop.f32.mrb[0].mxu0
      %v1179 = vadd.f32 0.0, %v1178
      %v1180 = vpop.f32.mrb[0].mxu0
      %1181 = vmatprep.mubr.bf16.mxu0 0
      %1182 = vmatmul.mubr.bf16.gmra.mrb[0].mxu0 %v1019
      %v1183 = vpop.f32.mrb[0].mxu0
      %v1184 = vadd.f32 0.0, %v1183
      %v1185 = vpop.f32.mrb[0].mxu0
      %v1186 = vpop.f32.mrb[0].mxu0
      %v1187 = vadd.f32 0.0, %v1186
      %v1188 = vpop.f32.mrb[0].mxu0
      %1189 = vmatprep.mubr.bf16.mxu0 0
      %1190 = vmatmul.mubr.bf16.gmra.mrb[0].mxu0 %v1020
      %v1191 = vpop.f32.mrb[0].mxu0
      %v1192 = vadd.f32 0.0, %v1191
      %v1193 = vpop.f32.mrb[0].mxu0
      %v1194 = vpop.f32.mrb[0].mxu0
      %v1195 = vadd.f32 0.0, %v1194
      %v1196 = vpop.f32.mrb[0].mxu0
      %1197 = vmatprep.mubr.bf16.mxu0 0
      %1198 = vmatmul.mubr.bf16.gmra.mrb[0].mxu0 %v1021
      %v1199 = vpop.f32.mrb[0].mxu0
      %v1200 = vadd.f32 0.0, %v1199
      %v1201 = vpop.f32.mrb[0].mxu0
      %v1202 = vpop.f32.mrb[0].mxu0
      %v1203 = vadd.f32 0.0, %v1202
      %v1204 = vpop.f32.mrb[0].mxu0
      %1205 = vmatprep.mubr.bf16.mxu0 0
      %1206 = vmatmul.mubr.bf16.gmra.mrb[0].mxu0 %v1022
      %v1207 = vpop.f32.mrb[0].mxu0
      %v1208 = vadd.f32 0.0, %v1207
      %v1209 = vpop.f32.mrb[0].mxu0
      %v1210 = vpop.f32.mrb[0].mxu0
      %v1211 = vadd.f32 0.0, %v1210
      %v1212 = vpop.f32.mrb[0].mxu0
      %1213 = vmatprep.mubr.bf16.mxu0 0
      %1214 = vmatmul.mubr.bf16.gmra.mrb[0].mxu0 %v1023
      %v1215 = vpop.f32.mrb[0].mxu0
      %v1216 = vadd.f32 0.0, %v1215
      %v1217 = vpop.f32.mrb[0].mxu0
      %v1218 = vpop.f32.mrb[0].mxu0
      %v1219 = vadd.f32 0.0, %v1218
      %v1220 = vpop.f32.mrb[0].mxu0
      %1221 = vmatprep.mubr.bf16.mxu0 0
      %1222 = vmatmul.mubr.bf16.gmra.mrb[0].mxu0 %v1024
      %v1223 = vpop.f32.mrb[0].mxu0
      %v1224 = vadd.f32 0.0, %v1223
      %v1225 = vpop.f32.mrb[0].mxu0
      %v1226 = vpop.f32.mrb[0].mxu0
      %v1227 = vadd.f32 0.0, %v1226
      %v1228 = vpop.f32.mrb[0].mxu0
      %1229 = vmatprep.mubr.bf16.mxu0 0
      %1230 = vmatmul.mubr.bf16.gmra.mrb[0].mxu0 %v1025
      %v1231 = vpop.f32.mrb[0].mxu0
      %v1232 = vadd.f32 0.0, %v1231
      %v1233 = vpop.f32.mrb[0].mxu0
      %v1234 = vpop.f32.mrb[0].mxu0
      %v1235 = vadd.f32 0.0, %v1234
      %v1236 = vpop.f32.mrb[0].mxu0
      %1237 = vmatprep.mubr.bf16.mxu0 0
      %1238 = vmatmul.mubr.bf16.gmra.mrb[0].mxu0 %v1026
      %v1239 = vpop.f32.mrb[0].mxu0
      %v1240 = vadd.f32 0.0, %v1239
      %v1241 = vpop.f32.mrb[0].mxu0
      %v1242 = vpop.f32.mrb[0].mxu0
      %v1243 = vadd.f32 0.0, %v1242
      %v1244 = vpop.f32.mrb[0].mxu0
      %1245 = vmatprep.mubr.bf16.mxu0 0
      %1246 = vmatmul.mubr.bf16.gmra.mrb[0].mxu0 %v1027
      %v1247 = vpop.f32.mrb[0].mxu0
      %v1248 = vadd.f32 0.0, %v1247
      %v1249 = vpop.f32.mrb[0].mxu0
      %v1250 = vpop.f32.mrb[0].mxu0
      %v1251 = vadd.f32 0.0, %v1250
      %v1252 = vpop.f32.mrb[0].mxu0
      %1253 = vdwg.mxu0
      %v1254 = vld [vmem:[%s226] sm:$0xff]
      %v1255 = vld [vmem:[%s226 + $0x8] sm:$0xff]
      %v1256 = vld [vmem:[%s226 + $0x10] sm:$0xff]
      %v1257 = vld [vmem:[%s226 + $0x18] sm:$0xff]
      %v1258 = vld [vmem:[%s226 + $0x20] sm:$0xff]
      %v1259 = vld [vmem:[%s226 + $0x28] sm:$0xff]
      %v1260 = vld [vmem:[%s226 + $0x30] sm:$0xff]
      %v1261 = vld [vmem:[%s226 + $0x38] sm:$0xff]
      %v1262 = vld [vmem:[%s226 + $0x40] sm:$0xff]
      %v1263 = vld [vmem:[%s226 + $0x48] sm:$0xff]
      %v1264 = vld [vmem:[%s226 + $0x50] sm:$0xff]
      %v1265 = vld [vmem:[%s226 + $0x58] sm:$0xff]
      %v1266 = vld [vmem:[%s226 + $0x60] sm:$0xff]
      %v1267 = vld [vmem:[%s226 + $0x68] sm:$0xff]
      %v1268 = vld [vmem:[%s226 + $0x70] sm:$0xff]
      %v1269 = vld [vmem:[%s226 + $0x78] sm:$0xff]
      %v1270 = vld [vmem:[%s226 + $0x80] sm:$0xff]
      %v1271 = vld [vmem:[%s226 + $0x88] sm:$0xff]
      %v1272 = vld [vmem:[%s226 + $0x90] sm:$0xff]
      %v1273 = vld [vmem:[%s226 + $0x98] sm:$0xff]
      %v1274 = vld [vmem:[%s226 + $0xa0] sm:$0xff]
      %v1275 = vld [vmem:[%s226 + $0xa8] sm:$0xff]
      %v1276 = vld [vmem:[%s226 + $0xb0] sm:$0xff]
      %v1277 = vld [vmem:[%s226 + $0xb8] sm:$0xff]
      %v1278 = vld [vmem:[%s226 + $0xc0] sm:$0xff]
      %v1279 = vld [vmem:[%s226 + $0xc8] sm:$0xff]
      %v1280 = vld [vmem:[%s226 + $0xd0] sm:$0xff]
      %v1281 = vld [vmem:[%s226 + $0xd8] sm:$0xff]
      %v1282 = vld [vmem:[%s226 + $0xe0] sm:$0xff]
      %v1283 = vld [vmem:[%s226 + $0xe8] sm:$0xff]
      %v1284 = vld [vmem:[%s226 + $0xf0] sm:$0xff]
      %v1285 = vld [vmem:[%s226 + $0xf8] sm:$0xff]
      %v1286 = vadd.f32 %v1254, %v1128
      %v1287 = vadd.f32 %v1255, %v1131
      %v1288 = vadd.f32 %v1256, %v1136
      %v1289 = vadd.f32 %v1257, %v1139
      %v1290 = vadd.f32 %v1258, %v1144
      %v1291 = vadd.f32 %v1259, %v1147
      %v1292 = vadd.f32 %v1260, %v1152
      %v1293 = vadd.f32 %v1261, %v1155
      %v1294 = vadd.f32 %v1262, %v1160
      %v1295 = vadd.f32 %v1263, %v1163
      %v1296 = vadd.f32 %v1264, %v1168
      %v1297 = vadd.f32 %v1265, %v1171
      %v1298 = vadd.f32 %v1266, %v1176
      %v1299 = vadd.f32 %v1267, %v1179
      %v1300 = vadd.f32 %v1268, %v1184
      %v1301 = vadd.f32 %v1269, %v1187
      %v1302 = vadd.f32 %v1270, %v1192
      %v1303 = vadd.f32 %v1271, %v1195
      %v1304 = vadd.f32 %v1272, %v1200
      %v1305 = vadd.f32 %v1273, %v1203
      %v1306 = vadd.f32 %v1274, %v1208
      %v1307 = vadd.f32 %v1275, %v1211
      %v1308 = vadd.f32 %v1276, %v1216
      %v1309 = vadd.f32 %v1277, %v1219
      %v1310 = vadd.f32 %v1278, %v1224
      %v1311 = vadd.f32 %v1279, %v1227
      %v1312 = vadd.f32 %v1280, %v1232
      %v1313 = vadd.f32 %v1281, %v1235
      %v1314 = vadd.f32 %v1282, %v1240
      %v1315 = vadd.f32 %v1283, %v1243
      %v1316 = vadd.f32 %v1284, %v1248
      %v1317 = vadd.f32 %v1285, %v1251
      %1318 = vst [vmem:[%s226] sm:$0xff] %v1286
      %1319 = vst [vmem:[%s226 + $0x8] sm:$0xff] %v1287
      %1320 = vst [vmem:[%s226 + $0x10] sm:$0xff] %v1288
      %1321 = vst [vmem:[%s226 + $0x18] sm:$0xff] %v1289
      %1322 = vst [vmem:[%s226 + $0x20] sm:$0xff] %v1290
      %1323 = vst [vmem:[%s226 + $0x28] sm:$0xff] %v1291
      %1324 = vst [vmem:[%s226 + $0x30] sm:$0xff] %v1292
      %1325 = vst [vmem:[%s226 + $0x38] sm:$0xff] %v1293
      %1326 = vst [vmem:[%s226 + $0x40] sm:$0xff] %v1294
      %1327 = vst [vmem:[%s226 + $0x48] sm:$0xff] %v1295
      %1328 = vst [vmem:[%s226 + $0x50] sm:$0xff] %v1296
      %1329 = vst [vmem:[%s226 + $0x58] sm:$0xff] %v1297
      %1330 = vst [vmem:[%s226 + $0x60] sm:$0xff] %v1298
      %1331 = vst [vmem:[%s226 + $0x68] sm:$0xff] %v1299
      %1332 = vst [vmem:[%s226 + $0x70] sm:$0xff] %v1300
      %1333 = vst [vmem:[%s226 + $0x78] sm:$0xff] %v1301
      %1334 = vst [vmem:[%s226 + $0x80] sm:$0xff] %v1302
      %1335 = vst [vmem:[%s226 + $0x88] sm:$0xff] %v1303
      %1336 = vst [vmem:[%s226 + $0x90] sm:$0xff] %v1304
      %1337 = vst [vmem:[%s226 + $0x98] sm:$0xff] %v1305
      %1338 = vst [vmem:[%s226 + $0xa0] sm:$0xff] %v1306
      %1339 = vst [vmem:[%s226 + $0xa8] sm:$0xff] %v1307
      %1340 = vst [vmem:[%s226 + $0xb0] sm:$0xff] %v1308
      %1341 = vst [vmem:[%s226 + $0xb8] sm:$0xff] %v1309
      %1342 = vst [vmem:[%s226 + $0xc0] sm:$0xff] %v1310
      %1343 = vst [vmem:[%s226 + $0xc8] sm:$0xff] %v1311
      %1344 = vst [vmem:[%s226 + $0xd0] sm:$0xff] %v1312
      %1345 = vst [vmem:[%s226 + $0xd8] sm:$0xff] %v1313
      %1346 = vst [vmem:[%s226 + $0xe0] sm:$0xff] %v1314
      %1347 = vst [vmem:[%s226 + $0xe8] sm:$0xff] %v1315
      %1348 = vst [vmem:[%s226 + $0xf0] sm:$0xff] %v1316
      %1349 = vst [vmem:[%s226 + $0xf8] sm:$0xff] %v1317
      %v1350 = vld [vmem:[#allocation2 + $0x9] sm:$0xff]
      %v1351 = vld [vmem:[#allocation2 + $0x11] sm:$0xff]
      %v1352 = vld [vmem:[#allocation2 + $0x29] sm:$0xff]
      %v1353 = vld [vmem:[#allocation2 + $0x31] sm:$0xff]
      %v1354 = vld [vmem:[#allocation2 + $0x49] sm:$0xff]
      %v1355 = vld [vmem:[#allocation2 + $0x51] sm:$0xff]
      %v1356 = vld [vmem:[#allocation2 + $0x69] sm:$0xff]
      %v1357 = vld [vmem:[#allocation2 + $0x71] sm:$0xff]
      %v1358 = vld [vmem:[#allocation2 + $0x89] sm:$0xff]
      %v1359 = vld [vmem:[#allocation2 + $0x91] sm:$0xff]
      %v1360 = vld [vmem:[#allocation2 + $0xa9] sm:$0xff]
      %v1361 = vld [vmem:[#allocation2 + $0xb1] sm:$0xff]
      %v1362 = vld [vmem:[#allocation2 + $0xc9] sm:$0xff]
      %v1363 = vld [vmem:[#allocation2 + $0xd1] sm:$0xff]
      %v1364 = vld [vmem:[#allocation2 + $0xe9] sm:$0xff]
      %v1365 = vld [vmem:[#allocation2 + $0xf1] sm:$0xff]
      %v1366 = vld [vmem:[#allocation2 + $0x109] sm:$0xff]
      %v1367 = vld [vmem:[#allocation2 + $0x111] sm:$0xff]
      %v1368 = vld [vmem:[#allocation2 + $0x129] sm:$0xff]
      %v1369 = vld [vmem:[#allocation2 + $0x131] sm:$0xff]
      %v1370 = vld [vmem:[#allocation2 + $0x149] sm:$0xff]
      %v1371 = vld [vmem:[#allocation2 + $0x151] sm:$0xff]
      %v1372 = vld [vmem:[#allocation2 + $0x169] sm:$0xff]
      %v1373 = vld [vmem:[#allocation2 + $0x171] sm:$0xff]
      %v1374 = vld [vmem:[#allocation2 + $0x189] sm:$0xff]
      %v1375 = vld [vmem:[#allocation2 + $0x191] sm:$0xff]
      %v1376 = vld [vmem:[#allocation2 + $0x1a9] sm:$0xff]
      %v1377 = vld [vmem:[#allocation2 + $0x1b1] sm:$0xff]
      %v1378 = vld [vmem:[#allocation2 + $0x1c9] sm:$0xff]
      %v1379 = vld [vmem:[#allocation2 + $0x1d1] sm:$0xff]
      %v1380 = vld [vmem:[#allocation2 + $0x1e9] sm:$0xff]
      %v1381 = vld [vmem:[#allocation2 + $0x1f1] sm:$0xff]
      %v1382 = vpack.c.bf16 %v1351, %v1350
      %v1383 = vpack.c.bf16 %v1353, %v1352
      %v1384 = vpack.c.bf16 %v1355, %v1354
      %v1385 = vpack.c.bf16 %v1357, %v1356
      %v1386 = vpack.c.bf16 %v1359, %v1358
      %v1387 = vpack.c.bf16 %v1361, %v1360
      %v1388 = vpack.c.bf16 %v1363, %v1362
      %v1389 = vpack.c.bf16 %v1365, %v1364
      %v1390 = vpack.c.bf16 %v1367, %v1366
      %v1391 = vpack.c.bf16 %v1369, %v1368
      %v1392 = vpack.c.bf16 %v1371, %v1370
      %v1393 = vpack.c.bf16 %v1373, %v1372
      %v1394 = vpack.c.bf16 %v1375, %v1374
      %v1395 = vpack.c.bf16 %v1377, %v1376
      %v1396 = vpack.c.bf16 %v1379, %v1378
      %v1397 = vpack.c.bf16 %v1381, %v1380
      %s1398 = scalar_lea.vmem %s3, 128
      %v1399 = vld [vmem:[%s1398] sm:$0xf]
      %v1400 = vld [vmem:[%s1398 + $0x4] sm:$0xf]
      %v1401 = vld [vmem:[%s1398 + $0x8] sm:$0xf]
      %v1402 = vld [vmem:[%s1398 + $0xc] sm:$0xf]
      %v1403 = vld [vmem:[%s1398 + $0x10] sm:$0xf]
      %v1404 = vld [vmem:[%s1398 + $0x14] sm:$0xf]
      %v1405 = vld [vmem:[%s1398 + $0x18] sm:$0xf]
      %v1406 = vld [vmem:[%s1398 + $0x1c] sm:$0xf]
      %v1407 = vld [vmem:[%s1398 + $0x20] sm:$0xf]
      %v1408 = vld [vmem:[%s1398 + $0x24] sm:$0xf]
      %v1409 = vld [vmem:[%s1398 + $0x28] sm:$0xf]
      %v1410 = vld [vmem:[%s1398 + $0x2c] sm:$0xf]
      %v1411 = vld [vmem:[%s1398 + $0x30] sm:$0xf]
      %v1412 = vld [vmem:[%s1398 + $0x34] sm:$0xf]
      %v1413 = vld [vmem:[%s1398 + $0x38] sm:$0xf]
      %v1414 = vld [vmem:[%s1398 + $0x3c] sm:$0xf]
      %v1431 = vunpack.c.l.b16 %v1399
      %v1432 = vunpack.c.l.b16 %v1400
      %v1433 = vunpack.c.l.b16 %v1401
      %v1434 = vunpack.c.l.b16 %v1402
      %v1435 = vunpack.c.l.b16 %v1403
      %v1436 = vunpack.c.l.b16 %v1404
      %v1437 = vunpack.c.l.b16 %v1405
      %v1438 = vunpack.c.l.b16 %v1406
      %v1439 = vunpack.c.l.b16 %v1407
      %v1440 = vunpack.c.l.b16 %v1408
      %v1441 = vunpack.c.l.b16 %v1409
      %v1442 = vunpack.c.l.b16 %v1410
      %v1443 = vunpack.c.l.b16 %v1411
      %v1444 = vunpack.c.l.b16 %v1412
      %v1445 = vunpack.c.l.b16 %v1413
      %v1446 = vunpack.c.l.b16 %v1414
      %v1447 = vpack.c.b16 %v1432, %v1431
      %v1448 = vpack.c.b16 %v1434, %v1433
      %v1449 = vpack.c.b16 %v1436, %v1435
      %v1450 = vpack.c.b16 %v1438, %v1437
      %v1451 = vpack.c.b16 %v1440, %v1439
      %v1452 = vpack.c.b16 %v1442, %v1441
      %v1453 = vpack.c.b16 %v1444, %v1443
      %v1454 = vpack.c.b16 %v1446, %v1445
      %1463 = vmatprep.subr.bf16.mxu0 0
      %1464 = vmatpush1.bf16.msra.mxu0 %v1447
      %1465 = vmatprep.subr.bf16.mxu0 0
      %1466 = vmatpush1.bf16.msra.mxu0 %v1448
      %1467 = vmatprep.subr.bf16.mxu0 0
      %1468 = vmatpush1.bf16.msra.mxu0 %v1449
      %1469 = vmatprep.subr.bf16.mxu0 0
      %1470 = vmatpush1.bf16.msra.mxu0 %v1450
      %1471 = vmatprep.subr.bf16.mxu0 0
      %1472 = vmatpush1.bf16.msra.mxu0 %v1451
      %1473 = vmatprep.subr.bf16.mxu0 0
      %1474 = vmatpush1.bf16.msra.mxu0 %v1452
      %1475 = vmatprep.subr.bf16.mxu0 0
      %1476 = vmatpush1.bf16.msra.mxu0 %v1453
      %1477 = vmatprep.subr.bf16.mxu0 0
      %1478 = vmatpush1.bf16.msra.mxu0 %v1454
      %1479 = vmatprep.subr.bf16.mxu0 0
      %1480 = vmatpush1.bf16.msra.mxu0 0
      %1481 = vmatprep.subr.bf16.mxu0 0
      %1482 = vmatpush1.bf16.msra.mxu0 0
      %1483 = vmatprep.subr.bf16.mxu0 0
      %1484 = vmatpush1.bf16.msra.mxu0 0
      %1485 = vmatprep.subr.bf16.mxu0 0
      %1486 = vmatpush1.bf16.msra.mxu0 0
      %1487 = vmatprep.subr.bf16.mxu0 0
      %1488 = vmatpush1.bf16.msra.mxu0 0
      %1489 = vmatprep.subr.bf16.mxu0 0
      %1490 = vmatpush1.bf16.msra.mxu0 0
      %1491 = vmatprep.subr.bf16.mxu0 0
      %1492 = vmatpush1.bf16.msra.mxu0 0
      %1493 = vmatprep.subr.bf16.mxu0 0
      %1494 = vmatpush1.bf16.msra.mxu0 0
      %1495 = vmatprep.mubr.bf16.mxu0 0
      %1496 = vmatmul.mubr.bf16.gmra.mrb[0].mxu0 %v1382
      %v1497 = vpop.f32.mrb[0].mxu0
      %v1498 = vadd.f32 0.0, %v1497
      %v1499 = vpop.f32.mrb[0].mxu0
      %v1500 = vpop.f32.mrb[0].mxu0
      %v1501 = vadd.f32 0.0, %v1500
      %v1502 = vpop.f32.mrb[0].mxu0
      %1503 = vmatprep.mubr.bf16.mxu0 0
      %1504 = vmatmul.mubr.bf16.gmra.mrb[0].mxu0 %v1383
      %v1505 = vpop.f32.mrb[0].mxu0
      %v1506 = vadd.f32 0.0, %v1505
      %v1507 = vpop.f32.mrb[0].mxu0
      %v1508 = vpop.f32.mrb[0].mxu0
      %v1509 = vadd.f32 0.0, %v1508
      %v1510 = vpop.f32.mrb[0].mxu0
      %1511 = vmatprep.mubr.bf16.mxu0 0
      %1512 = vmatmul.mubr.bf16.gmra.mrb[0].mxu0 %v1384
      %v1513 = vpop.f32.mrb[0].mxu0
      %v1514 = vadd.f32 0.0, %v1513
      %v1515 = vpop.f32.mrb[0].mxu0
      %v1516 = vpop.f32.mrb[0].mxu0
      %v1517 = vadd.f32 0.0, %v1516
      %v1518 = vpop.f32.mrb[0].mxu0
      %1519 = vmatprep.mubr.bf16.mxu0 0
      %1520 = vmatmul.mubr.bf16.gmra.mrb[0].mxu0 %v1385
      %v1521 = vpop.f32.mrb[0].mxu0
      %v1522 = vadd.f32 0.0, %v1521
      %v1523 = vpop.f32.mrb[0].mxu0
      %v1524 = vpop.f32.mrb[0].mxu0
      %v1525 = vadd.f32 0.0, %v1524
      %v1526 = vpop.f32.mrb[0].mxu0
      %1527 = vmatprep.mubr.bf16.mxu0 0
      %1528 = vmatmul.mubr.bf16.gmra.mrb[0].mxu0 %v1386
      %v1529 = vpop.f32.mrb[0].mxu0
      %v1530 = vadd.f32 0.0, %v1529
      %v1531 = vpop.f32.mrb[0].mxu0
      %v1532 = vpop.f32.mrb[0].mxu0
      %v1533 = vadd.f32 0.0, %v1532
      %v1534 = vpop.f32.mrb[0].mxu0
      %1535 = vmatprep.mubr.bf16.mxu0 0
      %1536 = vmatmul.mubr.bf16.gmra.mrb[0].mxu0 %v1387
      %v1537 = vpop.f32.mrb[0].mxu0
      %v1538 = vadd.f32 0.0, %v1537
      %v1539 = vpop.f32.mrb[0].mxu0
      %v1540 = vpop.f32.mrb[0].mxu0
      %v1541 = vadd.f32 0.0, %v1540
      %v1542 = vpop.f32.mrb[0].mxu0
      %1543 = vmatprep.mubr.bf16.mxu0 0
      %1544 = vmatmul.mubr.bf16.gmra.mrb[0].mxu0 %v1388
      %v1545 = vpop.f32.mrb[0].mxu0
      %v1546 = vadd.f32 0.0, %v1545
      %v1547 = vpop.f32.mrb[0].mxu0
      %v1548 = vpop.f32.mrb[0].mxu0
      %v1549 = vadd.f32 0.0, %v1548
      %v1550 = vpop.f32.mrb[0].mxu0
      %1551 = vmatprep.mubr.bf16.mxu0 0
      %1552 = vmatmul.mubr.bf16.gmra.mrb[0].mxu0 %v1389
      %v1553 = vpop.f32.mrb[0].mxu0
      %v1554 = vadd.f32 0.0, %v1553
      %v1555 = vpop.f32.mrb[0].mxu0
      %v1556 = vpop.f32.mrb[0].mxu0
      %v1557 = vadd.f32 0.0, %v1556
      %v1558 = vpop.f32.mrb[0].mxu0
      %1559 = vmatprep.mubr.bf16.mxu0 0
      %1560 = vmatmul.mubr.bf16.gmra.mrb[0].mxu0 %v1390
      %v1561 = vpop.f32.mrb[0].mxu0
      %v1562 = vadd.f32 0.0, %v1561
      %v1563 = vpop.f32.mrb[0].mxu0
      %v1564 = vpop.f32.mrb[0].mxu0
      %v1565 = vadd.f32 0.0, %v1564
      %v1566 = vpop.f32.mrb[0].mxu0
      %1567 = vmatprep.mubr.bf16.mxu0 0
      %1568 = vmatmul.mubr.bf16.gmra.mrb[0].mxu0 %v1391
      %v1569 = vpop.f32.mrb[0].mxu0
      %v1570 = vadd.f32 0.0, %v1569
      %v1571 = vpop.f32.mrb[0].mxu0
      %v1572 = vpop.f32.mrb[0].mxu0
      %v1573 = vadd.f32 0.0, %v1572
      %v1574 = vpop.f32.mrb[0].mxu0
      %1575 = vmatprep.mubr.bf16.mxu0 0
      %1576 = vmatmul.mubr.bf16.gmra.mrb[0].mxu0 %v1392
      %v1577 = vpop.f32.mrb[0].mxu0
      %v1578 = vadd.f32 0.0, %v1577
      %v1579 = vpop.f32.mrb[0].mxu0
      %v1580 = vpop.f32.mrb[0].mxu0
      %v1581 = vadd.f32 0.0, %v1580
      %v1582 = vpop.f32.mrb[0].mxu0
      %1583 = vmatprep.mubr.bf16.mxu0 0
      %1584 = vmatmul.mubr.bf16.gmra.mrb[0].mxu0 %v1393
      %v1585 = vpop.f32.mrb[0].mxu0
      %v1586 = vadd.f32 0.0, %v1585
      %v1587 = vpop.f32.mrb[0].mxu0
      %v1588 = vpop.f32.mrb[0].mxu0
      %v1589 = vadd.f32 0.0, %v1588
      %v1590 = vpop.f32.mrb[0].mxu0
      %1591 = vmatprep.mubr.bf16.mxu0 0
      %1592 = vmatmul.mubr.bf16.gmra.mrb[0].mxu0 %v1394
      %v1593 = vpop.f32.mrb[0].mxu0
      %v1594 = vadd.f32 0.0, %v1593
      %v1595 = vpop.f32.mrb[0].mxu0
      %v1596 = vpop.f32.mrb[0].mxu0
      %v1597 = vadd.f32 0.0, %v1596
      %v1598 = vpop.f32.mrb[0].mxu0
      %1599 = vmatprep.mubr.bf16.mxu0 0
      %1600 = vmatmul.mubr.bf16.gmra.mrb[0].mxu0 %v1395
      %v1601 = vpop.f32.mrb[0].mxu0
      %v1602 = vadd.f32 0.0, %v1601
      %v1603 = vpop.f32.mrb[0].mxu0
      %v1604 = vpop.f32.mrb[0].mxu0
      %v1605 = vadd.f32 0.0, %v1604
      %v1606 = vpop.f32.mrb[0].mxu0
      %1607 = vmatprep.mubr.bf16.mxu0 0
      %1608 = vmatmul.mubr.bf16.gmra.mrb[0].mxu0 %v1396
      %v1609 = vpop.f32.mrb[0].mxu0
      %v1610 = vadd.f32 0.0, %v1609
      %v1611 = vpop.f32.mrb[0].mxu0
      %v1612 = vpop.f32.mrb[0].mxu0
      %v1613 = vadd.f32 0.0, %v1612
      %v1614 = vpop.f32.mrb[0].mxu0
      %1615 = vmatprep.mubr.bf16.mxu0 0
      %1616 = vmatmul.mubr.bf16.gmra.mrb[0].mxu0 %v1397
      %v1617 = vpop.f32.mrb[0].mxu0
      %v1618 = vadd.f32 0.0, %v1617
      %v1619 = vpop.f32.mrb[0].mxu0
      %v1620 = vpop.f32.mrb[0].mxu0
      %v1621 = vadd.f32 0.0, %v1620
      %v1622 = vpop.f32.mrb[0].mxu0
      %1623 = vdwg.mxu0
      %v1624 = vld [vmem:[%s226] sm:$0xff]
      %v1625 = vld [vmem:[%s226 + $0x8] sm:$0xff]
      %v1626 = vld [vmem:[%s226 + $0x10] sm:$0xff]
      %v1627 = vld [vmem:[%s226 + $0x18] sm:$0xff]
      %v1628 = vld [vmem:[%s226 + $0x20] sm:$0xff]
      %v1629 = vld [vmem:[%s226 + $0x28] sm:$0xff]
      %v1630 = vld [vmem:[%s226 + $0x30] sm:$0xff]
      %v1631 = vld [vmem:[%s226 + $0x38] sm:$0xff]
      %v1632 = vld [vmem:[%s226 + $0x40] sm:$0xff]
      %v1633 = vld [vmem:[%s226 + $0x48] sm:$0xff]
      %v1634 = vld [vmem:[%s226 + $0x50] sm:$0xff]
      %v1635 = vld [vmem:[%s226 + $0x58] sm:$0xff]
      %v1636 = vld [vmem:[%s226 + $0x60] sm:$0xff]
      %v1637 = vld [vmem:[%s226 + $0x68] sm:$0xff]
      %v1638 = vld [vmem:[%s226 + $0x70] sm:$0xff]
      %v1639 = vld [vmem:[%s226 + $0x78] sm:$0xff]
      %v1640 = vld [vmem:[%s226 + $0x80] sm:$0xff]
      %v1641 = vld [vmem:[%s226 + $0x88] sm:$0xff]
      %v1642 = vld [vmem:[%s226 + $0x90] sm:$0xff]
      %v1643 = vld [vmem:[%s226 + $0x98] sm:$0xff]
      %v1644 = vld [vmem:[%s226 + $0xa0] sm:$0xff]
      %v1645 = vld [vmem:[%s226 + $0xa8] sm:$0xff]
      %v1646 = vld [vmem:[%s226 + $0xb0] sm:$0xff]
      %v1647 = vld [vmem:[%s226 + $0xb8] sm:$0xff]
      %v1648 = vld [vmem:[%s226 + $0xc0] sm:$0xff]
      %v1649 = vld [vmem:[%s226 + $0xc8] sm:$0xff]
      %v1650 = vld [vmem:[%s226 + $0xd0] sm:$0xff]
      %v1651 = vld [vmem:[%s226 + $0xd8] sm:$0xff]
      %v1652 = vld [vmem:[%s226 + $0xe0] sm:$0xff]
      %v1653 = vld [vmem:[%s226 + $0xe8] sm:$0xff]
      %v1654 = vld [vmem:[%s226 + $0xf0] sm:$0xff]
      %v1655 = vld [vmem:[%s226 + $0xf8] sm:$0xff]
      %v1656 = vadd.f32 %v1624, %v1498
      %v1657 = vadd.f32 %v1625, %v1501
      %v1658 = vadd.f32 %v1626, %v1506
      %v1659 = vadd.f32 %v1627, %v1509
      %v1660 = vadd.f32 %v1628, %v1514
      %v1661 = vadd.f32 %v1629, %v1517
      %v1662 = vadd.f32 %v1630, %v1522
      %v1663 = vadd.f32 %v1631, %v1525
      %v1664 = vadd.f32 %v1632, %v1530
      %v1665 = vadd.f32 %v1633, %v1533
      %v1666 = vadd.f32 %v1634, %v1538
      %v1667 = vadd.f32 %v1635, %v1541
      %v1668 = vadd.f32 %v1636, %v1546
      %v1669 = vadd.f32 %v1637, %v1549
      %v1670 = vadd.f32 %v1638, %v1554
      %v1671 = vadd.f32 %v1639, %v1557
      %v1672 = vadd.f32 %v1640, %v1562
      %v1673 = vadd.f32 %v1641, %v1565
      %v1674 = vadd.f32 %v1642, %v1570
      %v1675 = vadd.f32 %v1643, %v1573
      %v1676 = vadd.f32 %v1644, %v1578
      %v1677 = vadd.f32 %v1645, %v1581
      %v1678 = vadd.f32 %v1646, %v1586
      %v1679 = vadd.f32 %v1647, %v1589
      %v1680 = vadd.f32 %v1648, %v1594
      %v1681 = vadd.f32 %v1649, %v1597
      %v1682 = vadd.f32 %v1650, %v1602
      %v1683 = vadd.f32 %v1651, %v1605
      %v1684 = vadd.f32 %v1652, %v1610
      %v1685 = vadd.f32 %v1653, %v1613
      %v1686 = vadd.f32 %v1654, %v1618
      %v1687 = vadd.f32 %v1655, %v1621
      %1688 = vst [vmem:[%s226] sm:$0xff] %v1656
      %1689 = vst [vmem:[%s226 + $0x8] sm:$0xff] %v1657
      %1690 = vst [vmem:[%s226 + $0x10] sm:$0xff] %v1658
      %1691 = vst [vmem:[%s226 + $0x18] sm:$0xff] %v1659
      %1692 = vst [vmem:[%s226 + $0x20] sm:$0xff] %v1660
      %1693 = vst [vmem:[%s226 + $0x28] sm:$0xff] %v1661
      %1694 = vst [vmem:[%s226 + $0x30] sm:$0xff] %v1662
      %1695 = vst [vmem:[%s226 + $0x38] sm:$0xff] %v1663
      %1696 = vst [vmem:[%s226 + $0x40] sm:$0xff] %v1664
      %1697 = vst [vmem:[%s226 + $0x48] sm:$0xff] %v1665
      %1698 = vst [vmem:[%s226 + $0x50] sm:$0xff] %v1666
      %1699 = vst [vmem:[%s226 + $0x58] sm:$0xff] %v1667
      %1700 = vst [vmem:[%s226 + $0x60] sm:$0xff] %v1668
      %1701 = vst [vmem:[%s226 + $0x68] sm:$0xff] %v1669
      %1702 = vst [vmem:[%s226 + $0x70] sm:$0xff] %v1670
      %1703 = vst [vmem:[%s226 + $0x78] sm:$0xff] %v1671
      %1704 = vst [vmem:[%s226 + $0x80] sm:$0xff] %v1672
      %1705 = vst [vmem:[%s226 + $0x88] sm:$0xff] %v1673
      %1706 = vst [vmem:[%s226 + $0x90] sm:$0xff] %v1674
      %1707 = vst [vmem:[%s226 + $0x98] sm:$0xff] %v1675
      %1708 = vst [vmem:[%s226 + $0xa0] sm:$0xff] %v1676
      %1709 = vst [vmem:[%s226 + $0xa8] sm:$0xff] %v1677
      %1710 = vst [vmem:[%s226 + $0xb0] sm:$0xff] %v1678
      %1711 = vst [vmem:[%s226 + $0xb8] sm:$0xff] %v1679
      %1712 = vst [vmem:[%s226 + $0xc0] sm:$0xff] %v1680
      %1713 = vst [vmem:[%s226 + $0xc8] sm:$0xff] %v1681
      %1714 = vst [vmem:[%s226 + $0xd0] sm:$0xff] %v1682
      %1715 = vst [vmem:[%s226 + $0xd8] sm:$0xff] %v1683
      %1716 = vst [vmem:[%s226 + $0xe0] sm:$0xff] %v1684
      %1717 = vst [vmem:[%s226 + $0xe8] sm:$0xff] %v1685
      %1718 = vst [vmem:[%s226 + $0xf0] sm:$0xff] %v1686
      %1719 = vst [vmem:[%s226 + $0xf8] sm:$0xff] %v1687
      %v1720 = vld [vmem:[%s635 + $0x7] sm:$0xff]
      %v1721 = vld [vmem:[%s635 + $0xf] sm:$0xff]
      %v1722 = vld [vmem:[%s635 + $0x27] sm:$0xff]
      %v1723 = vld [vmem:[%s635 + $0x2f] sm:$0xff]
      %v1724 = vld [vmem:[%s635 + $0x47] sm:$0xff]
      %v1725 = vld [vmem:[%s635 + $0x4f] sm:$0xff]
      %v1726 = vld [vmem:[%s635 + $0x67] sm:$0xff]
      %v1727 = vld [vmem:[%s635 + $0x6f] sm:$0xff]
      %v1728 = vld [vmem:[%s635 + $0x87] sm:$0xff]
      %v1729 = vld [vmem:[%s635 + $0x8f] sm:$0xff]
      %v1730 = vld [vmem:[%s635 + $0xa7] sm:$0xff]
      %v1731 = vld [vmem:[%s635 + $0xaf] sm:$0xff]
      %v1732 = vld [vmem:[%s635 + $0xc7] sm:$0xff]
      %v1733 = vld [vmem:[%s635 + $0xcf] sm:$0xff]
      %v1734 = vld [vmem:[%s635 + $0xe7] sm:$0xff]
      %v1735 = vld [vmem:[%s635 + $0xef] sm:$0xff]
      %v1736 = vld [vmem:[%s635 + $0x107] sm:$0xff]
      %v1737 = vld [vmem:[%s635 + $0x10f] sm:$0xff]
      %v1738 = vld [vmem:[%s635 + $0x127] sm:$0xff]
      %v1739 = vld [vmem:[%s635 + $0x12f] sm:$0xff]
      %v1740 = vld [vmem:[%s635 + $0x147] sm:$0xff]
      %v1741 = vld [vmem:[%s635 + $0x14f] sm:$0xff]
      %v1742 = vld [vmem:[%s635 + $0x167] sm:$0xff]
      %v1743 = vld [vmem:[%s635 + $0x16f] sm:$0xff]
      %v1744 = vld [vmem:[%s635 + $0x187] sm:$0xff]
      %v1745 = vld [vmem:[%s635 + $0x18f] sm:$0xff]
      %v1746 = vld [vmem:[%s635 + $0x1a7] sm:$0xff]
      %v1747 = vld [vmem:[%s635 + $0x1af] sm:$0xff]
      %v1748 = vld [vmem:[%s635 + $0x1c7] sm:$0xff]
      %v1749 = vld [vmem:[%s635 + $0x1cf] sm:$0xff]
      %v1750 = vld [vmem:[%s635 + $0x1e7] sm:$0xff]
      %v1751 = vld [vmem:[%s635 + $0x1ef] sm:$0xff]
      %v1752 = vpack.c.bf16 %v1721, %v1720
      %v1753 = vpack.c.bf16 %v1723, %v1722
      %v1754 = vpack.c.bf16 %v1725, %v1724
      %v1755 = vpack.c.bf16 %v1727, %v1726
      %v1756 = vpack.c.bf16 %v1729, %v1728
      %v1757 = vpack.c.bf16 %v1731, %v1730
      %v1758 = vpack.c.bf16 %v1733, %v1732
      %v1759 = vpack.c.bf16 %v1735, %v1734
      %v1760 = vpack.c.bf16 %v1737, %v1736
      %v1761 = vpack.c.bf16 %v1739, %v1738
      %v1762 = vpack.c.bf16 %v1741, %v1740
      %v1763 = vpack.c.bf16 %v1743, %v1742
      %v1764 = vpack.c.bf16 %v1745, %v1744
      %v1765 = vpack.c.bf16 %v1747, %v1746
      %v1766 = vpack.c.bf16 %v1749, %v1748
      %v1767 = vpack.c.bf16 %v1751, %v1750
      %s1768 = scalar_lea.vmem %s3, 192
      %v1769 = vld [vmem:[%s1768] sm:$0xf]
      %v1770 = vld [vmem:[%s1768 + $0x4] sm:$0xf]
      %v1771 = vld [vmem:[%s1768 + $0x8] sm:$0xf]
      %v1772 = vld [vmem:[%s1768 + $0xc] sm:$0xf]
      %v1773 = vld [vmem:[%s1768 + $0x10] sm:$0xf]
      %v1774 = vld [vmem:[%s1768 + $0x14] sm:$0xf]
      %v1775 = vld [vmem:[%s1768 + $0x18] sm:$0xf]
      %v1776 = vld [vmem:[%s1768 + $0x1c] sm:$0xf]
      %v1777 = vld [vmem:[%s1768 + $0x20] sm:$0xf]
      %v1778 = vld [vmem:[%s1768 + $0x24] sm:$0xf]
      %v1779 = vld [vmem:[%s1768 + $0x28] sm:$0xf]
      %v1780 = vld [vmem:[%s1768 + $0x2c] sm:$0xf]
      %v1781 = vld [vmem:[%s1768 + $0x30] sm:$0xf]
      %v1782 = vld [vmem:[%s1768 + $0x34] sm:$0xf]
      %v1783 = vld [vmem:[%s1768 + $0x38] sm:$0xf]
      %v1784 = vld [vmem:[%s1768 + $0x3c] sm:$0xf]
      %v1801 = vunpack.c.l.b16 %v1769
      %v1802 = vunpack.c.l.b16 %v1770
      %v1803 = vunpack.c.l.b16 %v1771
      %v1804 = vunpack.c.l.b16 %v1772
      %v1805 = vunpack.c.l.b16 %v1773
      %v1806 = vunpack.c.l.b16 %v1774
      %v1807 = vunpack.c.l.b16 %v1775
      %v1808 = vunpack.c.l.b16 %v1776
      %v1809 = vunpack.c.l.b16 %v1777
      %v1810 = vunpack.c.l.b16 %v1778
      %v1811 = vunpack.c.l.b16 %v1779
      %v1812 = vunpack.c.l.b16 %v1780
      %v1813 = vunpack.c.l.b16 %v1781
      %v1814 = vunpack.c.l.b16 %v1782
      %v1815 = vunpack.c.l.b16 %v1783
      %v1816 = vunpack.c.l.b16 %v1784
      %v1817 = vpack.c.b16 %v1802, %v1801
      %v1818 = vpack.c.b16 %v1804, %v1803
      %v1819 = vpack.c.b16 %v1806, %v1805
      %v1820 = vpack.c.b16 %v1808, %v1807
      %v1821 = vpack.c.b16 %v1810, %v1809
      %v1822 = vpack.c.b16 %v1812, %v1811
      %v1823 = vpack.c.b16 %v1814, %v1813
      %v1824 = vpack.c.b16 %v1816, %v1815
      %1833 = vmatprep.subr.bf16.mxu0 0
      %1834 = vmatpush1.bf16.msra.mxu0 %v1817
      %1835 = vmatprep.subr.bf16.mxu0 0
      %1836 = vmatpush1.bf16.msra.mxu0 %v1818
      %1837 = vmatprep.subr.bf16.mxu0 0
      %1838 = vmatpush1.bf16.msra.mxu0 %v1819
      %1839 = vmatprep.subr.bf16.mxu0 0
      %1840 = vmatpush1.bf16.msra.mxu0 %v1820
      %1841 = vmatprep.subr.bf16.mxu0 0
      %1842 = vmatpush1.bf16.msra.mxu0 %v1821
      %1843 = vmatprep.subr.bf16.mxu0 0
      %1844 = vmatpush1.bf16.msra.mxu0 %v1822
      %1845 = vmatprep.subr.bf16.mxu0 0
      %1846 = vmatpush1.bf16.msra.mxu0 %v1823
      %1847 = vmatprep.subr.bf16.mxu0 0
      %1848 = vmatpush1.bf16.msra.mxu0 %v1824
      %1849 = vmatprep.subr.bf16.mxu0 0
      %1850 = vmatpush1.bf16.msra.mxu0 0
      %1851 = vmatprep.subr.bf16.mxu0 0
      %1852 = vmatpush1.bf16.msra.mxu0 0
      %1853 = vmatprep.subr.bf16.mxu0 0
      %1854 = vmatpush1.bf16.msra.mxu0 0
      %1855 = vmatprep.subr.bf16.mxu0 0
      %1856 = vmatpush1.bf16.msra.mxu0 0
      %1857 = vmatprep.subr.bf16.mxu0 0
      %1858 = vmatpush1.bf16.msra.mxu0 0
      %1859 = vmatprep.subr.bf16.mxu0 0
      %1860 = vmatpush1.bf16.msra.mxu0 0
      %1861 = vmatprep.subr.bf16.mxu0 0
      %1862 = vmatpush1.bf16.msra.mxu0 0
      %1863 = vmatprep.subr.bf16.mxu0 0
      %1864 = vmatpush1.bf16.msra.mxu0 0
      %1865 = vmatprep.mubr.bf16.mxu0 0
      %1866 = vmatmul.mubr.bf16.gmra.mrb[0].mxu0 %v1752
      %v1867 = vpop.f32.mrb[0].mxu0
      %v1868 = vadd.f32 0.0, %v1867
      %v1869 = vpop.f32.mrb[0].mxu0
      %v1870 = vpop.f32.mrb[0].mxu0
      %v1871 = vadd.f32 0.0, %v1870
      %v1872 = vpop.f32.mrb[0].mxu0
      %1873 = vmatprep.mubr.bf16.mxu0 0
      %1874 = vmatmul.mubr.bf16.gmra.mrb[0].mxu0 %v1753
      %v1875 = vpop.f32.mrb[0].mxu0
      %v1876 = vadd.f32 0.0, %v1875
      %v1877 = vpop.f32.mrb[0].mxu0
      %v1878 = vpop.f32.mrb[0].mxu0
      %v1879 = vadd.f32 0.0, %v1878
      %v1880 = vpop.f32.mrb[0].mxu0
      %1881 = vmatprep.mubr.bf16.mxu0 0
      %1882 = vmatmul.mubr.bf16.gmra.mrb[0].mxu0 %v1754
      %v1883 = vpop.f32.mrb[0].mxu0
      %v1884 = vadd.f32 0.0, %v1883
      %v1885 = vpop.f32.mrb[0].mxu0
      %v1886 = vpop.f32.mrb[0].mxu0
      %v1887 = vadd.f32 0.0, %v1886
      %v1888 = vpop.f32.mrb[0].mxu0
      %1889 = vmatprep.mubr.bf16.mxu0 0
      %1890 = vmatmul.mubr.bf16.gmra.mrb[0].mxu0 %v1755
      %v1891 = vpop.f32.mrb[0].mxu0
      %v1892 = vadd.f32 0.0, %v1891
      %v1893 = vpop.f32.mrb[0].mxu0
      %v1894 = vpop.f32.mrb[0].mxu0
      %v1895 = vadd.f32 0.0, %v1894
      %v1896 = vpop.f32.mrb[0].mxu0
      %1897 = vmatprep.mubr.bf16.mxu0 0
      %1898 = vmatmul.mubr.bf16.gmra.mrb[0].mxu0 %v1756
      %v1899 = vpop.f32.mrb[0].mxu0
      %v1900 = vadd.f32 0.0, %v1899
      %v1901 = vpop.f32.mrb[0].mxu0
      %v1902 = vpop.f32.mrb[0].mxu0
      %v1903 = vadd.f32 0.0, %v1902
      %v1904 = vpop.f32.mrb[0].mxu0
      %1905 = vmatprep.mubr.bf16.mxu0 0
      %1906 = vmatmul.mubr.bf16.gmra.mrb[0].mxu0 %v1757
      %v1907 = vpop.f32.mrb[0].mxu0
      %v1908 = vadd.f32 0.0, %v1907
      %v1909 = vpop.f32.mrb[0].mxu0
      %v1910 = vpop.f32.mrb[0].mxu0
      %v1911 = vadd.f32 0.0, %v1910
      %v1912 = vpop.f32.mrb[0].mxu0
      %1913 = vmatprep.mubr.bf16.mxu0 0
      %1914 = vmatmul.mubr.bf16.gmra.mrb[0].mxu0 %v1758
      %v1915 = vpop.f32.mrb[0].mxu0
      %v1916 = vadd.f32 0.0, %v1915
      %v1917 = vpop.f32.mrb[0].mxu0
      %v1918 = vpop.f32.mrb[0].mxu0
      %v1919 = vadd.f32 0.0, %v1918
      %v1920 = vpop.f32.mrb[0].mxu0
      %1921 = vmatprep.mubr.bf16.mxu0 0
      %1922 = vmatmul.mubr.bf16.gmra.mrb[0].mxu0 %v1759
      %v1923 = vpop.f32.mrb[0].mxu0
      %v1924 = vadd.f32 0.0, %v1923
      %v1925 = vpop.f32.mrb[0].mxu0
      %v1926 = vpop.f32.mrb[0].mxu0
      %v1927 = vadd.f32 0.0, %v1926
      %v1928 = vpop.f32.mrb[0].mxu0
      %1929 = vmatprep.mubr.bf16.mxu0 0
      %1930 = vmatmul.mubr.bf16.gmra.mrb[0].mxu0 %v1760
      %v1931 = vpop.f32.mrb[0].mxu0
      %v1932 = vadd.f32 0.0, %v1931
      %v1933 = vpop.f32.mrb[0].mxu0
      %v1934 = vpop.f32.mrb[0].mxu0
      %v1935 = vadd.f32 0.0, %v1934
      %v1936 = vpop.f32.mrb[0].mxu0
      %1937 = vmatprep.mubr.bf16.mxu0 0
      %1938 = vmatmul.mubr.bf16.gmra.mrb[0].mxu0 %v1761
      %v1939 = vpop.f32.mrb[0].mxu0
      %v1940 = vadd.f32 0.0, %v1939
      %v1941 = vpop.f32.mrb[0].mxu0
      %v1942 = vpop.f32.mrb[0].mxu0
      %v1943 = vadd.f32 0.0, %v1942
      %v1944 = vpop.f32.mrb[0].mxu0
      %1945 = vmatprep.mubr.bf16.mxu0 0
      %1946 = vmatmul.mubr.bf16.gmra.mrb[0].mxu0 %v1762
      %v1947 = vpop.f32.mrb[0].mxu0
      %v1948 = vadd.f32 0.0, %v1947
      %v1949 = vpop.f32.mrb[0].mxu0
      %v1950 = vpop.f32.mrb[0].mxu0
      %v1951 = vadd.f32 0.0, %v1950
      %v1952 = vpop.f32.mrb[0].mxu0
      %1953 = vmatprep.mubr.bf16.mxu0 0
      %1954 = vmatmul.mubr.bf16.gmra.mrb[0].mxu0 %v1763
      %v1955 = vpop.f32.mrb[0].mxu0
      %v1956 = vadd.f32 0.0, %v1955
      %v1957 = vpop.f32.mrb[0].mxu0
      %v1958 = vpop.f32.mrb[0].mxu0
      %v1959 = vadd.f32 0.0, %v1958
      %v1960 = vpop.f32.mrb[0].mxu0
      %1961 = vmatprep.mubr.bf16.mxu0 0
      %1962 = vmatmul.mubr.bf16.gmra.mrb[0].mxu0 %v1764
      %v1963 = vpop.f32.mrb[0].mxu0
      %v1964 = vadd.f32 0.0, %v1963
      %v1965 = vpop.f32.mrb[0].mxu0
      %v1966 = vpop.f32.mrb[0].mxu0
      %v1967 = vadd.f32 0.0, %v1966
      %v1968 = vpop.f32.mrb[0].mxu0
      %1969 = vmatprep.mubr.bf16.mxu0 0
      %1970 = vmatmul.mubr.bf16.gmra.mrb[0].mxu0 %v1765
      %v1971 = vpop.f32.mrb[0].mxu0
      %v1972 = vadd.f32 0.0, %v1971
      %v1973 = vpop.f32.mrb[0].mxu0
      %v1974 = vpop.f32.mrb[0].mxu0
      %v1975 = vadd.f32 0.0, %v1974
      %v1976 = vpop.f32.mrb[0].mxu0
      %1977 = vmatprep.mubr.bf16.mxu0 0
      %1978 = vmatmul.mubr.bf16.gmra.mrb[0].mxu0 %v1766
      %v1979 = vpop.f32.mrb[0].mxu0
      %v1980 = vadd.f32 0.0, %v1979
      %v1981 = vpop.f32.mrb[0].mxu0
      %v1982 = vpop.f32.mrb[0].mxu0
      %v1983 = vadd.f32 0.0, %v1982
      %v1984 = vpop.f32.mrb[0].mxu0
      %1985 = vmatprep.mubr.bf16.mxu0 0
      %1986 = vmatmul.mubr.bf16.gmra.mrb[0].mxu0 %v1767
      %v1987 = vpop.f32.mrb[0].mxu0
      %v1988 = vadd.f32 0.0, %v1987
      %v1989 = vpop.f32.mrb[0].mxu0
      %v1990 = vpop.f32.mrb[0].mxu0
      %v1991 = vadd.f32 0.0, %v1990
      %v1992 = vpop.f32.mrb[0].mxu0
      %1993 = vdwg.mxu0
      %v1994 = vld [vmem:[%s226] sm:$0xff]
      %v1995 = vld [vmem:[%s226 + $0x8] sm:$0xff]
      %v1996 = vld [vmem:[%s226 + $0x10] sm:$0xff]
      %v1997 = vld [vmem:[%s226 + $0x18] sm:$0xff]
      %v1998 = vld [vmem:[%s226 + $0x20] sm:$0xff]
      %v1999 = vld [vmem:[%s226 + $0x28] sm:$0xff]
      %v2000 = vld [vmem:[%s226 + $0x30] sm:$0xff]
      %v2001 = vld [vmem:[%s226 + $0x38] sm:$0xff]
      %v2002 = vld [vmem:[%s226 + $0x40] sm:$0xff]
      %v2003 = vld [vmem:[%s226 + $0x48] sm:$0xff]
      %v2004 = vld [vmem:[%s226 + $0x50] sm:$0xff]
      %v2005 = vld [vmem:[%s226 + $0x58] sm:$0xff]
      %v2006 = vld [vmem:[%s226 + $0x60] sm:$0xff]
      %v2007 = vld [vmem:[%s226 + $0x68] sm:$0xff]
      %v2008 = vld [vmem:[%s226 + $0x70] sm:$0xff]
      %v2009 = vld [vmem:[%s226 + $0x78] sm:$0xff]
      %v2010 = vld [vmem:[%s226 + $0x80] sm:$0xff]
      %v2011 = vld [vmem:[%s226 + $0x88] sm:$0xff]
      %v2012 = vld [vmem:[%s226 + $0x90] sm:$0xff]
      %v2013 = vld [vmem:[%s226 + $0x98] sm:$0xff]
      %v2014 = vld [vmem:[%s226 + $0xa0] sm:$0xff]
      %v2015 = vld [vmem:[%s226 + $0xa8] sm:$0xff]
      %v2016 = vld [vmem:[%s226 + $0xb0] sm:$0xff]
      %v2017 = vld [vmem:[%s226 + $0xb8] sm:$0xff]
      %v2018 = vld [vmem:[%s226 + $0xc0] sm:$0xff]
      %v2019 = vld [vmem:[%s226 + $0xc8] sm:$0xff]
      %v2020 = vld [vmem:[%s226 + $0xd0] sm:$0xff]
      %v2021 = vld [vmem:[%s226 + $0xd8] sm:$0xff]
      %v2022 = vld [vmem:[%s226 + $0xe0] sm:$0xff]
      %v2023 = vld [vmem:[%s226 + $0xe8] sm:$0xff]
      %v2024 = vld [vmem:[%s226 + $0xf0] sm:$0xff]
      %v2025 = vld [vmem:[%s226 + $0xf8] sm:$0xff]
      %v2026 = vadd.f32 %v1994, %v1868
      %v2027 = vadd.f32 %v1995, %v1871
      %v2028 = vadd.f32 %v1996, %v1876
      %v2029 = vadd.f32 %v1997, %v1879
      %v2030 = vadd.f32 %v1998, %v1884
      %v2031 = vadd.f32 %v1999, %v1887
      %v2032 = vadd.f32 %v2000, %v1892
      %v2033 = vadd.f32 %v2001, %v1895
      %v2034 = vadd.f32 %v2002, %v1900
      %v2035 = vadd.f32 %v2003, %v1903
      %v2036 = vadd.f32 %v2004, %v1908
      %v2037 = vadd.f32 %v2005, %v1911
      %v2038 = vadd.f32 %v2006, %v1916
      %v2039 = vadd.f32 %v2007, %v1919
      %v2040 = vadd.f32 %v2008, %v1924
      %v2041 = vadd.f32 %v2009, %v1927
      %v2042 = vadd.f32 %v2010, %v1932
      %v2043 = vadd.f32 %v2011, %v1935
      %v2044 = vadd.f32 %v2012, %v1940
      %v2045 = vadd.f32 %v2013, %v1943
      %v2046 = vadd.f32 %v2014, %v1948
      %v2047 = vadd.f32 %v2015, %v1951
      %v2048 = vadd.f32 %v2016, %v1956
      %v2049 = vadd.f32 %v2017, %v1959
      %v2050 = vadd.f32 %v2018, %v1964
      %v2051 = vadd.f32 %v2019, %v1967
      %v2052 = vadd.f32 %v2020, %v1972
      %v2053 = vadd.f32 %v2021, %v1975
      %v2054 = vadd.f32 %v2022, %v1980
      %v2055 = vadd.f32 %v2023, %v1983
      %v2056 = vadd.f32 %v2024, %v1988
      %v2057 = vadd.f32 %v2025, %v1991
      %2058 = vst [vmem:[%s226] sm:$0xff] %v2026
      %2059 = vst [vmem:[%s226 + $0x8] sm:$0xff] %v2027
      %2060 = vst [vmem:[%s226 + $0x10] sm:$0xff] %v2028
      %2061 = vst [vmem:[%s226 + $0x18] sm:$0xff] %v2029
      %2062 = vst [vmem:[%s226 + $0x20] sm:$0xff] %v2030
      %2063 = vst [vmem:[%s226 + $0x28] sm:$0xff] %v2031
      %2064 = vst [vmem:[%s226 + $0x30] sm:$0xff] %v2032
      %2065 = vst [vmem:[%s226 + $0x38] sm:$0xff] %v2033
      %2066 = vst [vmem:[%s226 + $0x40] sm:$0xff] %v2034
      %2067 = vst [vmem:[%s226 + $0x48] sm:$0xff] %v2035
      %2068 = vst [vmem:[%s226 + $0x50] sm:$0xff] %v2036
      %2069 = vst [vmem:[%s226 + $0x58] sm:$0xff] %v2037
      %2070 = vst [vmem:[%s226 + $0x60] sm:$0xff] %v2038
      %2071 = vst [vmem:[%s226 + $0x68] sm:$0xff] %v2039
      %2072 = vst [vmem:[%s226 + $0x70] sm:$0xff] %v2040
      %2073 = vst [vmem:[%s226 + $0x78] sm:$0xff] %v2041
      %2074 = vst [vmem:[%s226 + $0x80] sm:$0xff] %v2042
      %2075 = vst [vmem:[%s226 + $0x88] sm:$0xff] %v2043
      %2076 = vst [vmem:[%s226 + $0x90] sm:$0xff] %v2044
      %2077 = vst [vmem:[%s226 + $0x98] sm:$0xff] %v2045
      %2078 = vst [vmem:[%s226 + $0xa0] sm:$0xff] %v2046
      %2079 = vst [vmem:[%s226 + $0xa8] sm:$0xff] %v2047
      %2080 = vst [vmem:[%s226 + $0xb0] sm:$0xff] %v2048
      %2081 = vst [vmem:[%s226 + $0xb8] sm:$0xff] %v2049
      %2082 = vst [vmem:[%s226 + $0xc0] sm:$0xff] %v2050
      %2083 = vst [vmem:[%s226 + $0xc8] sm:$0xff] %v2051
      %2084 = vst [vmem:[%s226 + $0xd0] sm:$0xff] %v2052
      %2085 = vst [vmem:[%s226 + $0xd8] sm:$0xff] %v2053
      %2086 = vst [vmem:[%s226 + $0xe0] sm:$0xff] %v2054
      %2087 = vst [vmem:[%s226 + $0xe8] sm:$0xff] %v2055
      %2088 = vst [vmem:[%s226 + $0xf0] sm:$0xff] %v2056
      %2089 = vst [vmem:[%s226 + $0xf8] sm:$0xff] %v2057
      %v2090 = vld [vmem:[%s635 + $0x8] sm:$0xff]
      %v2091 = vld [vmem:[%s635 + $0x10] sm:$0xff]
      %v2092 = vld [vmem:[%s635 + $0x28] sm:$0xff]
      %v2093 = vld [vmem:[%s635 + $0x30] sm:$0xff]
      %v2094 = vld [vmem:[%s635 + $0x48] sm:$0xff]
      %v2095 = vld [vmem:[%s635 + $0x50] sm:$0xff]
      %v2096 = vld [vmem:[%s635 + $0x68] sm:$0xff]
      %v2097 = vld [vmem:[%s635 + $0x70] sm:$0xff]
      %v2098 = vld [vmem:[%s635 + $0x88] sm:$0xff]
      %v2099 = vld [vmem:[%s635 + $0x90] sm:$0xff]
      %v2100 = vld [vmem:[%s635 + $0xa8] sm:$0xff]
      %v2101 = vld [vmem:[%s635 + $0xb0] sm:$0xff]
      %v2102 = vld [vmem:[%s635 + $0xc8] sm:$0xff]
      %v2103 = vld [vmem:[%s635 + $0xd0] sm:$0xff]
      %v2104 = vld [vmem:[%s635 + $0xe8] sm:$0xff]
      %v2105 = vld [vmem:[%s635 + $0xf0] sm:$0xff]
      %v2106 = vld [vmem:[%s635 + $0x108] sm:$0xff]
      %v2107 = vld [vmem:[%s635 + $0x110] sm:$0xff]
      %v2108 = vld [vmem:[%s635 + $0x128] sm:$0xff]
      %v2109 = vld [vmem:[%s635 + $0x130] sm:$0xff]
      %v2110 = vld [vmem:[%s635 + $0x148] sm:$0xff]
      %v2111 = vld [vmem:[%s635 + $0x150] sm:$0xff]
      %v2112 = vld [vmem:[%s635 + $0x168] sm:$0xff]
      %v2113 = vld [vmem:[%s635 + $0x170] sm:$0xff]
      %v2114 = vld [vmem:[%s635 + $0x188] sm:$0xff]
      %v2115 = vld [vmem:[%s635 + $0x190] sm:$0xff]
      %v2116 = vld [vmem:[%s635 + $0x1a8] sm:$0xff]
      %v2117 = vld [vmem:[%s635 + $0x1b0] sm:$0xff]
      %v2118 = vld [vmem:[%s635 + $0x1c8] sm:$0xff]
      %v2119 = vld [vmem:[%s635 + $0x1d0] sm:$0xff]
      %v2120 = vld [vmem:[%s635 + $0x1e8] sm:$0xff]
      %v2121 = vld [vmem:[%s635 + $0x1f0] sm:$0xff]
      %v2122 = vpack.c.bf16 %v2091, %v2090
      %v2123 = vpack.c.bf16 %v2093, %v2092
      %v2124 = vpack.c.bf16 %v2095, %v2094
      %v2125 = vpack.c.bf16 %v2097, %v2096
      %v2126 = vpack.c.bf16 %v2099, %v2098
      %v2127 = vpack.c.bf16 %v2101, %v2100
      %v2128 = vpack.c.bf16 %v2103, %v2102
      %v2129 = vpack.c.bf16 %v2105, %v2104
      %v2130 = vpack.c.bf16 %v2107, %v2106
      %v2131 = vpack.c.bf16 %v2109, %v2108
      %v2132 = vpack.c.bf16 %v2111, %v2110
      %v2133 = vpack.c.bf16 %v2113, %v2112
      %v2134 = vpack.c.bf16 %v2115, %v2114
      %v2135 = vpack.c.bf16 %v2117, %v2116
      %v2136 = vpack.c.bf16 %v2119, %v2118
      %v2137 = vpack.c.bf16 %v2121, %v2120
      %s2138 = scalar_lea.vmem %s3, 256
      %v2139 = vld [vmem:[%s2138] sm:$0xf]
      %v2140 = vld [vmem:[%s2138 + $0x4] sm:$0xf]
      %v2141 = vld [vmem:[%s2138 + $0x8] sm:$0xf]
      %v2142 = vld [vmem:[%s2138 + $0xc] sm:$0xf]
      %v2143 = vld [vmem:[%s2138 + $0x10] sm:$0xf]
      %v2144 = vld [vmem:[%s2138 + $0x14] sm:$0xf]
      %v2145 = vld [vmem:[%s2138 + $0x18] sm:$0xf]
      %v2146 = vld [vmem:[%s2138 + $0x1c] sm:$0xf]
      %v2147 = vld [vmem:[%s2138 + $0x20] sm:$0xf]
      %v2148 = vld [vmem:[%s2138 + $0x24] sm:$0xf]
      %v2149 = vld [vmem:[%s2138 + $0x28] sm:$0xf]
      %v2150 = vld [vmem:[%s2138 + $0x2c] sm:$0xf]
      %v2151 = vld [vmem:[%s2138 + $0x30] sm:$0xf]
      %v2152 = vld [vmem:[%s2138 + $0x34] sm:$0xf]
      %v2153 = vld [vmem:[%s2138 + $0x38] sm:$0xf]
      %v2154 = vld [vmem:[%s2138 + $0x3c] sm:$0xf]
      %v2171 = vunpack.c.l.b16 %v2139
      %v2172 = vunpack.c.l.b16 %v2140
      %v2173 = vunpack.c.l.b16 %v2141
      %v2174 = vunpack.c.l.b16 %v2142
      %v2175 = vunpack.c.l.b16 %v2143
      %v2176 = vunpack.c.l.b16 %v2144
      %v2177 = vunpack.c.l.b16 %v2145
      %v2178 = vunpack.c.l.b16 %v2146
      %v2179 = vunpack.c.l.b16 %v2147
      %v2180 = vunpack.c.l.b16 %v2148
      %v2181 = vunpack.c.l.b16 %v2149
      %v2182 = vunpack.c.l.b16 %v2150
      %v2183 = vunpack.c.l.b16 %v2151
      %v2184 = vunpack.c.l.b16 %v2152
      %v2185 = vunpack.c.l.b16 %v2153
      %v2186 = vunpack.c.l.b16 %v2154
      %v2187 = vpack.c.b16 %v2172, %v2171
      %v2188 = vpack.c.b16 %v2174, %v2173
      %v2189 = vpack.c.b16 %v2176, %v2175
      %v2190 = vpack.c.b16 %v2178, %v2177
      %v2191 = vpack.c.b16 %v2180, %v2179
      %v2192 = vpack.c.b16 %v2182, %v2181
      %v2193 = vpack.c.b16 %v2184, %v2183
      %v2194 = vpack.c.b16 %v2186, %v2185
      %2203 = vmatprep.subr.bf16.mxu0 0
      %2204 = vmatpush1.bf16.msra.mxu0 %v2187
      %2205 = vmatprep.subr.bf16.mxu0 0
      %2206 = vmatpush1.bf16.msra.mxu0 %v2188
      %2207 = vmatprep.subr.bf16.mxu0 0
      %2208 = vmatpush1.bf16.msra.mxu0 %v2189
      %2209 = vmatprep.subr.bf16.mxu0 0
      %2210 = vmatpush1.bf16.msra.mxu0 %v2190
      %2211 = vmatprep.subr.bf16.mxu0 0
      %2212 = vmatpush1.bf16.msra.mxu0 %v2191
      %2213 = vmatprep.subr.bf16.mxu0 0
      %2214 = vmatpush1.bf16.msra.mxu0 %v2192
      %2215 = vmatprep.subr.bf16.mxu0 0
      %2216 = vmatpush1.bf16.msra.mxu0 %v2193
      %2217 = vmatprep.subr.bf16.mxu0 0
      %2218 = vmatpush1.bf16.msra.mxu0 %v2194
      %2219 = vmatprep.subr.bf16.mxu0 0
      %2220 = vmatpush1.bf16.msra.mxu0 0
      %2221 = vmatprep.subr.bf16.mxu0 0
      %2222 = vmatpush1.bf16.msra.mxu0 0
      %2223 = vmatprep.subr.bf16.mxu0 0
      %2224 = vmatpush1.bf16.msra.mxu0 0
      %2225 = vmatprep.subr.bf16.mxu0 0
      %2226 = vmatpush1.bf16.msra.mxu0 0
      %2227 = vmatprep.subr.bf16.mxu0 0
      %2228 = vmatpush1.bf16.msra.mxu0 0
      %2229 = vmatprep.subr.bf16.mxu0 0
      %2230 = vmatpush1.bf16.msra.mxu0 0
      %2231 = vmatprep.subr.bf16.mxu0 0
      %2232 = vmatpush1.bf16.msra.mxu0 0
      %2233 = vmatprep.subr.bf16.mxu0 0
      %2234 = vmatpush1.bf16.msra.mxu0 0
      %2235 = vmatprep.mubr.bf16.mxu0 0
      %2236 = vmatmul.mubr.bf16.gmra.mrb[0].mxu0 %v2122
      %v2237 = vpop.f32.mrb[0].mxu0
      %v2238 = vadd.f32 0.0, %v2237
      %v2239 = vpop.f32.mrb[0].mxu0
      %v2240 = vpop.f32.mrb[0].mxu0
      %v2241 = vadd.f32 0.0, %v2240
      %v2242 = vpop.f32.mrb[0].mxu0
      %2243 = vmatprep.mubr.bf16.mxu0 0
      %2244 = vmatmul.mubr.bf16.gmra.mrb[0].mxu0 %v2123
      %v2245 = vpop.f32.mrb[0].mxu0
      %v2246 = vadd.f32 0.0, %v2245
      %v2247 = vpop.f32.mrb[0].mxu0
      %v2248 = vpop.f32.mrb[0].mxu0
      %v2249 = vadd.f32 0.0, %v2248
      %v2250 = vpop.f32.mrb[0].mxu0
      %2251 = vmatprep.mubr.bf16.mxu0 0
      %2252 = vmatmul.mubr.bf16.gmra.mrb[0].mxu0 %v2124
      %v2253 = vpop.f32.mrb[0].mxu0
      %v2254 = vadd.f32 0.0, %v2253
      %v2255 = vpop.f32.mrb[0].mxu0
      %v2256 = vpop.f32.mrb[0].mxu0
      %v2257 = vadd.f32 0.0, %v2256
      %v2258 = vpop.f32.mrb[0].mxu0
      %2259 = vmatprep.mubr.bf16.mxu0 0
      %2260 = vmatmul.mubr.bf16.gmra.mrb[0].mxu0 %v2125
      %v2261 = vpop.f32.mrb[0].mxu0
      %v2262 = vadd.f32 0.0, %v2261
      %v2263 = vpop.f32.mrb[0].mxu0
      %v2264 = vpop.f32.mrb[0].mxu0
      %v2265 = vadd.f32 0.0, %v2264
      %v2266 = vpop.f32.mrb[0].mxu0
      %2267 = vmatprep.mubr.bf16.mxu0 0
      %2268 = vmatmul.mubr.bf16.gmra.mrb[0].mxu0 %v2126
      %v2269 = vpop.f32.mrb[0].mxu0
      %v2270 = vadd.f32 0.0, %v2269
      %v2271 = vpop.f32.mrb[0].mxu0
      %v2272 = vpop.f32.mrb[0].mxu0
      %v2273 = vadd.f32 0.0, %v2272
      %v2274 = vpop.f32.mrb[0].mxu0
      %2275 = vmatprep.mubr.bf16.mxu0 0
      %2276 = vmatmul.mubr.bf16.gmra.mrb[0].mxu0 %v2127
      %v2277 = vpop.f32.mrb[0].mxu0
      %v2278 = vadd.f32 0.0, %v2277
      %v2279 = vpop.f32.mrb[0].mxu0
      %v2280 = vpop.f32.mrb[0].mxu0
      %v2281 = vadd.f32 0.0, %v2280
      %v2282 = vpop.f32.mrb[0].mxu0
      %2283 = vmatprep.mubr.bf16.mxu0 0
      %2284 = vmatmul.mubr.bf16.gmra.mrb[0].mxu0 %v2128
      %v2285 = vpop.f32.mrb[0].mxu0
      %v2286 = vadd.f32 0.0, %v2285
      %v2287 = vpop.f32.mrb[0].mxu0
      %v2288 = vpop.f32.mrb[0].mxu0
      %v2289 = vadd.f32 0.0, %v2288
      %v2290 = vpop.f32.mrb[0].mxu0
      %2291 = vmatprep.mubr.bf16.mxu0 0
      %2292 = vmatmul.mubr.bf16.gmra.mrb[0].mxu0 %v2129
      %v2293 = vpop.f32.mrb[0].mxu0
      %v2294 = vadd.f32 0.0, %v2293
      %v2295 = vpop.f32.mrb[0].mxu0
      %v2296 = vpop.f32.mrb[0].mxu0
      %v2297 = vadd.f32 0.0, %v2296
      %v2298 = vpop.f32.mrb[0].mxu0
      %2299 = vmatprep.mubr.bf16.mxu0 0
      %2300 = vmatmul.mubr.bf16.gmra.mrb[0].mxu0 %v2130
      %v2301 = vpop.f32.mrb[0].mxu0
      %v2302 = vadd.f32 0.0, %v2301
      %v2303 = vpop.f32.mrb[0].mxu0
      %v2304 = vpop.f32.mrb[0].mxu0
      %v2305 = vadd.f32 0.0, %v2304
      %v2306 = vpop.f32.mrb[0].mxu0
      %2307 = vmatprep.mubr.bf16.mxu0 0
      %2308 = vmatmul.mubr.bf16.gmra.mrb[0].mxu0 %v2131
      %v2309 = vpop.f32.mrb[0].mxu0
      %v2310 = vadd.f32 0.0, %v2309
      %v2311 = vpop.f32.mrb[0].mxu0
      %v2312 = vpop.f32.mrb[0].mxu0
      %v2313 = vadd.f32 0.0, %v2312
      %v2314 = vpop.f32.mrb[0].mxu0
      %2315 = vmatprep.mubr.bf16.mxu0 0
      %2316 = vmatmul.mubr.bf16.gmra.mrb[0].mxu0 %v2132
      %v2317 = vpop.f32.mrb[0].mxu0
      %v2318 = vadd.f32 0.0, %v2317
      %v2319 = vpop.f32.mrb[0].mxu0
      %v2320 = vpop.f32.mrb[0].mxu0
      %v2321 = vadd.f32 0.0, %v2320
      %v2322 = vpop.f32.mrb[0].mxu0
      %2323 = vmatprep.mubr.bf16.mxu0 0
      %2324 = vmatmul.mubr.bf16.gmra.mrb[0].mxu0 %v2133
      %v2325 = vpop.f32.mrb[0].mxu0
      %v2326 = vadd.f32 0.0, %v2325
      %v2327 = vpop.f32.mrb[0].mxu0
      %v2328 = vpop.f32.mrb[0].mxu0
      %v2329 = vadd.f32 0.0, %v2328
      %v2330 = vpop.f32.mrb[0].mxu0
      %2331 = vmatprep.mubr.bf16.mxu0 0
      %2332 = vmatmul.mubr.bf16.gmra.mrb[0].mxu0 %v2134
      %v2333 = vpop.f32.mrb[0].mxu0
      %v2334 = vadd.f32 0.0, %v2333
      %v2335 = vpop.f32.mrb[0].mxu0
      %v2336 = vpop.f32.mrb[0].mxu0
      %v2337 = vadd.f32 0.0, %v2336
      %v2338 = vpop.f32.mrb[0].mxu0
      %2339 = vmatprep.mubr.bf16.mxu0 0
      %2340 = vmatmul.mubr.bf16.gmra.mrb[0].mxu0 %v2135
      %v2341 = vpop.f32.mrb[0].mxu0
      %v2342 = vadd.f32 0.0, %v2341
      %v2343 = vpop.f32.mrb[0].mxu0
      %v2344 = vpop.f32.mrb[0].mxu0
      %v2345 = vadd.f32 0.0, %v2344
      %v2346 = vpop.f32.mrb[0].mxu0
      %2347 = vmatprep.mubr.bf16.mxu0 0
      %2348 = vmatmul.mubr.bf16.gmra.mrb[0].mxu0 %v2136
      %v2349 = vpop.f32.mrb[0].mxu0
      %v2350 = vadd.f32 0.0, %v2349
      %v2351 = vpop.f32.mrb[0].mxu0
      %v2352 = vpop.f32.mrb[0].mxu0
      %v2353 = vadd.f32 0.0, %v2352
      %v2354 = vpop.f32.mrb[0].mxu0
      %2355 = vmatprep.mubr.bf16.mxu0 0
      %2356 = vmatmul.mubr.bf16.gmra.mrb[0].mxu0 %v2137
      %v2357 = vpop.f32.mrb[0].mxu0
      %v2358 = vadd.f32 0.0, %v2357
      %v2359 = vpop.f32.mrb[0].mxu0
      %v2360 = vpop.f32.mrb[0].mxu0
      %v2361 = vadd.f32 0.0, %v2360
      %v2362 = vpop.f32.mrb[0].mxu0
      %2363 = vdwg.mxu0
      %v2364 = vld [vmem:[%s226] sm:$0xff]
      %v2365 = vld [vmem:[%s226 + $0x8] sm:$0xff]
      %v2366 = vld [vmem:[%s226 + $0x10] sm:$0xff]
      %v2367 = vld [vmem:[%s226 + $0x18] sm:$0xff]
      %v2368 = vld [vmem:[%s226 + $0x20] sm:$0xff]
      %v2369 = vld [vmem:[%s226 + $0x28] sm:$0xff]
      %v2370 = vld [vmem:[%s226 + $0x30] sm:$0xff]
      %v2371 = vld [vmem:[%s226 + $0x38] sm:$0xff]
      %v2372 = vld [vmem:[%s226 + $0x40] sm:$0xff]
      %v2373 = vld [vmem:[%s226 + $0x48] sm:$0xff]
      %v2374 = vld [vmem:[%s226 + $0x50] sm:$0xff]
      %v2375 = vld [vmem:[%s226 + $0x58] sm:$0xff]
      %v2376 = vld [vmem:[%s226 + $0x60] sm:$0xff]
      %v2377 = vld [vmem:[%s226 + $0x68] sm:$0xff]
      %v2378 = vld [vmem:[%s226 + $0x70] sm:$0xff]
      %v2379 = vld [vmem:[%s226 + $0x78] sm:$0xff]
      %v2380 = vld [vmem:[%s226 + $0x80] sm:$0xff]
      %v2381 = vld [vmem:[%s226 + $0x88] sm:$0xff]
      %v2382 = vld [vmem:[%s226 + $0x90] sm:$0xff]
      %v2383 = vld [vmem:[%s226 + $0x98] sm:$0xff]
      %v2384 = vld [vmem:[%s226 + $0xa0] sm:$0xff]
      %v2385 = vld [vmem:[%s226 + $0xa8] sm:$0xff]
      %v2386 = vld [vmem:[%s226 + $0xb0] sm:$0xff]
      %v2387 = vld [vmem:[%s226 + $0xb8] sm:$0xff]
      %v2388 = vld [vmem:[%s226 + $0xc0] sm:$0xff]
      %v2389 = vld [vmem:[%s226 + $0xc8] sm:$0xff]
      %v2390 = vld [vmem:[%s226 + $0xd0] sm:$0xff]
      %v2391 = vld [vmem:[%s226 + $0xd8] sm:$0xff]
      %v2392 = vld [vmem:[%s226 + $0xe0] sm:$0xff]
      %v2393 = vld [vmem:[%s226 + $0xe8] sm:$0xff]
      %v2394 = vld [vmem:[%s226 + $0xf0] sm:$0xff]
      %v2395 = vld [vmem:[%s226 + $0xf8] sm:$0xff]
      %v2396 = vadd.f32 %v2364, %v2238
      %v2397 = vadd.f32 %v2365, %v2241
      %v2398 = vadd.f32 %v2366, %v2246
      %v2399 = vadd.f32 %v2367, %v2249
      %v2400 = vadd.f32 %v2368, %v2254
      %v2401 = vadd.f32 %v2369, %v2257
      %v2402 = vadd.f32 %v2370, %v2262
      %v2403 = vadd.f32 %v2371, %v2265
      %v2404 = vadd.f32 %v2372, %v2270
      %v2405 = vadd.f32 %v2373, %v2273
      %v2406 = vadd.f32 %v2374, %v2278
      %v2407 = vadd.f32 %v2375, %v2281
      %v2408 = vadd.f32 %v2376, %v2286
      %v2409 = vadd.f32 %v2377, %v2289
      %v2410 = vadd.f32 %v2378, %v2294
      %v2411 = vadd.f32 %v2379, %v2297
      %v2412 = vadd.f32 %v2380, %v2302
      %v2413 = vadd.f32 %v2381, %v2305
      %v2414 = vadd.f32 %v2382, %v2310
      %v2415 = vadd.f32 %v2383, %v2313
      %v2416 = vadd.f32 %v2384, %v2318
      %v2417 = vadd.f32 %v2385, %v2321
      %v2418 = vadd.f32 %v2386, %v2326
      %v2419 = vadd.f32 %v2387, %v2329
      %v2420 = vadd.f32 %v2388, %v2334
      %v2421 = vadd.f32 %v2389, %v2337
      %v2422 = vadd.f32 %v2390, %v2342
      %v2423 = vadd.f32 %v2391, %v2345
      %v2424 = vadd.f32 %v2392, %v2350
      %v2425 = vadd.f32 %v2393, %v2353
      %v2426 = vadd.f32 %v2394, %v2358
      %v2427 = vadd.f32 %v2395, %v2361
      %2428 = vst [vmem:[%s226] sm:$0xff] %v2396
      %2429 = vst [vmem:[%s226 + $0x8] sm:$0xff] %v2397
      %2430 = vst [vmem:[%s226 + $0x10] sm:$0xff] %v2398
      %2431 = vst [vmem:[%s226 + $0x18] sm:$0xff] %v2399
      %2432 = vst [vmem:[%s226 + $0x20] sm:$0xff] %v2400
      %2433 = vst [vmem:[%s226 + $0x28] sm:$0xff] %v2401
      %2434 = vst [vmem:[%s226 + $0x30] sm:$0xff] %v2402
      %2435 = vst [vmem:[%s226 + $0x38] sm:$0xff] %v2403
      %2436 = vst [vmem:[%s226 + $0x40] sm:$0xff] %v2404
      %2437 = vst [vmem:[%s226 + $0x48] sm:$0xff] %v2405
      %2438 = vst [vmem:[%s226 + $0x50] sm:$0xff] %v2406
      %2439 = vst [vmem:[%s226 + $0x58] sm:$0xff] %v2407
      %2440 = vst [vmem:[%s226 + $0x60] sm:$0xff] %v2408
      %2441 = vst [vmem:[%s226 + $0x68] sm:$0xff] %v2409
      %2442 = vst [vmem:[%s226 + $0x70] sm:$0xff] %v2410
      %2443 = vst [vmem:[%s226 + $0x78] sm:$0xff] %v2411
      %2444 = vst [vmem:[%s226 + $0x80] sm:$0xff] %v2412
      %2445 = vst [vmem:[%s226 + $0x88] sm:$0xff] %v2413
      %2446 = vst [vmem:[%s226 + $0x90] sm:$0xff] %v2414
      %2447 = vst [vmem:[%s226 + $0x98] sm:$0xff] %v2415
      %2448 = vst [vmem:[%s226 + $0xa0] sm:$0xff] %v2416
      %2449 = vst [vmem:[%s226 + $0xa8] sm:$0xff] %v2417
      %2450 = vst [vmem:[%s226 + $0xb0] sm:$0xff] %v2418
      %2451 = vst [vmem:[%s226 + $0xb8] sm:$0xff] %v2419
      %2452 = vst [vmem:[%s226 + $0xc0] sm:$0xff] %v2420
      %2453 = vst [vmem:[%s226 + $0xc8] sm:$0xff] %v2421
      %2454 = vst [vmem:[%s226 + $0xd0] sm:$0xff] %v2422
      %2455 = vst [vmem:[%s226 + $0xd8] sm:$0xff] %v2423
      %2456 = vst [vmem:[%s226 + $0xe0] sm:$0xff] %v2424
      %2457 = vst [vmem:[%s226 + $0xe8] sm:$0xff] %v2425
      %2458 = vst [vmem:[%s226 + $0xf0] sm:$0xff] %v2426
      %2459 = vst [vmem:[%s226 + $0xf8] sm:$0xff] %v2427
      %v2460 = vld [vmem:[%s635 + $0x9] sm:$0xff]
      %v2461 = vld [vmem:[%s635 + $0x11] sm:$0xff]
      %v2462 = vld [vmem:[%s635 + $0x29] sm:$0xff]
      %v2463 = vld [vmem:[%s635 + $0x31] sm:$0xff]
      %v2464 = vld [vmem:[%s635 + $0x49] sm:$0xff]
      %v2465 = vld [vmem:[%s635 + $0x51] sm:$0xff]
      %v2466 = vld [vmem:[%s635 + $0x69] sm:$0xff]
      %v2467 = vld [vmem:[%s635 + $0x71] sm:$0xff]
      %v2468 = vld [vmem:[%s635 + $0x89] sm:$0xff]
      %v2469 = vld [vmem:[%s635 + $0x91] sm:$0xff]
      %v2470 = vld [vmem:[%s635 + $0xa9] sm:$0xff]
      %v2471 = vld [vmem:[%s635 + $0xb1] sm:$0xff]
      %v2472 = vld [vmem:[%s635 + $0xc9] sm:$0xff]
      %v2473 = vld [vmem:[%s635 + $0xd1] sm:$0xff]
      %v2474 = vld [vmem:[%s635 + $0xe9] sm:$0xff]
      %v2475 = vld [vmem:[%s635 + $0xf1] sm:$0xff]
      %v2476 = vld [vmem:[%s635 + $0x109] sm:$0xff]
      %v2477 = vld [vmem:[%s635 + $0x111] sm:$0xff]
      %v2478 = vld [vmem:[%s635 + $0x129] sm:$0xff]
      %v2479 = vld [vmem:[%s635 + $0x131] sm:$0xff]
      %v2480 = vld [vmem:[%s635 + $0x149] sm:$0xff]
      %v2481 = vld [vmem:[%s635 + $0x151] sm:$0xff]
      %v2482 = vld [vmem:[%s635 + $0x169] sm:$0xff]
      %v2483 = vld [vmem:[%s635 + $0x171] sm:$0xff]
      %v2484 = vld [vmem:[%s635 + $0x189] sm:$0xff]
      %v2485 = vld [vmem:[%s635 + $0x191] sm:$0xff]
      %v2486 = vld [vmem:[%s635 + $0x1a9] sm:$0xff]
      %v2487 = vld [vmem:[%s635 + $0x1b1] sm:$0xff]
      %v2488 = vld [vmem:[%s635 + $0x1c9] sm:$0xff]
      %v2489 = vld [vmem:[%s635 + $0x1d1] sm:$0xff]
      %v2490 = vld [vmem:[%s635 + $0x1e9] sm:$0xff]
      %v2491 = vld [vmem:[%s635 + $0x1f1] sm:$0xff]
      %v2492 = vpack.c.bf16 %v2461, %v2460
      %v2493 = vpack.c.bf16 %v2463, %v2462
      %v2494 = vpack.c.bf16 %v2465, %v2464
      %v2495 = vpack.c.bf16 %v2467, %v2466
      %v2496 = vpack.c.bf16 %v2469, %v2468
      %v2497 = vpack.c.bf16 %v2471, %v2470
      %v2498 = vpack.c.bf16 %v2473, %v2472
      %v2499 = vpack.c.bf16 %v2475, %v2474
      %v2500 = vpack.c.bf16 %v2477, %v2476
      %v2501 = vpack.c.bf16 %v2479, %v2478
      %v2502 = vpack.c.bf16 %v2481, %v2480
      %v2503 = vpack.c.bf16 %v2483, %v2482
      %v2504 = vpack.c.bf16 %v2485, %v2484
      %v2505 = vpack.c.bf16 %v2487, %v2486
      %v2506 = vpack.c.bf16 %v2489, %v2488
      %v2507 = vpack.c.bf16 %v2491, %v2490
      %s2508 = scalar_lea.vmem %s3, 320
      %v2509 = vld [vmem:[%s2508] sm:$0xf]
      %v2510 = vld [vmem:[%s2508 + $0x4] sm:$0xf]
      %v2511 = vld [vmem:[%s2508 + $0x8] sm:$0xf]
      %v2512 = vld [vmem:[%s2508 + $0xc] sm:$0xf]
      %v2513 = vld [vmem:[%s2508 + $0x10] sm:$0xf]
      %v2514 = vld [vmem:[%s2508 + $0x14] sm:$0xf]
      %v2515 = vld [vmem:[%s2508 + $0x18] sm:$0xf]
      %v2516 = vld [vmem:[%s2508 + $0x1c] sm:$0xf]
      %v2517 = vld [vmem:[%s2508 + $0x20] sm:$0xf]
      %v2518 = vld [vmem:[%s2508 + $0x24] sm:$0xf]
      %v2519 = vld [vmem:[%s2508 + $0x28] sm:$0xf]
      %v2520 = vld [vmem:[%s2508 + $0x2c] sm:$0xf]
      %v2521 = vld [vmem:[%s2508 + $0x30] sm:$0xf]
      %v2522 = vld [vmem:[%s2508 + $0x34] sm:$0xf]
      %v2523 = vld [vmem:[%s2508 + $0x38] sm:$0xf]
      %v2524 = vld [vmem:[%s2508 + $0x3c] sm:$0xf]
      %v2541 = vunpack.c.l.b16 %v2509
      %v2542 = vunpack.c.l.b16 %v2510
      %v2543 = vunpack.c.l.b16 %v2511
      %v2544 = vunpack.c.l.b16 %v2512
      %v2545 = vunpack.c.l.b16 %v2513
      %v2546 = vunpack.c.l.b16 %v2514
      %v2547 = vunpack.c.l.b16 %v2515
      %v2548 = vunpack.c.l.b16 %v2516
      %v2549 = vunpack.c.l.b16 %v2517
      %v2550 = vunpack.c.l.b16 %v2518
      %v2551 = vunpack.c.l.b16 %v2519
      %v2552 = vunpack.c.l.b16 %v2520
      %v2553 = vunpack.c.l.b16 %v2521
      %v2554 = vunpack.c.l.b16 %v2522
      %v2555 = vunpack.c.l.b16 %v2523
      %v2556 = vunpack.c.l.b16 %v2524
      %v2557 = vpack.c.b16 %v2542, %v2541
      %v2558 = vpack.c.b16 %v2544, %v2543
      %v2559 = vpack.c.b16 %v2546, %v2545
      %v2560 = vpack.c.b16 %v2548, %v2547
      %v2561 = vpack.c.b16 %v2550, %v2549
      %v2562 = vpack.c.b16 %v2552, %v2551
      %v2563 = vpack.c.b16 %v2554, %v2553
      %v2564 = vpack.c.b16 %v2556, %v2555
      %2573 = vmatprep.subr.bf16.mxu0 0
      %2574 = vmatpush1.bf16.msra.mxu0 %v2557
      %2575 = vmatprep.subr.bf16.mxu0 0
      %2576 = vmatpush1.bf16.msra.mxu0 %v2558
      %2577 = vmatprep.subr.bf16.mxu0 0
      %2578 = vmatpush1.bf16.msra.mxu0 %v2559
      %2579 = vmatprep.subr.bf16.mxu0 0
      %2580 = vmatpush1.bf16.msra.mxu0 %v2560
      %2581 = vmatprep.subr.bf16.mxu0 0
      %2582 = vmatpush1.bf16.msra.mxu0 %v2561
      %2583 = vmatprep.subr.bf16.mxu0 0
      %2584 = vmatpush1.bf16.msra.mxu0 %v2562
      %2585 = vmatprep.subr.bf16.mxu0 0
      %2586 = vmatpush1.bf16.msra.mxu0 %v2563
      %2587 = vmatprep.subr.bf16.mxu0 0
      %2588 = vmatpush1.bf16.msra.mxu0 %v2564
      %2589 = vmatprep.subr.bf16.mxu0 0
      %2590 = vmatpush1.bf16.msra.mxu0 0
      %2591 = vmatprep.subr.bf16.mxu0 0
      %2592 = vmatpush1.bf16.msra.mxu0 0
      %2593 = vmatprep.subr.bf16.mxu0 0
      %2594 = vmatpush1.bf16.msra.mxu0 0
      %2595 = vmatprep.subr.bf16.mxu0 0
      %2596 = vmatpush1.bf16.msra.mxu0 0
      %2597 = vmatprep.subr.bf16.mxu0 0
      %2598 = vmatpush1.bf16.msra.mxu0 0
      %2599 = vmatprep.subr.bf16.mxu0 0
      %2600 = vmatpush1.bf16.msra.mxu0 0
      %2601 = vmatprep.subr.bf16.mxu0 0
      %2602 = vmatpush1.bf16.msra.mxu0 0
      %2603 = vmatprep.subr.bf16.mxu0 0
      %2604 = vmatpush1.bf16.msra.mxu0 0
      %2605 = vmatprep.mubr.bf16.mxu0 0
      %2606 = vmatmul.mubr.bf16.gmra.mrb[0].mxu0 %v2492
      %v2607 = vpop.f32.mrb[0].mxu0
      %v2608 = vadd.f32 0.0, %v2607
      %v2609 = vpop.f32.mrb[0].mxu0
      %v2610 = vpop.f32.mrb[0].mxu0
      %v2611 = vadd.f32 0.0, %v2610
      %v2612 = vpop.f32.mrb[0].mxu0
      %2613 = vmatprep.mubr.bf16.mxu0 0
      %2614 = vmatmul.mubr.bf16.gmra.mrb[0].mxu0 %v2493
      %v2615 = vpop.f32.mrb[0].mxu0
      %v2616 = vadd.f32 0.0, %v2615
      %v2617 = vpop.f32.mrb[0].mxu0
      %v2618 = vpop.f32.mrb[0].mxu0
      %v2619 = vadd.f32 0.0, %v2618
      %v2620 = vpop.f32.mrb[0].mxu0
      %2621 = vmatprep.mubr.bf16.mxu0 0
      %2622 = vmatmul.mubr.bf16.gmra.mrb[0].mxu0 %v2494
      %v2623 = vpop.f32.mrb[0].mxu0
      %v2624 = vadd.f32 0.0, %v2623
      %v2625 = vpop.f32.mrb[0].mxu0
      %v2626 = vpop.f32.mrb[0].mxu0
      %v2627 = vadd.f32 0.0, %v2626
      %v2628 = vpop.f32.mrb[0].mxu0
      %2629 = vmatprep.mubr.bf16.mxu0 0
      %2630 = vmatmul.mubr.bf16.gmra.mrb[0].mxu0 %v2495
      %v2631 = vpop.f32.mrb[0].mxu0
      %v2632 = vadd.f32 0.0, %v2631
      %v2633 = vpop.f32.mrb[0].mxu0
      %v2634 = vpop.f32.mrb[0].mxu0
      %v2635 = vadd.f32 0.0, %v2634
      %v2636 = vpop.f32.mrb[0].mxu0
      %2637 = vmatprep.mubr.bf16.mxu0 0
      %2638 = vmatmul.mubr.bf16.gmra.mrb[0].mxu0 %v2496
      %v2639 = vpop.f32.mrb[0].mxu0
      %v2640 = vadd.f32 0.0, %v2639
      %v2641 = vpop.f32.mrb[0].mxu0
      %v2642 = vpop.f32.mrb[0].mxu0
      %v2643 = vadd.f32 0.0, %v2642
      %v2644 = vpop.f32.mrb[0].mxu0
      %2645 = vmatprep.mubr.bf16.mxu0 0
      %2646 = vmatmul.mubr.bf16.gmra.mrb[0].mxu0 %v2497
      %v2647 = vpop.f32.mrb[0].mxu0
      %v2648 = vadd.f32 0.0, %v2647
      %v2649 = vpop.f32.mrb[0].mxu0
      %v2650 = vpop.f32.mrb[0].mxu0
      %v2651 = vadd.f32 0.0, %v2650
      %v2652 = vpop.f32.mrb[0].mxu0
      %2653 = vmatprep.mubr.bf16.mxu0 0
      %2654 = vmatmul.mubr.bf16.gmra.mrb[0].mxu0 %v2498
      %v2655 = vpop.f32.mrb[0].mxu0
      %v2656 = vadd.f32 0.0, %v2655
      %v2657 = vpop.f32.mrb[0].mxu0
      %v2658 = vpop.f32.mrb[0].mxu0
      %v2659 = vadd.f32 0.0, %v2658
      %v2660 = vpop.f32.mrb[0].mxu0
      %2661 = vmatprep.mubr.bf16.mxu0 0
      %2662 = vmatmul.mubr.bf16.gmra.mrb[0].mxu0 %v2499
      %v2663 = vpop.f32.mrb[0].mxu0
      %v2664 = vadd.f32 0.0, %v2663
      %v2665 = vpop.f32.mrb[0].mxu0
      %v2666 = vpop.f32.mrb[0].mxu0
      %v2667 = vadd.f32 0.0, %v2666
      %v2668 = vpop.f32.mrb[0].mxu0
      %2669 = vmatprep.mubr.bf16.mxu0 0
      %2670 = vmatmul.mubr.bf16.gmra.mrb[0].mxu0 %v2500
      %v2671 = vpop.f32.mrb[0].mxu0
      %v2672 = vadd.f32 0.0, %v2671
      %v2673 = vpop.f32.mrb[0].mxu0
      %v2674 = vpop.f32.mrb[0].mxu0
      %v2675 = vadd.f32 0.0, %v2674
      %v2676 = vpop.f32.mrb[0].mxu0
      %2677 = vmatprep.mubr.bf16.mxu0 0
      %2678 = vmatmul.mubr.bf16.gmra.mrb[0].mxu0 %v2501
      %v2679 = vpop.f32.mrb[0].mxu0
      %v2680 = vadd.f32 0.0, %v2679
      %v2681 = vpop.f32.mrb[0].mxu0
      %v2682 = vpop.f32.mrb[0].mxu0
      %v2683 = vadd.f32 0.0, %v2682
      %v2684 = vpop.f32.mrb[0].mxu0
      %2685 = vmatprep.mubr.bf16.mxu0 0
      %2686 = vmatmul.mubr.bf16.gmra.mrb[0].mxu0 %v2502
      %v2687 = vpop.f32.mrb[0].mxu0
      %v2688 = vadd.f32 0.0, %v2687
      %v2689 = vpop.f32.mrb[0].mxu0
      %v2690 = vpop.f32.mrb[0].mxu0
      %v2691 = vadd.f32 0.0, %v2690
      %v2692 = vpop.f32.mrb[0].mxu0
      %2693 = vmatprep.mubr.bf16.mxu0 0
      %2694 = vmatmul.mubr.bf16.gmra.mrb[0].mxu0 %v2503
      %v2695 = vpop.f32.mrb[0].mxu0
      %v2696 = vadd.f32 0.0, %v2695
      %v2697 = vpop.f32.mrb[0].mxu0
      %v2698 = vpop.f32.mrb[0].mxu0
      %v2699 = vadd.f32 0.0, %v2698
      %v2700 = vpop.f32.mrb[0].mxu0
      %2701 = vmatprep.mubr.bf16.mxu0 0
      %2702 = vmatmul.mubr.bf16.gmra.mrb[0].mxu0 %v2504
      %v2703 = vpop.f32.mrb[0].mxu0
      %v2704 = vadd.f32 0.0, %v2703
      %v2705 = vpop.f32.mrb[0].mxu0
      %v2706 = vpop.f32.mrb[0].mxu0
      %v2707 = vadd.f32 0.0, %v2706
      %v2708 = vpop.f32.mrb[0].mxu0
      %2709 = vmatprep.mubr.bf16.mxu0 0
      %2710 = vmatmul.mubr.bf16.gmra.mrb[0].mxu0 %v2505
      %v2711 = vpop.f32.mrb[0].mxu0
      %v2712 = vadd.f32 0.0, %v2711
      %v2713 = vpop.f32.mrb[0].mxu0
      %v2714 = vpop.f32.mrb[0].mxu0
      %v2715 = vadd.f32 0.0, %v2714
      %v2716 = vpop.f32.mrb[0].mxu0
      %2717 = vmatprep.mubr.bf16.mxu0 0
      %2718 = vmatmul.mubr.bf16.gmra.mrb[0].mxu0 %v2506
      %v2719 = vpop.f32.mrb[0].mxu0
      %v2720 = vadd.f32 0.0, %v2719
      %v2721 = vpop.f32.mrb[0].mxu0
      %v2722 = vpop.f32.mrb[0].mxu0
      %v2723 = vadd.f32 0.0, %v2722
      %v2724 = vpop.f32.mrb[0].mxu0
      %2725 = vmatprep.mubr.bf16.mxu0 0
      %2726 = vmatmul.mubr.bf16.gmra.mrb[0].mxu0 %v2507
      %v2727 = vpop.f32.mrb[0].mxu0
      %v2728 = vadd.f32 0.0, %v2727
      %v2729 = vpop.f32.mrb[0].mxu0
      %v2730 = vpop.f32.mrb[0].mxu0
      %v2731 = vadd.f32 0.0, %v2730
      %v2732 = vpop.f32.mrb[0].mxu0
      %2733 = vdwg.mxu0
      %v2734 = vld [vmem:[%s226] sm:$0xff]
      %v2735 = vld [vmem:[%s226 + $0x8] sm:$0xff]
      %v2736 = vld [vmem:[%s226 + $0x10] sm:$0xff]
      %v2737 = vld [vmem:[%s226 + $0x18] sm:$0xff]
      %v2738 = vld [vmem:[%s226 + $0x20] sm:$0xff]
      %v2739 = vld [vmem:[%s226 + $0x28] sm:$0xff]
      %v2740 = vld [vmem:[%s226 + $0x30] sm:$0xff]
      %v2741 = vld [vmem:[%s226 + $0x38] sm:$0xff]
      %v2742 = vld [vmem:[%s226 + $0x40] sm:$0xff]
      %v2743 = vld [vmem:[%s226 + $0x48] sm:$0xff]
      %v2744 = vld [vmem:[%s226 + $0x50] sm:$0xff]
      %v2745 = vld [vmem:[%s226 + $0x58] sm:$0xff]
      %v2746 = vld [vmem:[%s226 + $0x60] sm:$0xff]
      %v2747 = vld [vmem:[%s226 + $0x68] sm:$0xff]
      %v2748 = vld [vmem:[%s226 + $0x70] sm:$0xff]
      %v2749 = vld [vmem:[%s226 + $0x78] sm:$0xff]
      %v2750 = vld [vmem:[%s226 + $0x80] sm:$0xff]
      %v2751 = vld [vmem:[%s226 + $0x88] sm:$0xff]
      %v2752 = vld [vmem:[%s226 + $0x90] sm:$0xff]
      %v2753 = vld [vmem:[%s226 + $0x98] sm:$0xff]
      %v2754 = vld [vmem:[%s226 + $0xa0] sm:$0xff]
      %v2755 = vld [vmem:[%s226 + $0xa8] sm:$0xff]
      %v2756 = vld [vmem:[%s226 + $0xb0] sm:$0xff]
      %v2757 = vld [vmem:[%s226 + $0xb8] sm:$0xff]
      %v2758 = vld [vmem:[%s226 + $0xc0] sm:$0xff]
      %v2759 = vld [vmem:[%s226 + $0xc8] sm:$0xff]
      %v2760 = vld [vmem:[%s226 + $0xd0] sm:$0xff]
      %v2761 = vld [vmem:[%s226 + $0xd8] sm:$0xff]
      %v2762 = vld [vmem:[%s226 + $0xe0] sm:$0xff]
      %v2763 = vld [vmem:[%s226 + $0xe8] sm:$0xff]
      %v2764 = vld [vmem:[%s226 + $0xf0] sm:$0xff]
      %v2765 = vld [vmem:[%s226 + $0xf8] sm:$0xff]
      %v2766 = vadd.f32 %v2734, %v2608
      %v2767 = vadd.f32 %v2735, %v2611
      %v2768 = vadd.f32 %v2736, %v2616
      %v2769 = vadd.f32 %v2737, %v2619
      %v2770 = vadd.f32 %v2738, %v2624
      %v2771 = vadd.f32 %v2739, %v2627
      %v2772 = vadd.f32 %v2740, %v2632
      %v2773 = vadd.f32 %v2741, %v2635
      %v2774 = vadd.f32 %v2742, %v2640
      %v2775 = vadd.f32 %v2743, %v2643
      %v2776 = vadd.f32 %v2744, %v2648
      %v2777 = vadd.f32 %v2745, %v2651
      %v2778 = vadd.f32 %v2746, %v2656
      %v2779 = vadd.f32 %v2747, %v2659
      %v2780 = vadd.f32 %v2748, %v2664
      %v2781 = vadd.f32 %v2749, %v2667
      %v2782 = vadd.f32 %v2750, %v2672
      %v2783 = vadd.f32 %v2751, %v2675
      %v2784 = vadd.f32 %v2752, %v2680
      %v2785 = vadd.f32 %v2753, %v2683
      %v2786 = vadd.f32 %v2754, %v2688
      %v2787 = vadd.f32 %v2755, %v2691
      %v2788 = vadd.f32 %v2756, %v2696
      %v2789 = vadd.f32 %v2757, %v2699
      %v2790 = vadd.f32 %v2758, %v2704
      %v2791 = vadd.f32 %v2759, %v2707
      %v2792 = vadd.f32 %v2760, %v2712
      %v2793 = vadd.f32 %v2761, %v2715
      %v2794 = vadd.f32 %v2762, %v2720
      %v2795 = vadd.f32 %v2763, %v2723
      %v2796 = vadd.f32 %v2764, %v2728
      %v2797 = vadd.f32 %v2765, %v2731
      %2798 = vst [vmem:[%s226] sm:$0xff] %v2766
      %2799 = vst [vmem:[%s226 + $0x8] sm:$0xff] %v2767
      %2800 = vst [vmem:[%s226 + $0x10] sm:$0xff] %v2768
      %2801 = vst [vmem:[%s226 + $0x18] sm:$0xff] %v2769
      %2802 = vst [vmem:[%s226 + $0x20] sm:$0xff] %v2770
      %2803 = vst [vmem:[%s226 + $0x28] sm:$0xff] %v2771
      %2804 = vst [vmem:[%s226 + $0x30] sm:$0xff] %v2772
      %2805 = vst [vmem:[%s226 + $0x38] sm:$0xff] %v2773
      %2806 = vst [vmem:[%s226 + $0x40] sm:$0xff] %v2774
      %2807 = vst [vmem:[%s226 + $0x48] sm:$0xff] %v2775
      %2808 = vst [vmem:[%s226 + $0x50] sm:$0xff] %v2776
      %2809 = vst [vmem:[%s226 + $0x58] sm:$0xff] %v2777
      %2810 = vst [vmem:[%s226 + $0x60] sm:$0xff] %v2778
      %2811 = vst [vmem:[%s226 + $0x68] sm:$0xff] %v2779
      %2812 = vst [vmem:[%s226 + $0x70] sm:$0xff] %v2780
      %2813 = vst [vmem:[%s226 + $0x78] sm:$0xff] %v2781
      %2814 = vst [vmem:[%s226 + $0x80] sm:$0xff] %v2782
      %2815 = vst [vmem:[%s226 + $0x88] sm:$0xff] %v2783
      %2816 = vst [vmem:[%s226 + $0x90] sm:$0xff] %v2784
      %2817 = vst [vmem:[%s226 + $0x98] sm:$0xff] %v2785
      %2818 = vst [vmem:[%s226 + $0xa0] sm:$0xff] %v2786
      %2819 = vst [vmem:[%s226 + $0xa8] sm:$0xff] %v2787
      %2820 = vst [vmem:[%s226 + $0xb0] sm:$0xff] %v2788
      %2821 = vst [vmem:[%s226 + $0xb8] sm:$0xff] %v2789
      %2822 = vst [vmem:[%s226 + $0xc0] sm:$0xff] %v2790
      %2823 = vst [vmem:[%s226 + $0xc8] sm:$0xff] %v2791
      %2824 = vst [vmem:[%s226 + $0xd0] sm:$0xff] %v2792
      %2825 = vst [vmem:[%s226 + $0xd8] sm:$0xff] %v2793
      %2826 = vst [vmem:[%s226 + $0xe0] sm:$0xff] %v2794
      %2827 = vst [vmem:[%s226 + $0xe8] sm:$0xff] %v2795
      %2828 = vst [vmem:[%s226 + $0xf0] sm:$0xff] %v2796
      %2829 = vst [vmem:[%s226 + $0xf8] sm:$0xff] %v2797
      %s2830 = scalar_lea.vmem [#allocation2], 64
      %v2831 = vld [vmem:[%s2830 + $0x7] sm:$0xff]
      %v2832 = vld [vmem:[%s2830 + $0xf] sm:$0xff]
      %v2833 = vld [vmem:[%s2830 + $0x27] sm:$0xff]
      %v2834 = vld [vmem:[%s2830 + $0x2f] sm:$0xff]
      %v2835 = vld [vmem:[%s2830 + $0x47] sm:$0xff]
      %v2836 = vld [vmem:[%s2830 + $0x4f] sm:$0xff]
      %v2837 = vld [vmem:[%s2830 + $0x67] sm:$0xff]
      %v2838 = vld [vmem:[%s2830 + $0x6f] sm:$0xff]
      %v2839 = vld [vmem:[%s2830 + $0x87] sm:$0xff]
      %v2840 = vld [vmem:[%s2830 + $0x8f] sm:$0xff]
      %v2841 = vld [vmem:[%s2830 + $0xa7] sm:$0xff]
      %v2842 = vld [vmem:[%s2830 + $0xaf] sm:$0xff]
      %v2843 = vld [vmem:[%s2830 + $0xc7] sm:$0xff]
      %v2844 = vld [vmem:[%s2830 + $0xcf] sm:$0xff]
      %v2845 = vld [vmem:[%s2830 + $0xe7] sm:$0xff]
      %v2846 = vld [vmem:[%s2830 + $0xef] sm:$0xff]
      %v2847 = vld [vmem:[%s2830 + $0x107] sm:$0xff]
      %v2848 = vld [vmem:[%s2830 + $0x10f] sm:$0xff]
      %v2849 = vld [vmem:[%s2830 + $0x127] sm:$0xff]
      %v2850 = vld [vmem:[%s2830 + $0x12f] sm:$0xff]
      %v2851 = vld [vmem:[%s2830 + $0x147] sm:$0xff]
      %v2852 = vld [vmem:[%s2830 + $0x14f] sm:$0xff]
      %v2853 = vld [vmem:[%s2830 + $0x167] sm:$0xff]
      %v2854 = vld [vmem:[%s2830 + $0x16f] sm:$0xff]
      %v2855 = vld [vmem:[%s2830 + $0x187] sm:$0xff]
      %v2856 = vld [vmem:[%s2830 + $0x18f] sm:$0xff]
      %v2857 = vld [vmem:[%s2830 + $0x1a7] sm:$0xff]
      %v2858 = vld [vmem:[%s2830 + $0x1af] sm:$0xff]
      %v2859 = vld [vmem:[%s2830 + $0x1c7] sm:$0xff]
      %v2860 = vld [vmem:[%s2830 + $0x1cf] sm:$0xff]
      %v2861 = vld [vmem:[%s2830 + $0x1e7] sm:$0xff]
      %v2862 = vld [vmem:[%s2830 + $0x1ef] sm:$0xff]
      %v2863 = vpack.c.bf16 %v2832, %v2831
      %v2864 = vpack.c.bf16 %v2834, %v2833
      %v2865 = vpack.c.bf16 %v2836, %v2835
      %v2866 = vpack.c.bf16 %v2838, %v2837
      %v2867 = vpack.c.bf16 %v2840, %v2839
      %v2868 = vpack.c.bf16 %v2842, %v2841
      %v2869 = vpack.c.bf16 %v2844, %v2843
      %v2870 = vpack.c.bf16 %v2846, %v2845
      %v2871 = vpack.c.bf16 %v2848, %v2847
      %v2872 = vpack.c.bf16 %v2850, %v2849
      %v2873 = vpack.c.bf16 %v2852, %v2851
      %v2874 = vpack.c.bf16 %v2854, %v2853
      %v2875 = vpack.c.bf16 %v2856, %v2855
      %v2876 = vpack.c.bf16 %v2858, %v2857
      %v2877 = vpack.c.bf16 %v2860, %v2859
      %v2878 = vpack.c.bf16 %v2862, %v2861
      %s2879 = scalar_lea.vmem %s3, 384
      %v2880 = vld [vmem:[%s2879] sm:$0xf]
      %v2881 = vld [vmem:[%s2879 + $0x4] sm:$0xf]
      %v2882 = vld [vmem:[%s2879 + $0x8] sm:$0xf]
      %v2883 = vld [vmem:[%s2879 + $0xc] sm:$0xf]
      %v2884 = vld [vmem:[%s2879 + $0x10] sm:$0xf]
      %v2885 = vld [vmem:[%s2879 + $0x14] sm:$0xf]
      %v2886 = vld [vmem:[%s2879 + $0x18] sm:$0xf]
      %v2887 = vld [vmem:[%s2879 + $0x1c] sm:$0xf]
      %v2888 = vld [vmem:[%s2879 + $0x20] sm:$0xf]
      %v2889 = vld [vmem:[%s2879 + $0x24] sm:$0xf]
      %v2890 = vld [vmem:[%s2879 + $0x28] sm:$0xf]
      %v2891 = vld [vmem:[%s2879 + $0x2c] sm:$0xf]
      %v2892 = vld [vmem:[%s2879 + $0x30] sm:$0xf]
      %v2893 = vld [vmem:[%s2879 + $0x34] sm:$0xf]
      %v2894 = vld [vmem:[%s2879 + $0x38] sm:$0xf]
      %v2895 = vld [vmem:[%s2879 + $0x3c] sm:$0xf]
      %v2912 = vunpack.c.l.b16 %v2880
      %v2913 = vunpack.c.l.b16 %v2881
      %v2914 = vunpack.c.l.b16 %v2882
      %v2915 = vunpack.c.l.b16 %v2883
      %v2916 = vunpack.c.l.b16 %v2884
      %v2917 = vunpack.c.l.b16 %v2885
      %v2918 = vunpack.c.l.b16 %v2886
      %v2919 = vunpack.c.l.b16 %v2887
      %v2920 = vunpack.c.l.b16 %v2888
      %v2921 = vunpack.c.l.b16 %v2889
      %v2922 = vunpack.c.l.b16 %v2890
      %v2923 = vunpack.c.l.b16 %v2891
      %v2924 = vunpack.c.l.b16 %v2892
      %v2925 = vunpack.c.l.b16 %v2893
      %v2926 = vunpack.c.l.b16 %v2894
      %v2927 = vunpack.c.l.b16 %v2895
      %v2928 = vpack.c.b16 %v2913, %v2912
      %v2929 = vpack.c.b16 %v2915, %v2914
      %v2930 = vpack.c.b16 %v2917, %v2916
      %v2931 = vpack.c.b16 %v2919, %v2918
      %v2932 = vpack.c.b16 %v2921, %v2920
      %v2933 = vpack.c.b16 %v2923, %v2922
      %v2934 = vpack.c.b16 %v2925, %v2924
      %v2935 = vpack.c.b16 %v2927, %v2926
      %2944 = vmatprep.subr.bf16.mxu0 0
      %2945 = vmatpush1.bf16.msra.mxu0 %v2928
      %2946 = vmatprep.subr.bf16.mxu0 0
      %2947 = vmatpush1.bf16.msra.mxu0 %v2929
      %2948 = vmatprep.subr.bf16.mxu0 0
      %2949 = vmatpush1.bf16.msra.mxu0 %v2930
      %2950 = vmatprep.subr.bf16.mxu0 0
      %2951 = vmatpush1.bf16.msra.mxu0 %v2931
      %2952 = vmatprep.subr.bf16.mxu0 0
      %2953 = vmatpush1.bf16.msra.mxu0 %v2932
      %2954 = vmatprep.subr.bf16.mxu0 0
      %2955 = vmatpush1.bf16.msra.mxu0 %v2933
      %2956 = vmatprep.subr.bf16.mxu0 0
      %2957 = vmatpush1.bf16.msra.mxu0 %v2934
      %2958 = vmatprep.subr.bf16.mxu0 0
      %2959 = vmatpush1.bf16.msra.mxu0 %v2935
      %2960 = vmatprep.subr.bf16.mxu0 0
      %2961 = vmatpush1.bf16.msra.mxu0 0
      %2962 = vmatprep.subr.bf16.mxu0 0
      %2963 = vmatpush1.bf16.msra.mxu0 0
      %2964 = vmatprep.subr.bf16.mxu0 0
      %2965 = vmatpush1.bf16.msra.mxu0 0
      %2966 = vmatprep.subr.bf16.mxu0 0
      %2967 = vmatpush1.bf16.msra.mxu0 0
      %2968 = vmatprep.subr.bf16.mxu0 0
      %2969 = vmatpush1.bf16.msra.mxu0 0
      %2970 = vmatprep.subr.bf16.mxu0 0
      %2971 = vmatpush1.bf16.msra.mxu0 0
      %2972 = vmatprep.subr.bf16.mxu0 0
      %2973 = vmatpush1.bf16.msra.mxu0 0
      %2974 = vmatprep.subr.bf16.mxu0 0
      %2975 = vmatpush1.bf16.msra.mxu0 0
      %2976 = vmatprep.mubr.bf16.mxu0 0
      %2977 = vmatmul.mubr.bf16.gmra.mrb[0].mxu0 %v2863
      %v2978 = vpop.f32.mrb[0].mxu0
      %v2979 = vadd.f32 0.0, %v2978
      %v2980 = vpop.f32.mrb[0].mxu0
      %v2981 = vpop.f32.mrb[0].mxu0
      %v2982 = vadd.f32 0.0, %v2981
      %v2983 = vpop.f32.mrb[0].mxu0
      %2984 = vmatprep.mubr.bf16.mxu0 0
      %2985 = vmatmul.mubr.bf16.gmra.mrb[0].mxu0 %v2864
      %v2986 = vpop.f32.mrb[0].mxu0
      %v2987 = vadd.f32 0.0, %v2986
      %v2988 = vpop.f32.mrb[0].mxu0
      %v2989 = vpop.f32.mrb[0].mxu0
      %v2990 = vadd.f32 0.0, %v2989
      %v2991 = vpop.f32.mrb[0].mxu0
      %2992 = vmatprep.mubr.bf16.mxu0 0
      %2993 = vmatmul.mubr.bf16.gmra.mrb[0].mxu0 %v2865
      %v2994 = vpop.f32.mrb[0].mxu0
      %v2995 = vadd.f32 0.0, %v2994
      %v2996 = vpop.f32.mrb[0].mxu0
      %v2997 = vpop.f32.mrb[0].mxu0
      %v2998 = vadd.f32 0.0, %v2997
      %v2999 = vpop.f32.mrb[0].mxu0
      %3000 = vmatprep.mubr.bf16.mxu0 0
      %3001 = vmatmul.mubr.bf16.gmra.mrb[0].mxu0 %v2866
      %v3002 = vpop.f32.mrb[0].mxu0
      %v3003 = vadd.f32 0.0, %v3002
      %v3004 = vpop.f32.mrb[0].mxu0
      %v3005 = vpop.f32.mrb[0].mxu0
      %v3006 = vadd.f32 0.0, %v3005
      %v3007 = vpop.f32.mrb[0].mxu0
      %3008 = vmatprep.mubr.bf16.mxu0 0
      %3009 = vmatmul.mubr.bf16.gmra.mrb[0].mxu0 %v2867
      %v3010 = vpop.f32.mrb[0].mxu0
      %v3011 = vadd.f32 0.0, %v3010
      %v3012 = vpop.f32.mrb[0].mxu0
      %v3013 = vpop.f32.mrb[0].mxu0
      %v3014 = vadd.f32 0.0, %v3013
      %v3015 = vpop.f32.mrb[0].mxu0
      %3016 = vmatprep.mubr.bf16.mxu0 0
      %3017 = vmatmul.mubr.bf16.gmra.mrb[0].mxu0 %v2868
      %v3018 = vpop.f32.mrb[0].mxu0
      %v3019 = vadd.f32 0.0, %v3018
      %v3020 = vpop.f32.mrb[0].mxu0
      %v3021 = vpop.f32.mrb[0].mxu0
      %v3022 = vadd.f32 0.0, %v3021
      %v3023 = vpop.f32.mrb[0].mxu0
      %3024 = vmatprep.mubr.bf16.mxu0 0
      %3025 = vmatmul.mubr.bf16.gmra.mrb[0].mxu0 %v2869
      %v3026 = vpop.f32.mrb[0].mxu0
      %v3027 = vadd.f32 0.0, %v3026
      %v3028 = vpop.f32.mrb[0].mxu0
      %v3029 = vpop.f32.mrb[0].mxu0
      %v3030 = vadd.f32 0.0, %v3029
      %v3031 = vpop.f32.mrb[0].mxu0
      %3032 = vmatprep.mubr.bf16.mxu0 0
      %3033 = vmatmul.mubr.bf16.gmra.mrb[0].mxu0 %v2870
      %v3034 = vpop.f32.mrb[0].mxu0
      %v3035 = vadd.f32 0.0, %v3034
      %v3036 = vpop.f32.mrb[0].mxu0
      %v3037 = vpop.f32.mrb[0].mxu0
      %v3038 = vadd.f32 0.0, %v3037
      %v3039 = vpop.f32.mrb[0].mxu0
      %3040 = vmatprep.mubr.bf16.mxu0 0
      %3041 = vmatmul.mubr.bf16.gmra.mrb[0].mxu0 %v2871
      %v3042 = vpop.f32.mrb[0].mxu0
      %v3043 = vadd.f32 0.0, %v3042
      %v3044 = vpop.f32.mrb[0].mxu0
      %v3045 = vpop.f32.mrb[0].mxu0
      %v3046 = vadd.f32 0.0, %v3045
      %v3047 = vpop.f32.mrb[0].mxu0
      %3048 = vmatprep.mubr.bf16.mxu0 0
      %3049 = vmatmul.mubr.bf16.gmra.mrb[0].mxu0 %v2872
      %v3050 = vpop.f32.mrb[0].mxu0
      %v3051 = vadd.f32 0.0, %v3050
      %v3052 = vpop.f32.mrb[0].mxu0
      %v3053 = vpop.f32.mrb[0].mxu0
      %v3054 = vadd.f32 0.0, %v3053
      %v3055 = vpop.f32.mrb[0].mxu0
      %3056 = vmatprep.mubr.bf16.mxu0 0
      %3057 = vmatmul.mubr.bf16.gmra.mrb[0].mxu0 %v2873
      %v3058 = vpop.f32.mrb[0].mxu0
      %v3059 = vadd.f32 0.0, %v3058
      %v3060 = vpop.f32.mrb[0].mxu0
      %v3061 = vpop.f32.mrb[0].mxu0
      %v3062 = vadd.f32 0.0, %v3061
      %v3063 = vpop.f32.mrb[0].mxu0
      %3064 = vmatprep.mubr.bf16.mxu0 0
      %3065 = vmatmul.mubr.bf16.gmra.mrb[0].mxu0 %v2874
      %v3066 = vpop.f32.mrb[0].mxu0
      %v3067 = vadd.f32 0.0, %v3066
      %v3068 = vpop.f32.mrb[0].mxu0
      %v3069 = vpop.f32.mrb[0].mxu0
      %v3070 = vadd.f32 0.0, %v3069
      %v3071 = vpop.f32.mrb[0].mxu0
      %3072 = vmatprep.mubr.bf16.mxu0 0
      %3073 = vmatmul.mubr.bf16.gmra.mrb[0].mxu0 %v2875
      %v3074 = vpop.f32.mrb[0].mxu0
      %v3075 = vadd.f32 0.0, %v3074
      %v3076 = vpop.f32.mrb[0].mxu0
      %v3077 = vpop.f32.mrb[0].mxu0
      %v3078 = vadd.f32 0.0, %v3077
      %v3079 = vpop.f32.mrb[0].mxu0
      %3080 = vmatprep.mubr.bf16.mxu0 0
      %3081 = vmatmul.mubr.bf16.gmra.mrb[0].mxu0 %v2876
      %v3082 = vpop.f32.mrb[0].mxu0
      %v3083 = vadd.f32 0.0, %v3082
      %v3084 = vpop.f32.mrb[0].mxu0
      %v3085 = vpop.f32.mrb[0].mxu0
      %v3086 = vadd.f32 0.0, %v3085
      %v3087 = vpop.f32.mrb[0].mxu0
      %3088 = vmatprep.mubr.bf16.mxu0 0
      %3089 = vmatmul.mubr.bf16.gmra.mrb[0].mxu0 %v2877
      %v3090 = vpop.f32.mrb[0].mxu0
      %v3091 = vadd.f32 0.0, %v3090
      %v3092 = vpop.f32.mrb[0].mxu0
      %v3093 = vpop.f32.mrb[0].mxu0
      %v3094 = vadd.f32 0.0, %v3093
      %v3095 = vpop.f32.mrb[0].mxu0
      %3096 = vmatprep.mubr.bf16.mxu0 0
      %3097 = vmatmul.mubr.bf16.gmra.mrb[0].mxu0 %v2878
      %v3098 = vpop.f32.mrb[0].mxu0
      %v3099 = vadd.f32 0.0, %v3098
      %v3100 = vpop.f32.mrb[0].mxu0
      %v3101 = vpop.f32.mrb[0].mxu0
      %v3102 = vadd.f32 0.0, %v3101
      %v3103 = vpop.f32.mrb[0].mxu0
      %3104 = vdwg.mxu0
      %v3105 = vld [vmem:[%s226] sm:$0xff]
      %v3106 = vld [vmem:[%s226 + $0x8] sm:$0xff]
      %v3107 = vld [vmem:[%s226 + $0x10] sm:$0xff]
      %v3108 = vld [vmem:[%s226 + $0x18] sm:$0xff]
      %v3109 = vld [vmem:[%s226 + $0x20] sm:$0xff]
      %v3110 = vld [vmem:[%s226 + $0x28] sm:$0xff]
      %v3111 = vld [vmem:[%s226 + $0x30] sm:$0xff]
      %v3112 = vld [vmem:[%s226 + $0x38] sm:$0xff]
      %v3113 = vld [vmem:[%s226 + $0x40] sm:$0xff]
      %v3114 = vld [vmem:[%s226 + $0x48] sm:$0xff]
      %v3115 = vld [vmem:[%s226 + $0x50] sm:$0xff]
      %v3116 = vld [vmem:[%s226 + $0x58] sm:$0xff]
      %v3117 = vld [vmem:[%s226 + $0x60] sm:$0xff]
      %v3118 = vld [vmem:[%s226 + $0x68] sm:$0xff]
      %v3119 = vld [vmem:[%s226 + $0x70] sm:$0xff]
      %v3120 = vld [vmem:[%s226 + $0x78] sm:$0xff]
      %v3121 = vld [vmem:[%s226 + $0x80] sm:$0xff]
      %v3122 = vld [vmem:[%s226 + $0x88] sm:$0xff]
      %v3123 = vld [vmem:[%s226 + $0x90] sm:$0xff]
      %v3124 = vld [vmem:[%s226 + $0x98] sm:$0xff]
      %v3125 = vld [vmem:[%s226 + $0xa0] sm:$0xff]
      %v3126 = vld [vmem:[%s226 + $0xa8] sm:$0xff]
      %v3127 = vld [vmem:[%s226 + $0xb0] sm:$0xff]
      %v3128 = vld [vmem:[%s226 + $0xb8] sm:$0xff]
      %v3129 = vld [vmem:[%s226 + $0xc0] sm:$0xff]
      %v3130 = vld [vmem:[%s226 + $0xc8] sm:$0xff]
      %v3131 = vld [vmem:[%s226 + $0xd0] sm:$0xff]
      %v3132 = vld [vmem:[%s226 + $0xd8] sm:$0xff]
      %v3133 = vld [vmem:[%s226 + $0xe0] sm:$0xff]
      %v3134 = vld [vmem:[%s226 + $0xe8] sm:$0xff]
      %v3135 = vld [vmem:[%s226 + $0xf0] sm:$0xff]
      %v3136 = vld [vmem:[%s226 + $0xf8] sm:$0xff]
      %v3137 = vadd.f32 %v3105, %v2979
      %v3138 = vadd.f32 %v3106, %v2982
      %v3139 = vadd.f32 %v3107, %v2987
      %v3140 = vadd.f32 %v3108, %v2990
      %v3141 = vadd.f32 %v3109, %v2995
      %v3142 = vadd.f32 %v3110, %v2998
      %v3143 = vadd.f32 %v3111, %v3003
      %v3144 = vadd.f32 %v3112, %v3006
      %v3145 = vadd.f32 %v3113, %v3011
      %v3146 = vadd.f32 %v3114, %v3014
      %v3147 = vadd.f32 %v3115, %v3019
      %v3148 = vadd.f32 %v3116, %v3022
      %v3149 = vadd.f32 %v3117, %v3027
      %v3150 = vadd.f32 %v3118, %v3030
      %v3151 = vadd.f32 %v3119, %v3035
      %v3152 = vadd.f32 %v3120, %v3038
      %v3153 = vadd.f32 %v3121, %v3043
      %v3154 = vadd.f32 %v3122, %v3046
      %v3155 = vadd.f32 %v3123, %v3051
      %v3156 = vadd.f32 %v3124, %v3054
      %v3157 = vadd.f32 %v3125, %v3059
      %v3158 = vadd.f32 %v3126, %v3062
      %v3159 = vadd.f32 %v3127, %v3067
      %v3160 = vadd.f32 %v3128, %v3070
      %v3161 = vadd.f32 %v3129, %v3075
      %v3162 = vadd.f32 %v3130, %v3078
      %v3163 = vadd.f32 %v3131, %v3083
      %v3164 = vadd.f32 %v3132, %v3086
      %v3165 = vadd.f32 %v3133, %v3091
      %v3166 = vadd.f32 %v3134, %v3094
      %v3167 = vadd.f32 %v3135, %v3099
      %v3168 = vadd.f32 %v3136, %v3102
      %3169 = vst [vmem:[%s226] sm:$0xff] %v3137
      %3170 = vst [vmem:[%s226 + $0x8] sm:$0xff] %v3138
      %3171 = vst [vmem:[%s226 + $0x10] sm:$0xff] %v3139
      %3172 = vst [vmem:[%s226 + $0x18] sm:$0xff] %v3140
      %3173 = vst [vmem:[%s226 + $0x20] sm:$0xff] %v3141
      %3174 = vst [vmem:[%s226 + $0x28] sm:$0xff] %v3142
      %3175 = vst [vmem:[%s226 + $0x30] sm:$0xff] %v3143
      %3176 = vst [vmem:[%s226 + $0x38] sm:$0xff] %v3144
      %3177 = vst [vmem:[%s226 + $0x40] sm:$0xff] %v3145
      %3178 = vst [vmem:[%s226 + $0x48] sm:$0xff] %v3146
      %3179 = vst [vmem:[%s226 + $0x50] sm:$0xff] %v3147
      %3180 = vst [vmem:[%s226 + $0x58] sm:$0xff] %v3148
      %3181 = vst [vmem:[%s226 + $0x60] sm:$0xff] %v3149
      %3182 = vst [vmem:[%s226 + $0x68] sm:$0xff] %v3150
      %3183 = vst [vmem:[%s226 + $0x70] sm:$0xff] %v3151
      %3184 = vst [vmem:[%s226 + $0x78] sm:$0xff] %v3152
      %3185 = vst [vmem:[%s226 + $0x80] sm:$0xff] %v3153
      %3186 = vst [vmem:[%s226 + $0x88] sm:$0xff] %v3154
      %3187 = vst [vmem:[%s226 + $0x90] sm:$0xff] %v3155
      %3188 = vst [vmem:[%s226 + $0x98] sm:$0xff] %v3156
      %3189 = vst [vmem:[%s226 + $0xa0] sm:$0xff] %v3157
      %3190 = vst [vmem:[%s226 + $0xa8] sm:$0xff] %v3158
      %3191 = vst [vmem:[%s226 + $0xb0] sm:$0xff] %v3159
      %3192 = vst [vmem:[%s226 + $0xb8] sm:$0xff] %v3160
      %3193 = vst [vmem:[%s226 + $0xc0] sm:$0xff] %v3161
      %3194 = vst [vmem:[%s226 + $0xc8] sm:$0xff] %v3162
      %3195 = vst [vmem:[%s226 + $0xd0] sm:$0xff] %v3163
      %3196 = vst [vmem:[%s226 + $0xd8] sm:$0xff] %v3164
      %3197 = vst [vmem:[%s226 + $0xe0] sm:$0xff] %v3165
      %3198 = vst [vmem:[%s226 + $0xe8] sm:$0xff] %v3166
      %3199 = vst [vmem:[%s226 + $0xf0] sm:$0xff] %v3167
      %3200 = vst [vmem:[%s226 + $0xf8] sm:$0xff] %v3168
      %v3201 = vld [vmem:[%s2830 + $0x8] sm:$0xff]
      %v3202 = vld [vmem:[%s2830 + $0x10] sm:$0xff]
      %v3203 = vld [vmem:[%s2830 + $0x28] sm:$0xff]
      %v3204 = vld [vmem:[%s2830 + $0x30] sm:$0xff]
      %v3205 = vld [vmem:[%s2830 + $0x48] sm:$0xff]
      %v3206 = vld [vmem:[%s2830 + $0x50] sm:$0xff]
      %v3207 = vld [vmem:[%s2830 + $0x68] sm:$0xff]
      %v3208 = vld [vmem:[%s2830 + $0x70] sm:$0xff]
      %v3209 = vld [vmem:[%s2830 + $0x88] sm:$0xff]
      %v3210 = vld [vmem:[%s2830 + $0x90] sm:$0xff]
      %v3211 = vld [vmem:[%s2830 + $0xa8] sm:$0xff]
      %v3212 = vld [vmem:[%s2830 + $0xb0] sm:$0xff]
      %v3213 = vld [vmem:[%s2830 + $0xc8] sm:$0xff]
      %v3214 = vld [vmem:[%s2830 + $0xd0] sm:$0xff]
      %v3215 = vld [vmem:[%s2830 + $0xe8] sm:$0xff]
      %v3216 = vld [vmem:[%s2830 + $0xf0] sm:$0xff]
      %v3217 = vld [vmem:[%s2830 + $0x108] sm:$0xff]
      %v3218 = vld [vmem:[%s2830 + $0x110] sm:$0xff]
      %v3219 = vld [vmem:[%s2830 + $0x128] sm:$0xff]
      %v3220 = vld [vmem:[%s2830 + $0x130] sm:$0xff]
      %v3221 = vld [vmem:[%s2830 + $0x148] sm:$0xff]
      %v3222 = vld [vmem:[%s2830 + $0x150] sm:$0xff]
      %v3223 = vld [vmem:[%s2830 + $0x168] sm:$0xff]
      %v3224 = vld [vmem:[%s2830 + $0x170] sm:$0xff]
      %v3225 = vld [vmem:[%s2830 + $0x188] sm:$0xff]
      %v3226 = vld [vmem:[%s2830 + $0x190] sm:$0xff]
      %v3227 = vld [vmem:[%s2830 + $0x1a8] sm:$0xff]
      %v3228 = vld [vmem:[%s2830 + $0x1b0] sm:$0xff]
      %v3229 = vld [vmem:[%s2830 + $0x1c8] sm:$0xff]
      %v3230 = vld [vmem:[%s2830 + $0x1d0] sm:$0xff]
      %v3231 = vld [vmem:[%s2830 + $0x1e8] sm:$0xff]
      %v3232 = vld [vmem:[%s2830 + $0x1f0] sm:$0xff]
      %v3233 = vpack.c.bf16 %v3202, %v3201
      %v3234 = vpack.c.bf16 %v3204, %v3203
      %v3235 = vpack.c.bf16 %v3206, %v3205
      %v3236 = vpack.c.bf16 %v3208, %v3207
      %v3237 = vpack.c.bf16 %v3210, %v3209
      %v3238 = vpack.c.bf16 %v3212, %v3211
      %v3239 = vpack.c.bf16 %v3214, %v3213
      %v3240 = vpack.c.bf16 %v3216, %v3215
      %v3241 = vpack.c.bf16 %v3218, %v3217
      %v3242 = vpack.c.bf16 %v3220, %v3219
      %v3243 = vpack.c.bf16 %v3222, %v3221
      %v3244 = vpack.c.bf16 %v3224, %v3223
      %v3245 = vpack.c.bf16 %v3226, %v3225
      %v3246 = vpack.c.bf16 %v3228, %v3227
      %v3247 = vpack.c.bf16 %v3230, %v3229
      %v3248 = vpack.c.bf16 %v3232, %v3231
      %s3249 = scalar_lea.vmem %s3, 448
      %v3250 = vld [vmem:[%s3249] sm:$0xf]
      %v3251 = vld [vmem:[%s3249 + $0x4] sm:$0xf]
      %v3252 = vld [vmem:[%s3249 + $0x8] sm:$0xf]
      %v3253 = vld [vmem:[%s3249 + $0xc] sm:$0xf]
      %v3254 = vld [vmem:[%s3249 + $0x10] sm:$0xf]
      %v3255 = vld [vmem:[%s3249 + $0x14] sm:$0xf]
      %v3256 = vld [vmem:[%s3249 + $0x18] sm:$0xf]
      %v3257 = vld [vmem:[%s3249 + $0x1c] sm:$0xf]
      %v3258 = vld [vmem:[%s3249 + $0x20] sm:$0xf]
      %v3259 = vld [vmem:[%s3249 + $0x24] sm:$0xf]
      %v3260 = vld [vmem:[%s3249 + $0x28] sm:$0xf]
      %v3261 = vld [vmem:[%s3249 + $0x2c] sm:$0xf]
      %v3262 = vld [vmem:[%s3249 + $0x30] sm:$0xf]
      %v3263 = vld [vmem:[%s3249 + $0x34] sm:$0xf]
      %v3264 = vld [vmem:[%s3249 + $0x38] sm:$0xf]
      %v3265 = vld [vmem:[%s3249 + $0x3c] sm:$0xf]
      %v3282 = vunpack.c.l.b16 %v3250
      %v3283 = vunpack.c.l.b16 %v3251
      %v3284 = vunpack.c.l.b16 %v3252
      %v3285 = vunpack.c.l.b16 %v3253
      %v3286 = vunpack.c.l.b16 %v3254
      %v3287 = vunpack.c.l.b16 %v3255
      %v3288 = vunpack.c.l.b16 %v3256
      %v3289 = vunpack.c.l.b16 %v3257
      %v3290 = vunpack.c.l.b16 %v3258
      %v3291 = vunpack.c.l.b16 %v3259
      %v3292 = vunpack.c.l.b16 %v3260
      %v3293 = vunpack.c.l.b16 %v3261
      %v3294 = vunpack.c.l.b16 %v3262
      %v3295 = vunpack.c.l.b16 %v3263
      %v3296 = vunpack.c.l.b16 %v3264
      %v3297 = vunpack.c.l.b16 %v3265
      %v3298 = vpack.c.b16 %v3283, %v3282
      %v3299 = vpack.c.b16 %v3285, %v3284
      %v3300 = vpack.c.b16 %v3287, %v3286
      %v3301 = vpack.c.b16 %v3289, %v3288
      %v3302 = vpack.c.b16 %v3291, %v3290
      %v3303 = vpack.c.b16 %v3293, %v3292
      %v3304 = vpack.c.b16 %v3295, %v3294
      %v3305 = vpack.c.b16 %v3297, %v3296
      %3314 = vmatprep.subr.bf16.mxu0 0
      %3315 = vmatpush1.bf16.msra.mxu0 %v3298
      %3316 = vmatprep.subr.bf16.mxu0 0
      %3317 = vmatpush1.bf16.msra.mxu0 %v3299
      %3318 = vmatprep.subr.bf16.mxu0 0
      %3319 = vmatpush1.bf16.msra.mxu0 %v3300
      %3320 = vmatprep.subr.bf16.mxu0 0
      %3321 = vmatpush1.bf16.msra.mxu0 %v3301
      %3322 = vmatprep.subr.bf16.mxu0 0
      %3323 = vmatpush1.bf16.msra.mxu0 %v3302
      %3324 = vmatprep.subr.bf16.mxu0 0
      %3325 = vmatpush1.bf16.msra.mxu0 %v3303
      %3326 = vmatprep.subr.bf16.mxu0 0
      %3327 = vmatpush1.bf16.msra.mxu0 %v3304
      %3328 = vmatprep.subr.bf16.mxu0 0
      %3329 = vmatpush1.bf16.msra.mxu0 %v3305
      %3330 = vmatprep.subr.bf16.mxu0 0
      %3331 = vmatpush1.bf16.msra.mxu0 0
      %3332 = vmatprep.subr.bf16.mxu0 0
      %3333 = vmatpush1.bf16.msra.mxu0 0
      %3334 = vmatprep.subr.bf16.mxu0 0
      %3335 = vmatpush1.bf16.msra.mxu0 0
      %3336 = vmatprep.subr.bf16.mxu0 0
      %3337 = vmatpush1.bf16.msra.mxu0 0
      %3338 = vmatprep.subr.bf16.mxu0 0
      %3339 = vmatpush1.bf16.msra.mxu0 0
      %3340 = vmatprep.subr.bf16.mxu0 0
      %3341 = vmatpush1.bf16.msra.mxu0 0
      %3342 = vmatprep.subr.bf16.mxu0 0
      %3343 = vmatpush1.bf16.msra.mxu0 0
      %3344 = vmatprep.subr.bf16.mxu0 0
      %3345 = vmatpush1.bf16.msra.mxu0 0
      %3346 = vmatprep.mubr.bf16.mxu0 0
      %3347 = vmatmul.mubr.bf16.gmra.mrb[0].mxu0 %v3233
      %v3348 = vpop.f32.mrb[0].mxu0
      %v3349 = vadd.f32 0.0, %v3348
      %v3350 = vpop.f32.mrb[0].mxu0
      %v3351 = vpop.f32.mrb[0].mxu0
      %v3352 = vadd.f32 0.0, %v3351
      %v3353 = vpop.f32.mrb[0].mxu0
      %3354 = vmatprep.mubr.bf16.mxu0 0
      %3355 = vmatmul.mubr.bf16.gmra.mrb[0].mxu0 %v3234
      %v3356 = vpop.f32.mrb[0].mxu0
      %v3357 = vadd.f32 0.0, %v3356
      %v3358 = vpop.f32.mrb[0].mxu0
      %v3359 = vpop.f32.mrb[0].mxu0
      %v3360 = vadd.f32 0.0, %v3359
      %v3361 = vpop.f32.mrb[0].mxu0
      %3362 = vmatprep.mubr.bf16.mxu0 0
      %3363 = vmatmul.mubr.bf16.gmra.mrb[0].mxu0 %v3235
      %v3364 = vpop.f32.mrb[0].mxu0
      %v3365 = vadd.f32 0.0, %v3364
      %v3366 = vpop.f32.mrb[0].mxu0
      %v3367 = vpop.f32.mrb[0].mxu0
      %v3368 = vadd.f32 0.0, %v3367
      %v3369 = vpop.f32.mrb[0].mxu0
      %3370 = vmatprep.mubr.bf16.mxu0 0
      %3371 = vmatmul.mubr.bf16.gmra.mrb[0].mxu0 %v3236
      %v3372 = vpop.f32.mrb[0].mxu0
      %v3373 = vadd.f32 0.0, %v3372
      %v3374 = vpop.f32.mrb[0].mxu0
      %v3375 = vpop.f32.mrb[0].mxu0
      %v3376 = vadd.f32 0.0, %v3375
      %v3377 = vpop.f32.mrb[0].mxu0
      %3378 = vmatprep.mubr.bf16.mxu0 0
      %3379 = vmatmul.mubr.bf16.gmra.mrb[0].mxu0 %v3237
      %v3380 = vpop.f32.mrb[0].mxu0
      %v3381 = vadd.f32 0.0, %v3380
      %v3382 = vpop.f32.mrb[0].mxu0
      %v3383 = vpop.f32.mrb[0].mxu0
      %v3384 = vadd.f32 0.0, %v3383
      %v3385 = vpop.f32.mrb[0].mxu0
      %3386 = vmatprep.mubr.bf16.mxu0 0
      %3387 = vmatmul.mubr.bf16.gmra.mrb[0].mxu0 %v3238
      %v3388 = vpop.f32.mrb[0].mxu0
      %v3389 = vadd.f32 0.0, %v3388
      %v3390 = vpop.f32.mrb[0].mxu0
      %v3391 = vpop.f32.mrb[0].mxu0
      %v3392 = vadd.f32 0.0, %v3391
      %v3393 = vpop.f32.mrb[0].mxu0
      %3394 = vmatprep.mubr.bf16.mxu0 0
      %3395 = vmatmul.mubr.bf16.gmra.mrb[0].mxu0 %v3239
      %v3396 = vpop.f32.mrb[0].mxu0
      %v3397 = vadd.f32 0.0, %v3396
      %v3398 = vpop.f32.mrb[0].mxu0
      %v3399 = vpop.f32.mrb[0].mxu0
      %v3400 = vadd.f32 0.0, %v3399
      %v3401 = vpop.f32.mrb[0].mxu0
      %3402 = vmatprep.mubr.bf16.mxu0 0
      %3403 = vmatmul.mubr.bf16.gmra.mrb[0].mxu0 %v3240
      %v3404 = vpop.f32.mrb[0].mxu0
      %v3405 = vadd.f32 0.0, %v3404
      %v3406 = vpop.f32.mrb[0].mxu0
      %v3407 = vpop.f32.mrb[0].mxu0
      %v3408 = vadd.f32 0.0, %v3407
      %v3409 = vpop.f32.mrb[0].mxu0
      %3410 = vmatprep.mubr.bf16.mxu0 0
      %3411 = vmatmul.mubr.bf16.gmra.mrb[0].mxu0 %v3241
      %v3412 = vpop.f32.mrb[0].mxu0
      %v3413 = vadd.f32 0.0, %v3412
      %v3414 = vpop.f32.mrb[0].mxu0
      %v3415 = vpop.f32.mrb[0].mxu0
      %v3416 = vadd.f32 0.0, %v3415
      %v3417 = vpop.f32.mrb[0].mxu0
      %3418 = vmatprep.mubr.bf16.mxu0 0
      %3419 = vmatmul.mubr.bf16.gmra.mrb[0].mxu0 %v3242
      %v3420 = vpop.f32.mrb[0].mxu0
      %v3421 = vadd.f32 0.0, %v3420
      %v3422 = vpop.f32.mrb[0].mxu0
      %v3423 = vpop.f32.mrb[0].mxu0
      %v3424 = vadd.f32 0.0, %v3423
      %v3425 = vpop.f32.mrb[0].mxu0
      %3426 = vmatprep.mubr.bf16.mxu0 0
      %3427 = vmatmul.mubr.bf16.gmra.mrb[0].mxu0 %v3243
      %v3428 = vpop.f32.mrb[0].mxu0
      %v3429 = vadd.f32 0.0, %v3428
      %v3430 = vpop.f32.mrb[0].mxu0
      %v3431 = vpop.f32.mrb[0].mxu0
      %v3432 = vadd.f32 0.0, %v3431
      %v3433 = vpop.f32.mrb[0].mxu0
      %3434 = vmatprep.mubr.bf16.mxu0 0
      %3435 = vmatmul.mubr.bf16.gmra.mrb[0].mxu0 %v3244
      %v3436 = vpop.f32.mrb[0].mxu0
      %v3437 = vadd.f32 0.0, %v3436
      %v3438 = vpop.f32.mrb[0].mxu0
      %v3439 = vpop.f32.mrb[0].mxu0
      %v3440 = vadd.f32 0.0, %v3439
      %v3441 = vpop.f32.mrb[0].mxu0
      %3442 = vmatprep.mubr.bf16.mxu0 0
      %3443 = vmatmul.mubr.bf16.gmra.mrb[0].mxu0 %v3245
      %v3444 = vpop.f32.mrb[0].mxu0
      %v3445 = vadd.f32 0.0, %v3444
      %v3446 = vpop.f32.mrb[0].mxu0
      %v3447 = vpop.f32.mrb[0].mxu0
      %v3448 = vadd.f32 0.0, %v3447
      %v3449 = vpop.f32.mrb[0].mxu0
      %3450 = vmatprep.mubr.bf16.mxu0 0
      %3451 = vmatmul.mubr.bf16.gmra.mrb[0].mxu0 %v3246
      %v3452 = vpop.f32.mrb[0].mxu0
      %v3453 = vadd.f32 0.0, %v3452
      %v3454 = vpop.f32.mrb[0].mxu0
      %v3455 = vpop.f32.mrb[0].mxu0
      %v3456 = vadd.f32 0.0, %v3455
      %v3457 = vpop.f32.mrb[0].mxu0
      %3458 = vmatprep.mubr.bf16.mxu0 0
      %3459 = vmatmul.mubr.bf16.gmra.mrb[0].mxu0 %v3247
      %v3460 = vpop.f32.mrb[0].mxu0
      %v3461 = vadd.f32 0.0, %v3460
      %v3462 = vpop.f32.mrb[0].mxu0
      %v3463 = vpop.f32.mrb[0].mxu0
      %v3464 = vadd.f32 0.0, %v3463
      %v3465 = vpop.f32.mrb[0].mxu0
      %3466 = vmatprep.mubr.bf16.mxu0 0
      %3467 = vmatmul.mubr.bf16.gmra.mrb[0].mxu0 %v3248
      %v3468 = vpop.f32.mrb[0].mxu0
      %v3469 = vadd.f32 0.0, %v3468
      %v3470 = vpop.f32.mrb[0].mxu0
      %v3471 = vpop.f32.mrb[0].mxu0
      %v3472 = vadd.f32 0.0, %v3471
      %v3473 = vpop.f32.mrb[0].mxu0
      %3474 = vdwg.mxu0
      %v3475 = vld [vmem:[%s226] sm:$0xff]
      %v3476 = vld [vmem:[%s226 + $0x8] sm:$0xff]
      %v3477 = vld [vmem:[%s226 + $0x10] sm:$0xff]
      %v3478 = vld [vmem:[%s226 + $0x18] sm:$0xff]
      %v3479 = vld [vmem:[%s226 + $0x20] sm:$0xff]
      %v3480 = vld [vmem:[%s226 + $0x28] sm:$0xff]
      %v3481 = vld [vmem:[%s226 + $0x30] sm:$0xff]
      %v3482 = vld [vmem:[%s226 + $0x38] sm:$0xff]
      %v3483 = vld [vmem:[%s226 + $0x40] sm:$0xff]
      %v3484 = vld [vmem:[%s226 + $0x48] sm:$0xff]
      %v3485 = vld [vmem:[%s226 + $0x50] sm:$0xff]
      %v3486 = vld [vmem:[%s226 + $0x58] sm:$0xff]
      %v3487 = vld [vmem:[%s226 + $0x60] sm:$0xff]
      %v3488 = vld [vmem:[%s226 + $0x68] sm:$0xff]
      %v3489 = vld [vmem:[%s226 + $0x70] sm:$0xff]
      %v3490 = vld [vmem:[%s226 + $0x78] sm:$0xff]
      %v3491 = vld [vmem:[%s226 + $0x80] sm:$0xff]
      %v3492 = vld [vmem:[%s226 + $0x88] sm:$0xff]
      %v3493 = vld [vmem:[%s226 + $0x90] sm:$0xff]
      %v3494 = vld [vmem:[%s226 + $0x98] sm:$0xff]
      %v3495 = vld [vmem:[%s226 + $0xa0] sm:$0xff]
      %v3496 = vld [vmem:[%s226 + $0xa8] sm:$0xff]
      %v3497 = vld [vmem:[%s226 + $0xb0] sm:$0xff]
      %v3498 = vld [vmem:[%s226 + $0xb8] sm:$0xff]
      %v3499 = vld [vmem:[%s226 + $0xc0] sm:$0xff]
      %v3500 = vld [vmem:[%s226 + $0xc8] sm:$0xff]
      %v3501 = vld [vmem:[%s226 + $0xd0] sm:$0xff]
      %v3502 = vld [vmem:[%s226 + $0xd8] sm:$0xff]
      %v3503 = vld [vmem:[%s226 + $0xe0] sm:$0xff]
      %v3504 = vld [vmem:[%s226 + $0xe8] sm:$0xff]
      %v3505 = vld [vmem:[%s226 + $0xf0] sm:$0xff]
      %v3506 = vld [vmem:[%s226 + $0xf8] sm:$0xff]
      %v3507 = vadd.f32 %v3475, %v3349
      %v3508 = vadd.f32 %v3476, %v3352
      %v3509 = vadd.f32 %v3477, %v3357
      %v3510 = vadd.f32 %v3478, %v3360
      %v3511 = vadd.f32 %v3479, %v3365
      %v3512 = vadd.f32 %v3480, %v3368
      %v3513 = vadd.f32 %v3481, %v3373
      %v3514 = vadd.f32 %v3482, %v3376
      %v3515 = vadd.f32 %v3483, %v3381
      %v3516 = vadd.f32 %v3484, %v3384
      %v3517 = vadd.f32 %v3485, %v3389
      %v3518 = vadd.f32 %v3486, %v3392
      %v3519 = vadd.f32 %v3487, %v3397
      %v3520 = vadd.f32 %v3488, %v3400
      %v3521 = vadd.f32 %v3489, %v3405
      %v3522 = vadd.f32 %v3490, %v3408
      %v3523 = vadd.f32 %v3491, %v3413
      %v3524 = vadd.f32 %v3492, %v3416
      %v3525 = vadd.f32 %v3493, %v3421
      %v3526 = vadd.f32 %v3494, %v3424
      %v3527 = vadd.f32 %v3495, %v3429
      %v3528 = vadd.f32 %v3496, %v3432
      %v3529 = vadd.f32 %v3497, %v3437
      %v3530 = vadd.f32 %v3498, %v3440
      %v3531 = vadd.f32 %v3499, %v3445
      %v3532 = vadd.f32 %v3500, %v3448
      %v3533 = vadd.f32 %v3501, %v3453
      %v3534 = vadd.f32 %v3502, %v3456
      %v3535 = vadd.f32 %v3503, %v3461
      %v3536 = vadd.f32 %v3504, %v3464
      %v3537 = vadd.f32 %v3505, %v3469
      %v3538 = vadd.f32 %v3506, %v3472
      %3539 = vst [vmem:[%s226] sm:$0xff] %v3507
      %3540 = vst [vmem:[%s226 + $0x8] sm:$0xff] %v3508
      %3541 = vst [vmem:[%s226 + $0x10] sm:$0xff] %v3509
      %3542 = vst [vmem:[%s226 + $0x18] sm:$0xff] %v3510
      %3543 = vst [vmem:[%s226 + $0x20] sm:$0xff] %v3511
      %3544 = vst [vmem:[%s226 + $0x28] sm:$0xff] %v3512
      %3545 = vst [vmem:[%s226 + $0x30] sm:$0xff] %v3513
      %3546 = vst [vmem:[%s226 + $0x38] sm:$0xff] %v3514
      %3547 = vst [vmem:[%s226 + $0x40] sm:$0xff] %v3515
      %3548 = vst [vmem:[%s226 + $0x48] sm:$0xff] %v3516
      %3549 = vst [vmem:[%s226 + $0x50] sm:$0xff] %v3517
      %3550 = vst [vmem:[%s226 + $0x58] sm:$0xff] %v3518
      %3551 = vst [vmem:[%s226 + $0x60] sm:$0xff] %v3519
      %3552 = vst [vmem:[%s226 + $0x68] sm:$0xff] %v3520
      %3553 = vst [vmem:[%s226 + $0x70] sm:$0xff] %v3521
      %3554 = vst [vmem:[%s226 + $0x78] sm:$0xff] %v3522
      %3555 = vst [vmem:[%s226 + $0x80] sm:$0xff] %v3523
      %3556 = vst [vmem:[%s226 + $0x88] sm:$0xff] %v3524
      %3557 = vst [vmem:[%s226 + $0x90] sm:$0xff] %v3525
      %3558 = vst [vmem:[%s226 + $0x98] sm:$0xff] %v3526
      %3559 = vst [vmem:[%s226 + $0xa0] sm:$0xff] %v3527
      %3560 = vst [vmem:[%s226 + $0xa8] sm:$0xff] %v3528
      %3561 = vst [vmem:[%s226 + $0xb0] sm:$0xff] %v3529
      %3562 = vst [vmem:[%s226 + $0xb8] sm:$0xff] %v3530
      %3563 = vst [vmem:[%s226 + $0xc0] sm:$0xff] %v3531
      %3564 = vst [vmem:[%s226 + $0xc8] sm:$0xff] %v3532
      %3565 = vst [vmem:[%s226 + $0xd0] sm:$0xff] %v3533
      %3566 = vst [vmem:[%s226 + $0xd8] sm:$0xff] %v3534
      %3567 = vst [vmem:[%s226 + $0xe0] sm:$0xff] %v3535
      %3568 = vst [vmem:[%s226 + $0xe8] sm:$0xff] %v3536
      %3569 = vst [vmem:[%s226 + $0xf0] sm:$0xff] %v3537
      %3570 = vst [vmem:[%s226 + $0xf8] sm:$0xff] %v3538
      %v3571 = vld [vmem:[%s2830 + $0x9] sm:$0xff]
      %v3572 = vld [vmem:[%s2830 + $0x11] sm:$0xff]
      %v3573 = vld [vmem:[%s2830 + $0x29] sm:$0xff]
      %v3574 = vld [vmem:[%s2830 + $0x31] sm:$0xff]
      %v3575 = vld [vmem:[%s2830 + $0x49] sm:$0xff]
      %v3576 = vld [vmem:[%s2830 + $0x51] sm:$0xff]
      %v3577 = vld [vmem:[%s2830 + $0x69] sm:$0xff]
      %v3578 = vld [vmem:[%s2830 + $0x71] sm:$0xff]
      %v3579 = vld [vmem:[%s2830 + $0x89] sm:$0xff]
      %v3580 = vld [vmem:[%s2830 + $0x91] sm:$0xff]
      %v3581 = vld [vmem:[%s2830 + $0xa9] sm:$0xff]
      %v3582 = vld [vmem:[%s2830 + $0xb1] sm:$0xff]
      %v3583 = vld [vmem:[%s2830 + $0xc9] sm:$0xff]
      %v3584 = vld [vmem:[%s2830 + $0xd1] sm:$0xff]
      %v3585 = vld [vmem:[%s2830 + $0xe9] sm:$0xff]
      %v3586 = vld [vmem:[%s2830 + $0xf1] sm:$0xff]
      %v3587 = vld [vmem:[%s2830 + $0x109] sm:$0xff]
      %v3588 = vld [vmem:[%s2830 + $0x111] sm:$0xff]
      %v3589 = vld [vmem:[%s2830 + $0x129] sm:$0xff]
      %v3590 = vld [vmem:[%s2830 + $0x131] sm:$0xff]
      %v3591 = vld [vmem:[%s2830 + $0x149] sm:$0xff]
      %v3592 = vld [vmem:[%s2830 + $0x151] sm:$0xff]
      %v3593 = vld [vmem:[%s2830 + $0x169] sm:$0xff]
      %v3594 = vld [vmem:[%s2830 + $0x171] sm:$0xff]
      %v3595 = vld [vmem:[%s2830 + $0x189] sm:$0xff]
      %v3596 = vld [vmem:[%s2830 + $0x191] sm:$0xff]
      %v3597 = vld [vmem:[%s2830 + $0x1a9] sm:$0xff]
      %v3598 = vld [vmem:[%s2830 + $0x1b1] sm:$0xff]
      %v3599 = vld [vmem:[%s2830 + $0x1c9] sm:$0xff]
      %v3600 = vld [vmem:[%s2830 + $0x1d1] sm:$0xff]
      %v3601 = vld [vmem:[%s2830 + $0x1e9] sm:$0xff]
      %v3602 = vld [vmem:[%s2830 + $0x1f1] sm:$0xff]
      %v3603 = vpack.c.bf16 %v3572, %v3571
      %v3604 = vpack.c.bf16 %v3574, %v3573
      %v3605 = vpack.c.bf16 %v3576, %v3575
      %v3606 = vpack.c.bf16 %v3578, %v3577
      %v3607 = vpack.c.bf16 %v3580, %v3579
      %v3608 = vpack.c.bf16 %v3582, %v3581
      %v3609 = vpack.c.bf16 %v3584, %v3583
      %v3610 = vpack.c.bf16 %v3586, %v3585
      %v3611 = vpack.c.bf16 %v3588, %v3587
      %v3612 = vpack.c.bf16 %v3590, %v3589
      %v3613 = vpack.c.bf16 %v3592, %v3591
      %v3614 = vpack.c.bf16 %v3594, %v3593
      %v3615 = vpack.c.bf16 %v3596, %v3595
      %v3616 = vpack.c.bf16 %v3598, %v3597
      %v3617 = vpack.c.bf16 %v3600, %v3599
      %v3618 = vpack.c.bf16 %v3602, %v3601
      %s3619 = scalar_lea.vmem %s3, 512
      %v3620 = vld [vmem:[%s3619] sm:$0xf]
      %v3621 = vld [vmem:[%s3619 + $0x4] sm:$0xf]
      %v3622 = vld [vmem:[%s3619 + $0x8] sm:$0xf]
      %v3623 = vld [vmem:[%s3619 + $0xc] sm:$0xf]
      %v3624 = vld [vmem:[%s3619 + $0x10] sm:$0xf]
      %v3625 = vld [vmem:[%s3619 + $0x14] sm:$0xf]
      %v3626 = vld [vmem:[%s3619 + $0x18] sm:$0xf]
      %v3627 = vld [vmem:[%s3619 + $0x1c] sm:$0xf]
      %v3628 = vld [vmem:[%s3619 + $0x20] sm:$0xf]
      %v3629 = vld [vmem:[%s3619 + $0x24] sm:$0xf]
      %v3630 = vld [vmem:[%s3619 + $0x28] sm:$0xf]
      %v3631 = vld [vmem:[%s3619 + $0x2c] sm:$0xf]
      %v3632 = vld [vmem:[%s3619 + $0x30] sm:$0xf]
      %v3633 = vld [vmem:[%s3619 + $0x34] sm:$0xf]
      %v3634 = vld [vmem:[%s3619 + $0x38] sm:$0xf]
      %v3635 = vld [vmem:[%s3619 + $0x3c] sm:$0xf]
      %v3652 = vunpack.c.l.b16 %v3620
      %v3653 = vunpack.c.l.b16 %v3621
      %v3654 = vunpack.c.l.b16 %v3622
      %v3655 = vunpack.c.l.b16 %v3623
      %v3656 = vunpack.c.l.b16 %v3624
      %v3657 = vunpack.c.l.b16 %v3625
      %v3658 = vunpack.c.l.b16 %v3626
      %v3659 = vunpack.c.l.b16 %v3627
      %v3660 = vunpack.c.l.b16 %v3628
      %v3661 = vunpack.c.l.b16 %v3629
      %v3662 = vunpack.c.l.b16 %v3630
      %v3663 = vunpack.c.l.b16 %v3631
      %v3664 = vunpack.c.l.b16 %v3632
      %v3665 = vunpack.c.l.b16 %v3633
      %v3666 = vunpack.c.l.b16 %v3634
      %v3667 = vunpack.c.l.b16 %v3635
      %v3668 = vpack.c.b16 %v3653, %v3652
      %v3669 = vpack.c.b16 %v3655, %v3654
      %v3670 = vpack.c.b16 %v3657, %v3656
      %v3671 = vpack.c.b16 %v3659, %v3658
      %v3672 = vpack.c.b16 %v3661, %v3660
      %v3673 = vpack.c.b16 %v3663, %v3662
      %v3674 = vpack.c.b16 %v3665, %v3664
      %v3675 = vpack.c.b16 %v3667, %v3666
      %3684 = vmatprep.subr.bf16.mxu0 0
      %3685 = vmatpush1.bf16.msra.mxu0 %v3668
      %3686 = vmatprep.subr.bf16.mxu0 0
      %3687 = vmatpush1.bf16.msra.mxu0 %v3669
      %3688 = vmatprep.subr.bf16.mxu0 0
      %3689 = vmatpush1.bf16.msra.mxu0 %v3670
      %3690 = vmatprep.subr.bf16.mxu0 0
      %3691 = vmatpush1.bf16.msra.mxu0 %v3671
      %3692 = vmatprep.subr.bf16.mxu0 0
      %3693 = vmatpush1.bf16.msra.mxu0 %v3672
      %3694 = vmatprep.subr.bf16.mxu0 0
      %3695 = vmatpush1.bf16.msra.mxu0 %v3673
      %3696 = vmatprep.subr.bf16.mxu0 0
      %3697 = vmatpush1.bf16.msra.mxu0 %v3674
      %3698 = vmatprep.subr.bf16.mxu0 0
      %3699 = vmatpush1.bf16.msra.mxu0 %v3675
      %3700 = vmatprep.subr.bf16.mxu0 0
      %3701 = vmatpush1.bf16.msra.mxu0 0
      %3702 = vmatprep.subr.bf16.mxu0 0
      %3703 = vmatpush1.bf16.msra.mxu0 0
      %3704 = vmatprep.subr.bf16.mxu0 0
      %3705 = vmatpush1.bf16.msra.mxu0 0
      %3706 = vmatprep.subr.bf16.mxu0 0
      %3707 = vmatpush1.bf16.msra.mxu0 0
      %3708 = vmatprep.subr.bf16.mxu0 0
      %3709 = vmatpush1.bf16.msra.mxu0 0
      %3710 = vmatprep.subr.bf16.mxu0 0
      %3711 = vmatpush1.bf16.msra.mxu0 0
      %3712 = vmatprep.subr.bf16.mxu0 0
      %3713 = vmatpush1.bf16.msra.mxu0 0
      %3714 = vmatprep.subr.bf16.mxu0 0
      %3715 = vmatpush1.bf16.msra.mxu0 0
      %3716 = vmatprep.mubr.bf16.mxu0 0
      %3717 = vmatmul.mubr.bf16.gmra.mrb[0].mxu0 %v3603
      %v3718 = vpop.f32.mrb[0].mxu0
      %v3719 = vadd.f32 0.0, %v3718
      %v3720 = vpop.f32.mrb[0].mxu0
      %v3721 = vpop.f32.mrb[0].mxu0
      %v3722 = vadd.f32 0.0, %v3721
      %v3723 = vpop.f32.mrb[0].mxu0
      %3724 = vmatprep.mubr.bf16.mxu0 0
      %3725 = vmatmul.mubr.bf16.gmra.mrb[0].mxu0 %v3604
      %v3726 = vpop.f32.mrb[0].mxu0
      %v3727 = vadd.f32 0.0, %v3726
      %v3728 = vpop.f32.mrb[0].mxu0
      %v3729 = vpop.f32.mrb[0].mxu0
      %v3730 = vadd.f32 0.0, %v3729
      %v3731 = vpop.f32.mrb[0].mxu0
      %3732 = vmatprep.mubr.bf16.mxu0 0
      %3733 = vmatmul.mubr.bf16.gmra.mrb[0].mxu0 %v3605
      %v3734 = vpop.f32.mrb[0].mxu0
      %v3735 = vadd.f32 0.0, %v3734
      %v3736 = vpop.f32.mrb[0].mxu0
      %v3737 = vpop.f32.mrb[0].mxu0
      %v3738 = vadd.f32 0.0, %v3737
      %v3739 = vpop.f32.mrb[0].mxu0
      %3740 = vmatprep.mubr.bf16.mxu0 0
      %3741 = vmatmul.mubr.bf16.gmra.mrb[0].mxu0 %v3606
      %v3742 = vpop.f32.mrb[0].mxu0
      %v3743 = vadd.f32 0.0, %v3742
      %v3744 = vpop.f32.mrb[0].mxu0
      %v3745 = vpop.f32.mrb[0].mxu0
      %v3746 = vadd.f32 0.0, %v3745
      %v3747 = vpop.f32.mrb[0].mxu0
      %3748 = vmatprep.mubr.bf16.mxu0 0
      %3749 = vmatmul.mubr.bf16.gmra.mrb[0].mxu0 %v3607
      %v3750 = vpop.f32.mrb[0].mxu0
      %v3751 = vadd.f32 0.0, %v3750
      %v3752 = vpop.f32.mrb[0].mxu0
      %v3753 = vpop.f32.mrb[0].mxu0
      %v3754 = vadd.f32 0.0, %v3753
      %v3755 = vpop.f32.mrb[0].mxu0
      %3756 = vmatprep.mubr.bf16.mxu0 0
      %3757 = vmatmul.mubr.bf16.gmra.mrb[0].mxu0 %v3608
      %v3758 = vpop.f32.mrb[0].mxu0
      %v3759 = vadd.f32 0.0, %v3758
      %v3760 = vpop.f32.mrb[0].mxu0
      %v3761 = vpop.f32.mrb[0].mxu0
      %v3762 = vadd.f32 0.0, %v3761
      %v3763 = vpop.f32.mrb[0].mxu0
      %3764 = vmatprep.mubr.bf16.mxu0 0
      %3765 = vmatmul.mubr.bf16.gmra.mrb[0].mxu0 %v3609
      %v3766 = vpop.f32.mrb[0].mxu0
      %v3767 = vadd.f32 0.0, %v3766
      %v3768 = vpop.f32.mrb[0].mxu0
      %v3769 = vpop.f32.mrb[0].mxu0
      %v3770 = vadd.f32 0.0, %v3769
      %v3771 = vpop.f32.mrb[0].mxu0
      %3772 = vmatprep.mubr.bf16.mxu0 0
      %3773 = vmatmul.mubr.bf16.gmra.mrb[0].mxu0 %v3610
      %v3774 = vpop.f32.mrb[0].mxu0
      %v3775 = vadd.f32 0.0, %v3774
      %v3776 = vpop.f32.mrb[0].mxu0
      %v3777 = vpop.f32.mrb[0].mxu0
      %v3778 = vadd.f32 0.0, %v3777
      %v3779 = vpop.f32.mrb[0].mxu0
      %3780 = vmatprep.mubr.bf16.mxu0 0
      %3781 = vmatmul.mubr.bf16.gmra.mrb[0].mxu0 %v3611
      %v3782 = vpop.f32.mrb[0].mxu0
      %v3783 = vadd.f32 0.0, %v3782
      %v3784 = vpop.f32.mrb[0].mxu0
      %v3785 = vpop.f32.mrb[0].mxu0
      %v3786 = vadd.f32 0.0, %v3785
      %v3787 = vpop.f32.mrb[0].mxu0
      %3788 = vmatprep.mubr.bf16.mxu0 0
      %3789 = vmatmul.mubr.bf16.gmra.mrb[0].mxu0 %v3612
      %v3790 = vpop.f32.mrb[0].mxu0
      %v3791 = vadd.f32 0.0, %v3790
      %v3792 = vpop.f32.mrb[0].mxu0
      %v3793 = vpop.f32.mrb[0].mxu0
      %v3794 = vadd.f32 0.0, %v3793
      %v3795 = vpop.f32.mrb[0].mxu0
      %3796 = vmatprep.mubr.bf16.mxu0 0
      %3797 = vmatmul.mubr.bf16.gmra.mrb[0].mxu0 %v3613
      %v3798 = vpop.f32.mrb[0].mxu0
      %v3799 = vadd.f32 0.0, %v3798
      %v3800 = vpop.f32.mrb[0].mxu0
      %v3801 = vpop.f32.mrb[0].mxu0
      %v3802 = vadd.f32 0.0, %v3801
      %v3803 = vpop.f32.mrb[0].mxu0
      %3804 = vmatprep.mubr.bf16.mxu0 0
      %3805 = vmatmul.mubr.bf16.gmra.mrb[0].mxu0 %v3614
      %v3806 = vpop.f32.mrb[0].mxu0
      %v3807 = vadd.f32 0.0, %v3806
      %v3808 = vpop.f32.mrb[0].mxu0
      %v3809 = vpop.f32.mrb[0].mxu0
      %v3810 = vadd.f32 0.0, %v3809
      %v3811 = vpop.f32.mrb[0].mxu0
      %3812 = vmatprep.mubr.bf16.mxu0 0
      %3813 = vmatmul.mubr.bf16.gmra.mrb[0].mxu0 %v3615
      %v3814 = vpop.f32.mrb[0].mxu0
      %v3815 = vadd.f32 0.0, %v3814
      %v3816 = vpop.f32.mrb[0].mxu0
      %v3817 = vpop.f32.mrb[0].mxu0
      %v3818 = vadd.f32 0.0, %v3817
      %v3819 = vpop.f32.mrb[0].mxu0
      %3820 = vmatprep.mubr.bf16.mxu0 0
      %3821 = vmatmul.mubr.bf16.gmra.mrb[0].mxu0 %v3616
      %v3822 = vpop.f32.mrb[0].mxu0
      %v3823 = vadd.f32 0.0, %v3822
      %v3824 = vpop.f32.mrb[0].mxu0
      %v3825 = vpop.f32.mrb[0].mxu0
      %v3826 = vadd.f32 0.0, %v3825
      %v3827 = vpop.f32.mrb[0].mxu0
      %3828 = vmatprep.mubr.bf16.mxu0 0
      %3829 = vmatmul.mubr.bf16.gmra.mrb[0].mxu0 %v3617
      %v3830 = vpop.f32.mrb[0].mxu0
      %v3831 = vadd.f32 0.0, %v3830
      %v3832 = vpop.f32.mrb[0].mxu0
      %v3833 = vpop.f32.mrb[0].mxu0
      %v3834 = vadd.f32 0.0, %v3833
      %v3835 = vpop.f32.mrb[0].mxu0
      %3836 = vmatprep.mubr.bf16.mxu0 0
      %3837 = vmatmul.mubr.bf16.gmra.mrb[0].mxu0 %v3618
      %v3838 = vpop.f32.mrb[0].mxu0
      %v3839 = vadd.f32 0.0, %v3838
      %v3840 = vpop.f32.mrb[0].mxu0
      %v3841 = vpop.f32.mrb[0].mxu0
      %v3842 = vadd.f32 0.0, %v3841
      %v3843 = vpop.f32.mrb[0].mxu0
      %3844 = vdwg.mxu0
      %v3845 = vld [vmem:[%s226] sm:$0xff]
      %v3846 = vld [vmem:[%s226 + $0x8] sm:$0xff]
      %v3847 = vld [vmem:[%s226 + $0x10] sm:$0xff]
      %v3848 = vld [vmem:[%s226 + $0x18] sm:$0xff]
      %v3849 = vld [vmem:[%s226 + $0x20] sm:$0xff]
      %v3850 = vld [vmem:[%s226 + $0x28] sm:$0xff]
      %v3851 = vld [vmem:[%s226 + $0x30] sm:$0xff]
      %v3852 = vld [vmem:[%s226 + $0x38] sm:$0xff]
      %v3853 = vld [vmem:[%s226 + $0x40] sm:$0xff]
      %v3854 = vld [vmem:[%s226 + $0x48] sm:$0xff]
      %v3855 = vld [vmem:[%s226 + $0x50] sm:$0xff]
      %v3856 = vld [vmem:[%s226 + $0x58] sm:$0xff]
      %v3857 = vld [vmem:[%s226 + $0x60] sm:$0xff]
      %v3858 = vld [vmem:[%s226 + $0x68] sm:$0xff]
      %v3859 = vld [vmem:[%s226 + $0x70] sm:$0xff]
      %v3860 = vld [vmem:[%s226 + $0x78] sm:$0xff]
      %v3861 = vld [vmem:[%s226 + $0x80] sm:$0xff]
      %v3862 = vld [vmem:[%s226 + $0x88] sm:$0xff]
      %v3863 = vld [vmem:[%s226 + $0x90] sm:$0xff]
      %v3864 = vld [vmem:[%s226 + $0x98] sm:$0xff]
      %v3865 = vld [vmem:[%s226 + $0xa0] sm:$0xff]
      %v3866 = vld [vmem:[%s226 + $0xa8] sm:$0xff]
      %v3867 = vld [vmem:[%s226 + $0xb0] sm:$0xff]
      %v3868 = vld [vmem:[%s226 + $0xb8] sm:$0xff]
      %v3869 = vld [vmem:[%s226 + $0xc0] sm:$0xff]
      %v3870 = vld [vmem:[%s226 + $0xc8] sm:$0xff]
      %v3871 = vld [vmem:[%s226 + $0xd0] sm:$0xff]
      %v3872 = vld [vmem:[%s226 + $0xd8] sm:$0xff]
      %v3873 = vld [vmem:[%s226 + $0xe0] sm:$0xff]
      %v3874 = vld [vmem:[%s226 + $0xe8] sm:$0xff]
      %v3875 = vld [vmem:[%s226 + $0xf0] sm:$0xff]
      %v3876 = vld [vmem:[%s226 + $0xf8] sm:$0xff]
      %v3877 = vadd.f32 %v3845, %v3719
      %v3878 = vadd.f32 %v3846, %v3722
      %v3879 = vadd.f32 %v3847, %v3727
      %v3880 = vadd.f32 %v3848, %v3730
      %v3881 = vadd.f32 %v3849, %v3735
      %v3882 = vadd.f32 %v3850, %v3738
      %v3883 = vadd.f32 %v3851, %v3743
      %v3884 = vadd.f32 %v3852, %v3746
      %v3885 = vadd.f32 %v3853, %v3751
      %v3886 = vadd.f32 %v3854, %v3754
      %v3887 = vadd.f32 %v3855, %v3759
      %v3888 = vadd.f32 %v3856, %v3762
      %v3889 = vadd.f32 %v3857, %v3767
      %v3890 = vadd.f32 %v3858, %v3770
      %v3891 = vadd.f32 %v3859, %v3775
      %v3892 = vadd.f32 %v3860, %v3778
      %v3893 = vadd.f32 %v3861, %v3783
      %v3894 = vadd.f32 %v3862, %v3786
      %v3895 = vadd.f32 %v3863, %v3791
      %v3896 = vadd.f32 %v3864, %v3794
      %v3897 = vadd.f32 %v3865, %v3799
      %v3898 = vadd.f32 %v3866, %v3802
      %v3899 = vadd.f32 %v3867, %v3807
      %v3900 = vadd.f32 %v3868, %v3810
      %v3901 = vadd.f32 %v3869, %v3815
      %v3902 = vadd.f32 %v3870, %v3818
      %v3903 = vadd.f32 %v3871, %v3823
      %v3904 = vadd.f32 %v3872, %v3826
      %v3905 = vadd.f32 %v3873, %v3831
      %v3906 = vadd.f32 %v3874, %v3834
      %v3907 = vadd.f32 %v3875, %v3839
      %v3908 = vadd.f32 %v3876, %v3842
      %3909 = vst [vmem:[%s226] sm:$0xff] %v3877
      %3910 = vst [vmem:[%s226 + $0x8] sm:$0xff] %v3878
      %3911 = vst [vmem:[%s226 + $0x10] sm:$0xff] %v3879
      %3912 = vst [vmem:[%s226 + $0x18] sm:$0xff] %v3880
      %3913 = vst [vmem:[%s226 + $0x20] sm:$0xff] %v3881
      %3914 = vst [vmem:[%s226 + $0x28] sm:$0xff] %v3882
      %3915 = vst [vmem:[%s226 + $0x30] sm:$0xff] %v3883
      %3916 = vst [vmem:[%s226 + $0x38] sm:$0xff] %v3884
      %3917 = vst [vmem:[%s226 + $0x40] sm:$0xff] %v3885
      %3918 = vst [vmem:[%s226 + $0x48] sm:$0xff] %v3886
      %3919 = vst [vmem:[%s226 + $0x50] sm:$0xff] %v3887
      %3920 = vst [vmem:[%s226 + $0x58] sm:$0xff] %v3888
      %3921 = vst [vmem:[%s226 + $0x60] sm:$0xff] %v3889
      %3922 = vst [vmem:[%s226 + $0x68] sm:$0xff] %v3890
      %3923 = vst [vmem:[%s226 + $0x70] sm:$0xff] %v3891
      %3924 = vst [vmem:[%s226 + $0x78] sm:$0xff] %v3892
      %3925 = vst [vmem:[%s226 + $0x80] sm:$0xff] %v3893
      %3926 = vst [vmem:[%s226 + $0x88] sm:$0xff] %v3894
      %3927 = vst [vmem:[%s226 + $0x90] sm:$0xff] %v3895
      %3928 = vst [vmem:[%s226 + $0x98] sm:$0xff] %v3896
      %3929 = vst [vmem:[%s226 + $0xa0] sm:$0xff] %v3897
      %3930 = vst [vmem:[%s226 + $0xa8] sm:$0xff] %v3898
      %3931 = vst [vmem:[%s226 + $0xb0] sm:$0xff] %v3899
      %3932 = vst [vmem:[%s226 + $0xb8] sm:$0xff] %v3900
      %3933 = vst [vmem:[%s226 + $0xc0] sm:$0xff] %v3901
      %3934 = vst [vmem:[%s226 + $0xc8] sm:$0xff] %v3902
      %3935 = vst [vmem:[%s226 + $0xd0] sm:$0xff] %v3903
      %3936 = vst [vmem:[%s226 + $0xd8] sm:$0xff] %v3904
      %3937 = vst [vmem:[%s226 + $0xe0] sm:$0xff] %v3905
      %3938 = vst [vmem:[%s226 + $0xe8] sm:$0xff] %v3906
      %3939 = vst [vmem:[%s226 + $0xf0] sm:$0xff] %v3907
      %3940 = vst [vmem:[%s226 + $0xf8] sm:$0xff] %v3908
      %s3941 = smul.u32 32, %s16
      %p3942 = scmp.lt.s32.totalorder %s3941, 63
      %s3943 = scalar_select %p3942, %s3941, 63
      %s3944 = smul.addr %s3943, 8
      %s3945 = scalar_lea.vmem %s5, %s3944
      // Predicated region
      $region41: #{_lambda_.5} parent=39 // pred_check
        %p3946 = pneg %p144
      $region42: #{_lambda_.5} parent=39 // pred_check_branch
        %3948 = sbr.rel (%p3946) target = $region44
      $region43: #{_lambda_.5} parent=39 // pred_region
        %s3949 = smul.u32 32, %s16
      $region44: #{_lambda_.5} parent=39 // pred_fallthru
        _
    $region40: #{_lambda_.5} parent=5 // pred_fallthru
      _
    %p3950 = scmp.le.s32.totalorder 2, %s11
    // Predicated region
    $region45: #{_lambda_.5} parent=5 // pred_check
      %p3951 = pneg %p3950
    $region46: #{_lambda_.5} parent=5 // pred_check_branch
      %3953 = sbr.rel (%p3951) target = $region48
    $region47: #{_lambda_.5} parent=5 // pred_region
      %s3954 = ssub.s32 %s11, 2
      // Predicated region
      $region49: #{_lambda_.5} parent=47 // pred_check
        %p3955 = pneg %p150
      $region50: #{_lambda_.5} parent=47 // pred_check_branch
        %3957 = sbr.rel (%p3955) target = $region52
      $region51: #{_lambda_.5} parent=47 // pred_region
        %s3958 = smul.u32 32, %s17
        %p3959 = scmp.lt.s32.totalorder %s3958, 63
        %s3960 = scalar_select %p3959, %s3958, 63
        %s3961 = smul.addr %s3960, 8
        %s3962 = scalar_lea.vmem %s5, %s3961
      $region52: #{_lambda_.5} parent=47 // pred_fallthru
        _
    $region48: #{_lambda_.5} parent=5 // pred_fallthru
      _
  $region6: #{_lambda_.5} parent=0 // loop_footer
    %s15 = sadd.s32 1, %s11
  $region7: #{_lambda_.5} parent=0 // loop_footer_branch
    %10 = sbr.rel target = $region3
  $region8: #{_lambda_.5} parent=0 // loop_exit
    _

</llo_original>
